<compile_context>
chip_gen: v6e
topology: v6e:2x2x1
jax: 0.10.0
libtpu: 0.0.40
codegen_flags: <defaults>
</compile_context>

<pallas_src>
import functools

import jax
import jax.numpy as jnp
from jax import lax
from jax.experimental import pallas as pl
from jax.experimental.pallas import tpu as pltpu


# ------------------------------ helpers ------------------------------------ #

def _erf(x):
    # Abramowitz & Stegun 7.1.26 rational approximation, |abs err| <= 1.5e-7.
    a1, a2, a3, a4, a5 = 0.254829592, -0.284496736, 1.421413741, -1.453152027, 1.061405429
    p = 0.3275911
    ax = jnp.abs(x)
    t = 1.0 / (1.0 + p * ax)
    poly = ((((a5 * t + a4) * t + a3) * t + a2) * t + a1) * t
    y = 1.0 - poly * jnp.exp(-ax * ax)
    return jnp.where(x < 0.0, -y, y)


def _gelu_exact(x):
    # nn.GELU() (exact, erf-based).
    return 0.5 * x * (1.0 + _erf(x * 0.7071067811865476))


# ------------------------------ Fused kernel ------------------------------- #

def fused_moe_kernel(code_ref, h_ref, anchor_t_ref, anchor_nrm_ref, gumbel_ref,
                     w1h_ref, w1c_ref, b1_ref, w2_ref, b2_ref, expand_ref,
                     out_ref, aux_ref, *, tau, top_k, num_experts):
    # ---- Router: cosine_similarity(code_emb, code_anchor) * 0.125, gumbel-softmax ---- #
    ce = code_ref[...]                                                 # [B, C] f32
    eps = 1e-8                                                         # F.cosine_similarity eps
    ce_nrm = jnp.sqrt(jnp.sum(ce * ce, axis=-1, keepdims=True))        # [B, 1]
    dots = jnp.dot(ce, anchor_t_ref[...],                              # [B, E] (anchor pre-T)
                   preferred_element_type=jnp.float32)
    # clamp the product of norms (matches F.cosine_similarity)
    logits = dots / jnp.maximum(ce_nrm * anchor_nrm_ref[...], eps) * 0.125
    y = (logits + gumbel_ref[...]) / tau
    y = y - jnp.max(y, axis=-1, keepdims=True)
    ey = jnp.exp(y)
    soft = ey / jnp.sum(ey, axis=-1, keepdims=True)                    # [B, E] soft gumbel-softmax

    # ---- In-kernel top-k hard mask (k unrolled passes, first-occurrence tie-break) --- #
    b, n_exp = soft.shape
    lane_ids = lax.broadcasted_iota(jnp.int32, (b, n_exp), 1)
    selected = jnp.zeros((b, n_exp), dtype=jnp.bool_)
    for _ in range(top_k):
        masked = jnp.where(selected, -jnp.inf, soft)
        m = jnp.max(masked, axis=-1, keepdims=True)
        is_max = masked == m
        first = jnp.min(jnp.where(is_max, lane_ids, n_exp), axis=-1, keepdims=True)
        selected = selected | (lane_ids == first)
    weights = jnp.where(selected, soft, 0.0)                           # masked, not renormalized

    # ---- Expert MLPs, layer 1: split contraction (replaces wrapper-side concat) ------ #
    h1 = (jnp.dot(h_ref[...], w1h_ref[...], preferred_element_type=jnp.float32)
          + jnp.dot(ce, w1c_ref[...], preferred_element_type=jnp.float32)
          + b1_ref[...])                                               # [B, E*4H]
    h1 = _gelu_exact(h1)

    # ---- Layer 2: ONE wide matmul against block-diagonal W2 -------------------------- #
    acc = jnp.dot(h1, w2_ref[...], preferred_element_type=jnp.float32)  # [B, E*S]

    # ---- Gate expansion matmul + one wide FMA + single lane-dense store --------------- #
    gates = jnp.dot(weights, expand_ref[...],                          # [B, E*S]
                    preferred_element_type=jnp.float32)
    out_ref[...] = (gates * (acc + b2_ref[...])).astype(out_ref.dtype)

    # ---- Aux loss (all 2-D reductions, single (1,1) store) ---------------------------- #
    counts = jnp.sum(weights, axis=0, keepdims=True)                   # [1, E]
    total = jnp.sum(counts, axis=1, keepdims=True)                     # [1, 1]
    load = counts / total                                              # [1, E]
    # TODO(synk): torch.Tensor has no .entropy(); using Shannon entropy of expert_load.
    entropy = -jnp.sum(load * jnp.log(load + 1e-12), axis=1, keepdims=True)
    mean = total / num_experts
    var = jnp.sum((counts - mean) ** 2, axis=1, keepdims=True) / (num_experts - 1)
    aux_ref[...] = 0.5 * (jnp.sqrt(var) + entropy)                     # unbiased std == torch.std


# ------------------------- One-time parameter prep -------------------------- #

def prepare_moe_params(code_anchor, w1, b1, w2, b2, hidden_dim):
    """Done ONCE at init time -- nothing here runs in the per-call forward path."""
    E, D, H4 = w1.shape
    S = w2.shape[2]
    anchor_t = code_anchor.T                                                  # [C, E]
    anchor_nrm = jnp.sqrt(jnp.sum(code_anchor * code_anchor, axis=1))[None, :]  # [1, E]
    w1_wide = jnp.transpose(w1, (1, 0, 2)).reshape(D, E * H4)                 # [D, E*4H]
    w1_h = w1_wide[:hidden_dim]                                               # [HID, E*4H]
    w1_c = w1_wide[hidden_dim:]                                               # [C,   E*4H]
    b1_wide = b1.reshape(1, E * H4)
    w2_bd = jnp.zeros((E * H4, E * S), w2.dtype)                              # block-diagonal W2
    for e in range(E):
        w2_bd = w2_bd.at[e * H4:(e + 1) * H4, e * S:(e + 1) * S].set(w2[e])
    b2_wide = b2.reshape(1, E * S)
    expand = jnp.kron(jnp.eye(E, dtype=jnp.float32), jnp.ones((1, S), jnp.float32))  # [E, E*S]
    return (anchor_t, anchor_nrm, w1_h, w1_c, b1_wide, w2_bd, b2_wide, expand)


# -------------------------------- Wrapper ----------------------------------- #

@functools.partial(jax.jit, static_argnames=("tau", "top_k"))
def sparse_codebook_moe_forward(h, code_emb, gumbel, anchor_t, anchor_nrm,
                                w1_h, w1_c, b1_wide, w2_bd, b2_wide, expand,
                                *, tau, top_k):
    B, HID = h.shape
    C, E = anchor_t.shape
    EH4 = w1_h.shape[1]
    ES = w2_bd.shape[1]

    kern = functools.partial(fused_moe_kernel, tau=float(tau), top_k=int(top_k),
                             num_experts=E)
    full_output, aux = pl.pallas_call(
        kern,
        out_shape=(jax.ShapeDtypeStruct((B, ES), jnp.float32),
                   jax.ShapeDtypeStruct((1, 1), jnp.float32)),
        grid=(1,),
        in_specs=[
            pl.BlockSpec((B, C), lambda i: (0, 0)),            # code_emb
            pl.BlockSpec((B, HID), lambda i: (0, 0)),          # h
            pl.BlockSpec((C, E), lambda i: (0, 0)),            # code_anchor^T
            pl.BlockSpec((1, E), lambda i: (0, 0)),            # anchor norms
            pl.BlockSpec((B, E), lambda i: (0, 0)),            # gumbel noise
            pl.BlockSpec((HID, EH4), lambda i: (0, 0)),        # W1 rows for h
            pl.BlockSpec((C, EH4), lambda i: (0, 0)),          # W1 rows for code_emb
            pl.BlockSpec((1, EH4), lambda i: (0, 0)),          # b1 (flat)
            pl.BlockSpec((EH4, ES), lambda i: (0, 0)),         # W2 (block-diagonal)
            pl.BlockSpec((1, ES), lambda i: (0, 0)),           # b2 (flat)
            pl.BlockSpec((E, ES), lambda i: (0, 0)),           # gate-expansion 0/1 matrix
        ],
        out_specs=(
            pl.BlockSpec((B, ES), lambda i: (0, 0)),           # full_output (lane-dense)
            pl.BlockSpec((1, 1), lambda i: (0, 0)),            # aux loss
        ),
        compiler_params=pltpu.CompilerParams(
            dimension_semantics=("arbitrary",),
            vmem_limit_bytes=32 * 1024 * 1024),
    )(code_emb, h, anchor_t, anchor_nrm, gumbel,
      w1_h, w1_c, b1_wide, w2_bd, b2_wide, expand)

    # TODO(synk): reference asserts full_output.shape[-1] == 1024 // num_experts, which is
    # false for the 1024-wide output it builds; assertion skipped.
    return full_output, aux[0, 0]


# ---------------------------------- Main ------------------------------------ #

if __name__ == "__main__":
    B = 8
    HIDDEN = 32
    CODE = 32
    NUM_EXPERTS = 8
    TOP_K = 2
    H4 = 4 * HIDDEN              # 128
    SLOT = 1024 // NUM_EXPERTS   # 128
    D = HIDDEN + CODE            # 64

    key = jax.random.PRNGKey(0)
    k_code, k_h, k_ce, k_w1, k_b1, k_b2, k_g = jax.random.split(key, 7)

    # code_anchor buffer = quantizer codebook[:num_experts] (synthesized deterministically)
    code_anchor = jax.random.normal(k_code, (NUM_EXPERTS, CODE), jnp.float32)

    # Expert params (shapes from __init__), stored transposed as [E, in, out]:
    #   expert[0].weight ~ N(anchor[e, 0], 0.01); expert[0].bias ~ U(-1/sqrt(D), 1/sqrt(D))
    #   expert[-1].weight = 0;                    expert[-1].bias ~ U(-1/sqrt(4H), 1/sqrt(4H))
    w1 = code_anchor[:, 0][:, None, None] + 0.01 * jax.random.normal(
        k_w1, (NUM_EXPERTS, D, H4), jnp.float32)
    b1 = jax.random.uniform(k_b1, (NUM_EXPERTS, 1, H4), jnp.float32,
                            -(D ** -0.5), D ** -0.5)
    w2 = jnp.zeros((NUM_EXPERTS, H4, SLOT), jnp.float32)
    b2 = jax.random.uniform(k_b2, (NUM_EXPERTS, 1, SLOT), jnp.float32,
                            -(H4 ** -0.5), H4 ** -0.5)

    # One-time parameter preprocessing (hoisted out of the forward path).
    params = prepare_moe_params(code_anchor, w1, b1, w2, b2, HIDDEN)
    params = jax.block_until_ready(params)

    # Inputs
    h = jax.random.normal(k_h, (B, HIDDEN), jnp.float32)
    code_emb = jax.random.normal(k_ce, (B, CODE), jnp.float32)

    # TODO(synk): `epoch` is undefined in the reference forward; fixed to 0 here (tau = 0.5).
    epoch = 0
    tau = max(0.1, 0.5 * 0.95 ** epoch)
    gumbel = jax.random.gumbel(k_g, (B, NUM_EXPERTS), jnp.float32)

    full_output, aux_loss = sparse_codebook_moe_forward(
        h, code_emb, gumbel, *params, tau=tau, top_k=TOP_K)
    jax.block_until_ready((full_output, aux_loss))

    assert full_output.shape == (B, 1024)
    assert aux_loss.shape == ()
    print("KERNEL_OK")
</pallas_src>

<mosaic_0001>
module attributes {stable_mosaic.version = 11 : i64} {
  func.func @fused_moe_kernel(%arg0: i32, %arg1: memref<8x32xf32, #tpu.memory_space<vmem>>, %arg2: memref<8x32xf32, #tpu.memory_space<vmem>>, %arg3: memref<32x8xf32, #tpu.memory_space<vmem>>, %arg4: memref<1x8xf32, #tpu.memory_space<vmem>>, %arg5: memref<8x8xf32, #tpu.memory_space<vmem>>, %arg6: memref<32x1024xf32, #tpu.memory_space<vmem>>, %arg7: memref<32x1024xf32, #tpu.memory_space<vmem>>, %arg8: memref<1x1024xf32, #tpu.memory_space<vmem>>, %arg9: memref<1024x1024xf32, #tpu.memory_space<vmem>>, %arg10: memref<1x1024xf32, #tpu.memory_space<vmem>>, %arg11: memref<8x1024xf32, #tpu.memory_space<vmem>>, %arg12: memref<8x1024xf32, #tpu.memory_space<vmem>>, %arg13: memref<1x1xf32, #tpu.memory_space<vmem>>) attributes {dimension_semantics = [#tpu.dimension_semantics<arbitrary>], iteration_bounds = array<i64: 1>, scalar_prefetch = 0 : i64, scratch_operands = 0 : i64, tpu.core_type = #tpu.core_type<tc>, window_params = [{pipeline_mode = #tpu.pipeline_mode<synchronous>, transform_indices = @transform_0, window_bounds = array<i64: 8, 32>}, {pipeline_mode = #tpu.pipeline_mode<synchronous>, transform_indices = @transform_1, window_bounds = array<i64: 8, 32>}, {pipeline_mode = #tpu.pipeline_mode<synchronous>, transform_indices = @transform_2, window_bounds = array<i64: 32, 8>}, {pipeline_mode = #tpu.pipeline_mode<synchronous>, transform_indices = @transform_3, window_bounds = array<i64: 1, 8>}, {pipeline_mode = #tpu.pipeline_mode<synchronous>, transform_indices = @transform_4, window_bounds = array<i64: 8, 8>}, {pipeline_mode = #tpu.pipeline_mode<synchronous>, transform_indices = @transform_5, window_bounds = array<i64: 32, 1024>}, {pipeline_mode = #tpu.pipeline_mode<synchronous>, transform_indices = @transform_6, window_bounds = array<i64: 32, 1024>}, {pipeline_mode = #tpu.pipeline_mode<synchronous>, transform_indices = @transform_7, window_bounds = array<i64: 1, 1024>}, {pipeline_mode = #tpu.pipeline_mode<synchronous>, transform_indices = @transform_8, window_bounds = array<i64: 1024, 1024>}, {pipeline_mode = #tpu.pipeline_mode<synchronous>, transform_indices = @transform_9, window_bounds = array<i64: 1, 1024>}, {pipeline_mode = #tpu.pipeline_mode<synchronous>, transform_indices = @transform_10, window_bounds = array<i64: 8, 1024>}, {pipeline_mode = #tpu.pipeline_mode<synchronous>, transform_indices = @transform_11, window_bounds = array<i64: 8, 1024>}, {pipeline_mode = #tpu.pipeline_mode<synchronous>, transform_indices = @transform_12, window_bounds = array<i64: 1, 1>}]} {
    %c0 = arith.constant 0 : index
    %c0_0 = arith.constant 0 : index
    %0 = vector.load %arg1[%c0, %c0_0] : memref<8x32xf32, #tpu.memory_space<vmem>>, vector<8x32xf32>
    %1 = arith.mulf %0, %0 : vector<8x32xf32>
    %cst = arith.constant dense<0.000000e+00> : vector<8xf32>
    %2 = vector.multi_reduction <add>, %1, %cst [1] : vector<8x32xf32> to vector<8xf32>
    %3 = vector.shape_cast %2 : vector<8xf32> to vector<8x1xf32>
    %4 = math.sqrt %3 : vector<8x1xf32>
    %c0_1 = arith.constant 0 : index
    %c0_2 = arith.constant 0 : index
    %5 = vector.load %arg3[%c0_1, %c0_2] : memref<32x8xf32, #tpu.memory_space<vmem>>, vector<32x8xf32>
    %cst_3 = arith.constant dense<0.000000e+00> : vector<8x8xf32>
    %6 = tpu.matmul %0, %5, %cst_3 {dimension_numbers = #tpu.dot_dimension_numbers<[1], [0], [0], [1], [0, 0, 1, 1], [], []>} : vector<8x32xf32>, vector<32x8xf32>, vector<8x8xf32> -> vector<8x8xf32>
    %c0_4 = arith.constant 0 : index
    %c0_5 = arith.constant 0 : index
    %7 = vector.load %arg4[%c0_4, %c0_5] : memref<1x8xf32, #tpu.memory_space<vmem>>, vector<1x8xf32>
    %8 = vector.broadcast %4 : vector<8x1xf32> to vector<8x8xf32>
    %9 = vector.broadcast %7 : vector<1x8xf32> to vector<8x8xf32>
    %10 = arith.mulf %8, %9 : vector<8x8xf32>
    %cst_6 = arith.constant 9.99999993E-9 : f32
    %11 = vector.broadcast %cst_6 : f32 to vector<8x8xf32>
    %12 = arith.maximumf %10, %11 : vector<8x8xf32>
    %13 = arith.divf %6, %12 : vector<8x8xf32>
    %cst_7 = arith.constant 1.250000e-01 : f32
    %14 = vector.broadcast %cst_7 : f32 to vector<8x8xf32>
    %15 = arith.mulf %13, %14 : vector<8x8xf32>
    %c0_8 = arith.constant 0 : index
    %c0_9 = arith.constant 0 : index
    %16 = vector.load %arg5[%c0_8, %c0_9] : memref<8x8xf32, #tpu.memory_space<vmem>>, vector<8x8xf32>
    %17 = arith.addf %15, %16 : vector<8x8xf32>
    %cst_10 = arith.constant 5.000000e-01 : f32
    %18 = vector.broadcast %cst_10 : f32 to vector<8x8xf32>
    %19 = arith.divf %17, %18 : vector<8x8xf32>
    %cst_11 = arith.constant dense<0xFF800000> : vector<8xf32>
    %20 = vector.multi_reduction <maximumf>, %19, %cst_11 [1] : vector<8x8xf32> to vector<8xf32>
    %21 = vector.shape_cast %20 : vector<8xf32> to vector<8x1xf32>
    %22 = vector.broadcast %21 : vector<8x1xf32> to vector<8x8xf32>
    %23 = arith.subf %19, %22 : vector<8x8xf32>
    %24 = math.exp %23 : vector<8x8xf32>
    %cst_12 = arith.constant dense<0.000000e+00> : vector<8xf32>
    %25 = vector.multi_reduction <add>, %24, %cst_12 [1] : vector<8x8xf32> to vector<8xf32>
    %26 = vector.shape_cast %25 : vector<8xf32> to vector<8x1xf32>
    %27 = vector.broadcast %26 : vector<8x1xf32> to vector<8x8xf32>
    %28 = arith.divf %24, %27 : vector<8x8xf32>
    %29 = tpu.iota {dimensions = array<i32: 1>} : vector<8x8xi32>
    %false = arith.constant false
    %30 = vector.broadcast %false : i1 to vector<8x8xi1>
    %cst_13 = arith.constant 0xFF800000 : f32
    %31 = vector.broadcast %cst_13 : f32 to vector<8x8xf32>
    %32 = arith.select %30, %31, %28 : vector<8x8xi1>, vector<8x8xf32>
    %cst_14 = arith.constant dense<0xFF800000> : vector<8xf32>
    %33 = vector.multi_reduction <maximumf>, %32, %cst_14 [1] : vector<8x8xf32> to vector<8xf32>
    %34 = vector.shape_cast %33 : vector<8xf32> to vector<8x1xf32>
    %35 = vector.broadcast %34 : vector<8x1xf32> to vector<8x8xf32>
    %36 = arith.cmpf oeq, %32, %35 : vector<8x8xf32>
    %c8_i32 = arith.constant 8 : i32
    %37 = vector.broadcast %c8_i32 : i32 to vector<8x8xi32>
    %38 = arith.select %36, %29, %37 : vector<8x8xi1>, vector<8x8xi32>
    %cst_15 = arith.constant dense<2147483647> : vector<8xi32>
    %39 = vector.multi_reduction <minsi>, %38, %cst_15 [1] : vector<8x8xi32> to vector<8xi32>
    %40 = vector.shape_cast %39 : vector<8xi32> to vector<8x1xi32>
    %41 = vector.broadcast %40 : vector<8x1xi32> to vector<8x8xi32>
    %42 = arith.cmpi eq, %29, %41 : vector<8x8xi32>
    %43 = arith.ori %30, %42 : vector<8x8xi1>
    %cst_16 = arith.constant 0xFF800000 : f32
    %44 = vector.broadcast %cst_16 : f32 to vector<8x8xf32>
    %45 = arith.select %43, %44, %28 : vector<8x8xi1>, vector<8x8xf32>
    %cst_17 = arith.constant dense<0xFF800000> : vector<8xf32>
    %46 = vector.multi_reduction <maximumf>, %45, %cst_17 [1] : vector<8x8xf32> to vector<8xf32>
    %47 = vector.shape_cast %46 : vector<8xf32> to vector<8x1xf32>
    %48 = vector.broadcast %47 : vector<8x1xf32> to vector<8x8xf32>
    %49 = arith.cmpf oeq, %45, %48 : vector<8x8xf32>
    %c8_i32_18 = arith.constant 8 : i32
    %50 = vector.broadcast %c8_i32_18 : i32 to vector<8x8xi32>
    %51 = arith.select %49, %29, %50 : vector<8x8xi1>, vector<8x8xi32>
    %cst_19 = arith.constant dense<2147483647> : vector<8xi32>
    %52 = vector.multi_reduction <minsi>, %51, %cst_19 [1] : vector<8x8xi32> to vector<8xi32>
    %53 = vector.shape_cast %52 : vector<8xi32> to vector<8x1xi32>
    %54 = vector.broadcast %53 : vector<8x1xi32> to vector<8x8xi32>
    %55 = arith.cmpi eq, %29, %54 : vector<8x8xi32>
    %56 = arith.ori %43, %55 : vector<8x8xi1>
    %cst_20 = arith.constant 0.000000e+00 : f32
    %57 = vector.broadcast %cst_20 : f32 to vector<8x8xf32>
    %58 = arith.select %56, %28, %57 : vector<8x8xi1>, vector<8x8xf32>
    %c0_21 = arith.constant 0 : index
    %c0_22 = arith.constant 0 : index
    %59 = vector.load %arg2[%c0_21, %c0_22] : memref<8x32xf32, #tpu.memory_space<vmem>>, vector<8x32xf32>
    %c0_23 = arith.constant 0 : index
    %c0_24 = arith.constant 0 : index
    %60 = vector.load %arg6[%c0_23, %c0_24] : memref<32x1024xf32, #tpu.memory_space<vmem>>, vector<32x1024xf32>
    %cst_25 = arith.constant dense<0.000000e+00> : vector<8x1024xf32>
    %61 = tpu.matmul %59, %60, %cst_25 {dimension_numbers = #tpu.dot_dimension_numbers<[1], [0], [0], [1], [0, 0, 1, 1], [], []>} : vector<8x32xf32>, vector<32x1024xf32>, vector<8x1024xf32> -> vector<8x1024xf32>
    %c0_26 = arith.constant 0 : index
    %c0_27 = arith.constant 0 : index
    %62 = vector.load %arg7[%c0_26, %c0_27] : memref<32x1024xf32, #tpu.memory_space<vmem>>, vector<32x1024xf32>
    %cst_28 = arith.constant dense<0.000000e+00> : vector<8x1024xf32>
    %63 = tpu.matmul %0, %62, %cst_28 {dimension_numbers = #tpu.dot_dimension_numbers<[1], [0], [0], [1], [0, 0, 1, 1], [], []>} : vector<8x32xf32>, vector<32x1024xf32>, vector<8x1024xf32> -> vector<8x1024xf32>
    %64 = arith.addf %61, %63 : vector<8x1024xf32>
    %c0_29 = arith.constant 0 : index
    %c0_30 = arith.constant 0 : index
    %65 = vector.load %arg8[%c0_29, %c0_30] : memref<1x1024xf32, #tpu.memory_space<vmem>>, vector<1x1024xf32>
    %66 = vector.broadcast %65 : vector<1x1024xf32> to vector<8x1024xf32>
    %67 = arith.addf %64, %66 : vector<8x1024xf32>
    %cst_31 = arith.constant 5.000000e-01 : f32
    %68 = vector.broadcast %cst_31 : f32 to vector<8x1024xf32>
    %69 = arith.mulf %68, %67 : vector<8x1024xf32>
    %cst_32 = arith.constant 0.707106769 : f32
    %70 = vector.broadcast %cst_32 : f32 to vector<8x1024xf32>
    %71 = arith.mulf %67, %70 : vector<8x1024xf32>
    %72 = math.absf %71 : vector<8x1024xf32>
    %cst_33 = arith.constant 0.327591091 : f32
    %73 = vector.broadcast %cst_33 : f32 to vector<8x1024xf32>
    %74 = arith.mulf %73, %72 : vector<8x1024xf32>
    %cst_34 = arith.constant 1.000000e+00 : f32
    %75 = vector.broadcast %cst_34 : f32 to vector<8x1024xf32>
    %76 = arith.addf %75, %74 : vector<8x1024xf32>
    %cst_35 = arith.constant 1.000000e+00 : f32
    %77 = vector.broadcast %cst_35 : f32 to vector<8x1024xf32>
    %78 = arith.divf %77, %76 : vector<8x1024xf32>
    %cst_36 = arith.constant 1.06140542 : f32
    %79 = vector.broadcast %cst_36 : f32 to vector<8x1024xf32>
    %80 = arith.mulf %79, %78 : vector<8x1024xf32>
    %cst_37 = arith.constant -1.45315206 : f32
    %81 = vector.broadcast %cst_37 : f32 to vector<8x1024xf32>
    %82 = arith.addf %80, %81 : vector<8x1024xf32>
    %83 = arith.mulf %82, %78 : vector<8x1024xf32>
    %cst_38 = arith.constant 1.42141378 : f32
    %84 = vector.broadcast %cst_38 : f32 to vector<8x1024xf32>
    %85 = arith.addf %83, %84 : vector<8x1024xf32>
    %86 = arith.mulf %85, %78 : vector<8x1024xf32>
    %cst_39 = arith.constant -0.284496725 : f32
    %87 = vector.broadcast %cst_39 : f32 to vector<8x1024xf32>
    %88 = arith.addf %86, %87 : vector<8x1024xf32>
    %89 = arith.mulf %88, %78 : vector<8x1024xf32>
    %cst_40 = arith.constant 0.254829586 : f32
    %90 = vector.broadcast %cst_40 : f32 to vector<8x1024xf32>
    %91 = arith.addf %89, %90 : vector<8x1024xf32>
    %92 = arith.mulf %91, %78 : vector<8x1024xf32>
    %cst_41 = arith.constant 0.000000e+00 : f32
    %93 = vector.broadcast %cst_41 : f32 to vector<8x1024xf32>
    %94 = arith.subf %93, %72 : vector<8x1024xf32>
    %95 = arith.mulf %94, %72 : vector<8x1024xf32>
    %96 = math.exp %95 : vector<8x1024xf32>
    %97 = arith.mulf %92, %96 : vector<8x1024xf32>
    %cst_42 = arith.constant 1.000000e+00 : f32
    %98 = vector.broadcast %cst_42 : f32 to vector<8x1024xf32>
    %99 = arith.subf %98, %97 : vector<8x1024xf32>
    %cst_43 = arith.constant 0.000000e+00 : f32
    %100 = vector.broadcast %cst_43 : f32 to vector<8x1024xf32>
    %101 = arith.cmpf olt, %71, %100 : vector<8x1024xf32>
    %cst_44 = arith.constant 0.000000e+00 : f32
    %102 = vector.broadcast %cst_44 : f32 to vector<8x1024xf32>
    %103 = arith.subf %102, %99 : vector<8x1024xf32>
    %104 = arith.select %101, %103, %99 : vector<8x1024xi1>, vector<8x1024xf32>
    %cst_45 = arith.constant 1.000000e+00 : f32
    %105 = vector.broadcast %cst_45 : f32 to vector<8x1024xf32>
    %106 = arith.addf %105, %104 : vector<8x1024xf32>
    %107 = arith.mulf %69, %106 : vector<8x1024xf32>
    %c0_46 = arith.constant 0 : index
    %c0_47 = arith.constant 0 : index
    %108 = vector.load %arg9[%c0_46, %c0_47] : memref<1024x1024xf32, #tpu.memory_space<vmem>>, vector<1024x1024xf32>
    %cst_48 = arith.constant dense<0.000000e+00> : vector<8x1024xf32>
    %109 = tpu.matmul %107, %108, %cst_48 {dimension_numbers = #tpu.dot_dimension_numbers<[1], [0], [0], [1], [0, 0, 1, 1], [], []>} : vector<8x1024xf32>, vector<1024x1024xf32>, vector<8x1024xf32> -> vector<8x1024xf32>
    %c0_49 = arith.constant 0 : index
    %c0_50 = arith.constant 0 : index
    %110 = vector.load %arg11[%c0_49, %c0_50] : memref<8x1024xf32, #tpu.memory_space<vmem>>, vector<8x1024xf32>
    %cst_51 = arith.constant dense<0.000000e+00> : vector<8x1024xf32>
    %111 = tpu.matmul %58, %110, %cst_51 {dimension_numbers = #tpu.dot_dimension_numbers<[1], [0], [0], [1], [0, 0, 1, 1], [], []>} : vector<8x8xf32>, vector<8x1024xf32>, vector<8x1024xf32> -> vector<8x1024xf32>
    %c0_52 = arith.constant 0 : index
    %c0_53 = arith.constant 0 : index
    %112 = vector.load %arg10[%c0_52, %c0_53] : memref<1x1024xf32, #tpu.memory_space<vmem>>, vector<1x1024xf32>
    %113 = vector.broadcast %112 : vector<1x1024xf32> to vector<8x1024xf32>
    %114 = arith.addf %109, %113 : vector<8x1024xf32>
    %115 = arith.mulf %111, %114 : vector<8x1024xf32>
    %c0_54 = arith.constant 0 : index
    %c0_55 = arith.constant 0 : index
    %116 = vector.load %arg12[%c0_54, %c0_55] : memref<8x1024xf32, #tpu.memory_space<vmem>>, vector<8x1024xf32>
    tpu.vector_store %arg12[%c0_54, %c0_55], %115 {strides = array<i32>} : memref<8x1024xf32, #tpu.memory_space<vmem>>, vector<8x1024xf32>,
    %cst_56 = arith.constant dense<0.000000e+00> : vector<8xf32>
    %117 = vector.multi_reduction <add>, %58, %cst_56 [0] : vector<8x8xf32> to vector<8xf32>
    %118 = vector.shape_cast %117 : vector<8xf32> to vector<1x8xf32>
    %cst_57 = arith.constant dense<0.000000e+00> : vector<1xf32>
    %119 = vector.multi_reduction <add>, %118, %cst_57 [1] : vector<1x8xf32> to vector<1xf32>
    %120 = vector.shape_cast %119 : vector<1xf32> to vector<1x1xf32>
    %121 = vector.broadcast %120 : vector<1x1xf32> to vector<1x8xf32>
    %122 = arith.divf %118, %121 : vector<1x8xf32>
    %cst_58 = arith.constant 9.99999996E-13 : f32
    %123 = vector.broadcast %cst_58 : f32 to vector<1x8xf32>
    %124 = arith.addf %122, %123 : vector<1x8xf32>
    %125 = math.log %124 : vector<1x8xf32>
    %126 = arith.mulf %122, %125 : vector<1x8xf32>
    %cst_59 = arith.constant dense<0.000000e+00> : vector<1xf32>
    %127 = vector.multi_reduction <add>, %126, %cst_59 [1] : vector<1x8xf32> to vector<1xf32>
    %128 = vector.shape_cast %127 : vector<1xf32> to vector<1x1xf32>
    %cst_60 = arith.constant 0.000000e+00 : f32
    %129 = vector.broadcast %cst_60 : f32 to vector<1x1xf32>
    %130 = arith.subf %129, %128 : vector<1x1xf32>
    %cst_61 = arith.constant 8.000000e+00 : f32
    %131 = vector.broadcast %cst_61 : f32 to vector<1x1xf32>
    %132 = arith.divf %120, %131 : vector<1x1xf32>
    %133 = vector.broadcast %132 : vector<1x1xf32> to vector<1x8xf32>
    %134 = arith.subf %118, %133 : vector<1x8xf32>
    %135 = arith.mulf %134, %134 : vector<1x8xf32>
    %cst_62 = arith.constant dense<0.000000e+00> : vector<1xf32>
    %136 = vector.multi_reduction <add>, %135, %cst_62 [1] : vector<1x8xf32> to vector<1xf32>
    %137 = vector.shape_cast %136 : vector<1xf32> to vector<1x1xf32>
    %cst_63 = arith.constant 7.000000e+00 : f32
    %138 = vector.broadcast %cst_63 : f32 to vector<1x1xf32>
    %139 = arith.divf %137, %138 : vector<1x1xf32>
    %140 = math.sqrt %139 : vector<1x1xf32>
    %141 = arith.addf %140, %130 : vector<1x1xf32>
    %cst_64 = arith.constant 5.000000e-01 : f32
    %142 = vector.broadcast %cst_64 : f32 to vector<1x1xf32>
    %143 = arith.mulf %142, %141 : vector<1x1xf32>
    %c0_65 = arith.constant 0 : index
    %c0_66 = arith.constant 0 : index
    %144 = vector.load %arg13[%c0_65, %c0_66] : memref<1x1xf32, #tpu.memory_space<vmem>>, vector<1x1xf32>
    tpu.vector_store %arg13[%c0_65, %c0_66], %143 {strides = array<i32>} : memref<1x1xf32, #tpu.memory_space<vmem>>, vector<1x1xf32>,
    return
  }
  func.func @transform_0(%arg0: i32) -> (i32, i32) {
    %c0_i32 = arith.constant 0 : i32
    %c0_i32_0 = arith.constant 0 : i32
    %c0_i32_1 = arith.constant 0 : i32
    return %c0_i32, %c0_i32_0 : i32, i32
  }
  func.func @transform_1(%arg0: i32) -> (i32, i32) {
    %c0_i32 = arith.constant 0 : i32
    %c0_i32_0 = arith.constant 0 : i32
    %c0_i32_1 = arith.constant 0 : i32
    return %c0_i32, %c0_i32_0 : i32, i32
  }
  func.func @transform_2(%arg0: i32) -> (i32, i32) {
    %c0_i32 = arith.constant 0 : i32
    %c0_i32_0 = arith.constant 0 : i32
    %c0_i32_1 = arith.constant 0 : i32
    return %c0_i32, %c0_i32_0 : i32, i32
  }
  func.func @transform_3(%arg0: i32) -> (i32, i32) {
    %c0_i32 = arith.constant 0 : i32
    %c0_i32_0 = arith.constant 0 : i32
    %c0_i32_1 = arith.constant 0 : i32
    return %c0_i32, %c0_i32_0 : i32, i32
  }
  func.func @transform_4(%arg0: i32) -> (i32, i32) {
    %c0_i32 = arith.constant 0 : i32
    %c0_i32_0 = arith.constant 0 : i32
    %c0_i32_1 = arith.constant 0 : i32
    return %c0_i32, %c0_i32_0 : i32, i32
  }
  func.func @transform_5(%arg0: i32) -> (i32, i32) {
    %c0_i32 = arith.constant 0 : i32
    %c0_i32_0 = arith.constant 0 : i32
    %c0_i32_1 = arith.constant 0 : i32
    return %c0_i32, %c0_i32_0 : i32, i32
  }
  func.func @transform_6(%arg0: i32) -> (i32, i32) {
    %c0_i32 = arith.constant 0 : i32
    %c0_i32_0 = arith.constant 0 : i32
    %c0_i32_1 = arith.constant 0 : i32
    return %c0_i32, %c0_i32_0 : i32, i32
  }
  func.func @transform_7(%arg0: i32) -> (i32, i32) {
    %c0_i32 = arith.constant 0 : i32
    %c0_i32_0 = arith.constant 0 : i32
    %c0_i32_1 = arith.constant 0 : i32
    return %c0_i32, %c0_i32_0 : i32, i32
  }
  func.func @transform_8(%arg0: i32) -> (i32, i32) {
    %c0_i32 = arith.constant 0 : i32
    %c0_i32_0 = arith.constant 0 : i32
    %c0_i32_1 = arith.constant 0 : i32
    return %c0_i32, %c0_i32_0 : i32, i32
  }
  func.func @transform_9(%arg0: i32) -> (i32, i32) {
    %c0_i32 = arith.constant 0 : i32
    %c0_i32_0 = arith.constant 0 : i32
    %c0_i32_1 = arith.constant 0 : i32
    return %c0_i32, %c0_i32_0 : i32, i32
  }
  func.func @transform_10(%arg0: i32) -> (i32, i32) {
    %c0_i32 = arith.constant 0 : i32
    %c0_i32_0 = arith.constant 0 : i32
    %c0_i32_1 = arith.constant 0 : i32
    return %c0_i32, %c0_i32_0 : i32, i32
  }
  func.func @transform_11(%arg0: i32) -> (i32, i32) {
    %c0_i32 = arith.constant 0 : i32
    %c0_i32_0 = arith.constant 0 : i32
    %c0_i32_1 = arith.constant 0 : i32
    return %c0_i32, %c0_i32_0 : i32, i32
  }
  func.func @transform_12(%arg0: i32) -> (i32, i32) {
    %c0_i32 = arith.constant 0 : i32
    %c0_i32_0 = arith.constant 0 : i32
    %c0_i32_1 = arith.constant 0 : i32
    return %c0_i32, %c0_i32_0 : i32, i32
  }
}

</mosaic_0001>

<llo_original>
// kernel: sparse_codebook_moe_forward.1
$region0: #{sparse_codebook_moe_forward.1}
  #allocation0 [shape = 'u32[]', space=smem, size = 0x4, offset = 0x4, fixed_abs, tag = 'smem constant byte address 0x4 - core index']
  #allocation1 [shape = 'u32[144,128]{1,0:T(1,128)}', space=vmem, size = 0x12000, scoped, tag = 'internal scratch']
  %s0 = inlined_call_operand.hbm [shape: f32[8,32], index: 0, kind: input, shape index: {}]
  %s1 = inlined_call_operand.hbm [shape: f32[8,32], index: 1, kind: input, shape index: {}]
  %s2 = inlined_call_operand.vmem [shape: f32[32,8], index: 2, kind: input, shape index: {}]
  %s3 = inlined_call_operand.hbm [shape: f32[1,8], index: 3, kind: input, shape index: {}]
  %s4 = inlined_call_operand.hbm [shape: f32[8,8], index: 4, kind: input, shape index: {}]
  %s5 = inlined_call_operand.hbm [shape: f32[32,1024], index: 5, kind: input, shape index: {}]
  %s6 = inlined_call_operand.hbm [shape: f32[32,1024], index: 6, kind: input, shape index: {}]
  %s7 = inlined_call_operand.hbm [shape: f32[1,1024], index: 7, kind: input, shape index: {}]
  %s8 = inlined_call_operand.hbm [shape: f32[1024,1024], index: 8, kind: input, shape index: {}]
  %s9 = inlined_call_operand.hbm [shape: f32[1,1024], index: 9, kind: input, shape index: {}]
  %s10 = inlined_call_operand.hbm [shape: f32[8,1024], index: 10, kind: input, shape index: {}]
  %s11 = inlined_call_operand.hbm [shape: f32[8,1024], index: 11, kind: output, shape index: {0}]
  %s12 = inlined_call_operand.hbm [shape: f32[1,1], index: 12, kind: output, shape index: {1}]
  %13 = xla_tuple %s11, %s12
  %s14 = sld [smem:[#allocation0]]
  $region102: #{sparse_codebook_moe_forward.1} parent=0
    _
  %s16 = ssub.s32 1, %s14
  %s17 = scalar_select 0, %s16, %s14
  $region1: #{sparse_codebook_moe_forward.1} parent=0
    #allocation2 [shape = 'u8[4096]{0}', space=vmem, size = 0x1000, scoped, tag = 'input window, operand 0, single buffered']
    #allocation3 [shape = 's32[1]{0}', space=sflag, size = 0x4, scoped, tag = 'scoped memory for sparse_codebook_moe_forward.1']
    #allocation4 [shape = 's32[1]{0}', space=sflag, size = 0x4, scoped, tag = 'scoped memory for sparse_codebook_moe_forward.1']
    #allocation5 [shape = 'u8[4096]{0}', space=vmem, size = 0x1000, scoped, tag = 'input window, operand 1, single buffered']
    #allocation6 [shape = 's32[1]{0}', space=sflag, size = 0x4, scoped, tag = 'scoped memory for sparse_codebook_moe_forward.1']
    #allocation7 [shape = 'u8[512]{0}', space=vmem, size = 0x400, scoped, tag = 'input window, operand 3, single buffered']
    #allocation8 [shape = 'u8[4096]{0}', space=vmem, size = 0x1000, scoped, tag = 'input window, operand 4, single buffered']
    #allocation9 [shape = 's32[1]{0}', space=sflag, size = 0x4, scoped, tag = 'scoped memory for sparse_codebook_moe_forward.1']
    #allocation10 [shape = 'u8[131072]{0}', space=vmem, size = 0x20000, scoped, tag = 'input window, operand 5, single buffered']
    #allocation11 [shape = 'u8[131072]{0}', space=vmem, size = 0x20000, scoped, tag = 'input window, operand 6, single buffered']
    #allocation12 [shape = 's32[1]{0}', space=sflag, size = 0x4, scoped, tag = 'scoped memory for sparse_codebook_moe_forward.1']
    #allocation13 [shape = 'u8[4096]{0}', space=vmem, size = 0x1000, scoped, tag = 'input window, operand 7, single buffered']
    #allocation14 [shape = 'u8[4194304]{0}', space=vmem, size = 0x400000, scoped, tag = 'input window, operand 8, single buffered']
    #allocation15 [shape = 's32[1]{0}', space=sflag, size = 0x4, scoped, tag = 'scoped memory for sparse_codebook_moe_forward.1']
    #allocation16 [shape = 'u8[4096]{0}', space=vmem, size = 0x1000, scoped, tag = 'input window, operand 9, single buffered']
    #allocation17 [shape = 'u8[32768]{0}', space=vmem, size = 0x8000, scoped, tag = 'input window, operand 10, single buffered']
    #allocation18 [shape = 's32[1]{0}', space=sflag, size = 0x4, scoped, tag = 'scoped memory for sparse_codebook_moe_forward.1']
    #allocation19 [shape = 'u8[32768]{0}', space=vmem, size = 0x8000, scoped, tag = 'output window, operand 0, single buffered']
    #allocation20 [shape = 'u8[512]{0}', space=vmem, size = 0x400, scoped, tag = 'output window, operand 1, single buffered']
    #allocation21 [shape = 's32[1]{0}', space=sflag, size = 0x4, scoped, tag = 'scoped memory for sparse_codebook_moe_forward.1']
    %18 = vsyncpa [#allocation3], 0
    %19 = vsyncpa [#allocation6], 0
    %20 = vsyncpa [#allocation9], 0
    %21 = vsyncpa [#allocation12], 0
    %22 = vsyncpa [#allocation15], 0
    %23 = vsyncpa [#allocation18], 0
    %24 = vsyncpa [#allocation4], 0
    %25 = vsyncpa [#allocation21], 0
    // Predicated region
    $region2: #{sparse_codebook_moe_forward.1} parent=1 // pred_check
      _
    $region3: #{sparse_codebook_moe_forward.1} parent=1 // pred_check_branch
      %27 = sbr.rel (0) target = $region5
    $region4: #{sparse_codebook_moe_forward.1} parent=1 // pred_region
      %s29 = ssub.s32 128, 128
      %30 = vsyncadd [#allocation3], %s29
      %s32 = sshll.u32 [#allocation2], 4
      %s33 = int_to_ptr.vmem [resolvable:$true] %s32
      %35 = dma.hbm_to_vmem [thread:$0]  %s0, 128, %s33, [#allocation3]
    $region5: #{sparse_codebook_moe_forward.1} parent=1 // pred_fallthru
      _
    // Predicated region
    $region6: #{sparse_codebook_moe_forward.1} parent=1 // pred_check
      _
    $region7: #{sparse_codebook_moe_forward.1} parent=1 // pred_check_branch
      %37 = sbr.rel (0) target = $region9
    $region8: #{sparse_codebook_moe_forward.1} parent=1 // pred_region
      %s39 = ssub.s32 128, 128
      %40 = vsyncadd [#allocation6], %s39
      %s42 = sshll.u32 [#allocation5], 4
      %s43 = int_to_ptr.vmem [resolvable:$true] %s42
      %45 = dma.hbm_to_vmem [thread:$0]  %s1, 128, %s43, [#allocation6]
    $region9: #{sparse_codebook_moe_forward.1} parent=1 // pred_fallthru
      _
    // Predicated region
    $region10: #{sparse_codebook_moe_forward.1} parent=1 // pred_check
      _
    $region11: #{sparse_codebook_moe_forward.1} parent=1 // pred_check_branch
      %47 = sbr.rel (0) target = $region13
    $region12: #{sparse_codebook_moe_forward.1} parent=1 // pred_region
      _
    $region13: #{sparse_codebook_moe_forward.1} parent=1 // pred_fallthru
      _
    // Predicated region
    $region14: #{sparse_codebook_moe_forward.1} parent=1 // pred_check
      _
    $region15: #{sparse_codebook_moe_forward.1} parent=1 // pred_check_branch
      %49 = sbr.rel (0) target = $region17
    $region16: #{sparse_codebook_moe_forward.1} parent=1 // pred_region
      %s51 = ssub.s32 16, 16
      %52 = vsyncadd [#allocation6], %s51
      %s54 = sshll.u32 [#allocation7], 4
      %s55 = int_to_ptr.vmem [resolvable:$true] %s54
      %57 = dma.hbm_to_vmem [thread:$0]  %s3, 16, %s55, [#allocation6]
    $region17: #{sparse_codebook_moe_forward.1} parent=1 // pred_fallthru
      _
    // Predicated region
    $region18: #{sparse_codebook_moe_forward.1} parent=1 // pred_check
      _
    $region19: #{sparse_codebook_moe_forward.1} parent=1 // pred_check_branch
      %59 = sbr.rel (0) target = $region21
    $region20: #{sparse_codebook_moe_forward.1} parent=1 // pred_region
      %s61 = ssub.s32 128, 128
      %62 = vsyncadd [#allocation9], %s61
      %s64 = sshll.u32 [#allocation8], 4
      %s65 = int_to_ptr.vmem [resolvable:$true] %s64
      %67 = dma.hbm_to_vmem [thread:$0]  %s4, 128, %s65, [#allocation9]
    $region21: #{sparse_codebook_moe_forward.1} parent=1 // pred_fallthru
      _
    // Predicated region
    $region22: #{sparse_codebook_moe_forward.1} parent=1 // pred_check
      _
    $region23: #{sparse_codebook_moe_forward.1} parent=1 // pred_check_branch
      %69 = sbr.rel (0) target = $region25
    $region24: #{sparse_codebook_moe_forward.1} parent=1 // pred_region
      %s71 = ssub.s32 4096, 4096
      %72 = vsyncadd [#allocation9], %s71
      %s73 = sshll.u32 [#allocation10], 4
      %s74 = int_to_ptr.vmem [resolvable:$true] %s73
      %79 = dma.hbm_to_vmem [thread:$0]  %s5, 4096, %s74, [#allocation9], 1024, 1024, 64
    $region25: #{sparse_codebook_moe_forward.1} parent=1 // pred_fallthru
      _
    // Predicated region
    $region26: #{sparse_codebook_moe_forward.1} parent=1 // pred_check
      _
    $region27: #{sparse_codebook_moe_forward.1} parent=1 // pred_check_branch
      %81 = sbr.rel (0) target = $region29
    $region28: #{sparse_codebook_moe_forward.1} parent=1 // pred_region
      %s83 = ssub.s32 4096, 4096
      %84 = vsyncadd [#allocation12], %s83
      %s85 = sshll.u32 [#allocation11], 4
      %s86 = int_to_ptr.vmem [resolvable:$true] %s85
      %91 = dma.hbm_to_vmem [thread:$0]  %s6, 4096, %s86, [#allocation12], 1024, 1024, 64
    $region29: #{sparse_codebook_moe_forward.1} parent=1 // pred_fallthru
      _
    // Predicated region
    $region30: #{sparse_codebook_moe_forward.1} parent=1 // pred_check
      _
    $region31: #{sparse_codebook_moe_forward.1} parent=1 // pred_check_branch
      %93 = sbr.rel (0) target = $region33
    $region32: #{sparse_codebook_moe_forward.1} parent=1 // pred_region
      %s95 = ssub.s32 128, 128
      %96 = vsyncadd [#allocation12], %s95
      %s98 = sshll.u32 [#allocation13], 4
      %s99 = int_to_ptr.vmem [resolvable:$true] %s98
      %101 = dma.hbm_to_vmem [thread:$0]  %s7, 128, %s99, [#allocation12]
    $region33: #{sparse_codebook_moe_forward.1} parent=1 // pred_fallthru
      _
    // Predicated region
    $region34: #{sparse_codebook_moe_forward.1} parent=1 // pred_check
      _
    $region35: #{sparse_codebook_moe_forward.1} parent=1 // pred_check_branch
      %103 = sbr.rel (0) target = $region37
    $region36: #{sparse_codebook_moe_forward.1} parent=1 // pred_region
      %s105 = ssub.s32 131072, 131072
      %106 = vsyncadd [#allocation15], %s105
      %s107 = sshll.u32 [#allocation14], 4
      %s108 = int_to_ptr.vmem [resolvable:$true] %s107
      %113 = dma.hbm_to_vmem [thread:$0]  %s8, 131072, %s108, [#allocation15], 1024, 1024, 64
    $region37: #{sparse_codebook_moe_forward.1} parent=1 // pred_fallthru
      _
    // Predicated region
    $region38: #{sparse_codebook_moe_forward.1} parent=1 // pred_check
      _
    $region39: #{sparse_codebook_moe_forward.1} parent=1 // pred_check_branch
      %115 = sbr.rel (0) target = $region41
    $region40: #{sparse_codebook_moe_forward.1} parent=1 // pred_region
      %s117 = ssub.s32 128, 128
      %118 = vsyncadd [#allocation15], %s117
      %s120 = sshll.u32 [#allocation16], 4
      %s121 = int_to_ptr.vmem [resolvable:$true] %s120
      %123 = dma.hbm_to_vmem [thread:$0]  %s9, 128, %s121, [#allocation15]
    $region41: #{sparse_codebook_moe_forward.1} parent=1 // pred_fallthru
      _
    // Predicated region
    $region42: #{sparse_codebook_moe_forward.1} parent=1 // pred_check
      _
    $region43: #{sparse_codebook_moe_forward.1} parent=1 // pred_check_branch
      %125 = sbr.rel (0) target = $region45
    $region44: #{sparse_codebook_moe_forward.1} parent=1 // pred_region
      %s127 = ssub.s32 1024, 1024
      %128 = vsyncadd [#allocation18], %s127
      %s130 = sshll.u32 [#allocation17], 4
      %s131 = int_to_ptr.vmem [resolvable:$true] %s130
      %133 = dma.hbm_to_vmem [thread:$0]  %s10, 1024, %s131, [#allocation18]
    $region45: #{sparse_codebook_moe_forward.1} parent=1 // pred_fallthru
      _
    // Predicated region
    $region46: #{sparse_codebook_moe_forward.1} parent=1 // pred_check
      _
    $region47: #{sparse_codebook_moe_forward.1} parent=1 // pred_check_branch
      %135 = sbr.rel (0) target = $region49
    $region48: #{sparse_codebook_moe_forward.1} parent=1 // pred_region
      %136 = dma.done [#allocation3], 128
    $region49: #{sparse_codebook_moe_forward.1} parent=1 // pred_fallthru
      _
    // Predicated region
    $region50: #{sparse_codebook_moe_forward.1} parent=1 // pred_check
      _
    $region51: #{sparse_codebook_moe_forward.1} parent=1 // pred_check_branch
      %138 = sbr.rel (0) target = $region53
    $region52: #{sparse_codebook_moe_forward.1} parent=1 // pred_region
      %139 = dma.done [#allocation6], 128
    $region53: #{sparse_codebook_moe_forward.1} parent=1 // pred_fallthru
      _
    // Predicated region
    $region54: #{sparse_codebook_moe_forward.1} parent=1 // pred_check
      _
    $region55: #{sparse_codebook_moe_forward.1} parent=1 // pred_check_branch
      %141 = sbr.rel (0) target = $region57
    $region56: #{sparse_codebook_moe_forward.1} parent=1 // pred_region
      %142 = dma.done [#allocation6], 16
    $region57: #{sparse_codebook_moe_forward.1} parent=1 // pred_fallthru
      _
    // Predicated region
    $region58: #{sparse_codebook_moe_forward.1} parent=1 // pred_check
      _
    $region59: #{sparse_codebook_moe_forward.1} parent=1 // pred_check_branch
      %144 = sbr.rel (0) target = $region61
    $region60: #{sparse_codebook_moe_forward.1} parent=1 // pred_region
      %145 = dma.done [#allocation9], 128
    $region61: #{sparse_codebook_moe_forward.1} parent=1 // pred_fallthru
      _
    // Predicated region
    $region62: #{sparse_codebook_moe_forward.1} parent=1 // pred_check
      _
    $region63: #{sparse_codebook_moe_forward.1} parent=1 // pred_check_branch
      %147 = sbr.rel (0) target = $region65
    $region64: #{sparse_codebook_moe_forward.1} parent=1 // pred_region
      %148 = dma.done [#allocation9], 4096
    $region65: #{sparse_codebook_moe_forward.1} parent=1 // pred_fallthru
      _
    // Predicated region
    $region66: #{sparse_codebook_moe_forward.1} parent=1 // pred_check
      _
    $region67: #{sparse_codebook_moe_forward.1} parent=1 // pred_check_branch
      %150 = sbr.rel (0) target = $region69
    $region68: #{sparse_codebook_moe_forward.1} parent=1 // pred_region
      %151 = dma.done [#allocation12], 4096
    $region69: #{sparse_codebook_moe_forward.1} parent=1 // pred_fallthru
      _
    // Predicated region
    $region70: #{sparse_codebook_moe_forward.1} parent=1 // pred_check
      _
    $region71: #{sparse_codebook_moe_forward.1} parent=1 // pred_check_branch
      %153 = sbr.rel (0) target = $region73
    $region72: #{sparse_codebook_moe_forward.1} parent=1 // pred_region
      %154 = dma.done [#allocation12], 128
    $region73: #{sparse_codebook_moe_forward.1} parent=1 // pred_fallthru
      _
    // Predicated region
    $region74: #{sparse_codebook_moe_forward.1} parent=1 // pred_check
      _
    $region75: #{sparse_codebook_moe_forward.1} parent=1 // pred_check_branch
      %156 = sbr.rel (0) target = $region77
    $region76: #{sparse_codebook_moe_forward.1} parent=1 // pred_region
      %157 = dma.done [#allocation15], 131072
    $region77: #{sparse_codebook_moe_forward.1} parent=1 // pred_fallthru
      _
    // Predicated region
    $region78: #{sparse_codebook_moe_forward.1} parent=1 // pred_check
      _
    $region79: #{sparse_codebook_moe_forward.1} parent=1 // pred_check_branch
      %159 = sbr.rel (0) target = $region81
    $region80: #{sparse_codebook_moe_forward.1} parent=1 // pred_region
      %160 = dma.done [#allocation15], 128
    $region81: #{sparse_codebook_moe_forward.1} parent=1 // pred_fallthru
      _
    // Predicated region
    $region82: #{sparse_codebook_moe_forward.1} parent=1 // pred_check
      _
    $region83: #{sparse_codebook_moe_forward.1} parent=1 // pred_check_branch
      %162 = sbr.rel (0) target = $region85
    $region84: #{sparse_codebook_moe_forward.1} parent=1 // pred_region
      %163 = dma.done [#allocation18], 1024
    $region85: #{sparse_codebook_moe_forward.1} parent=1 // pred_fallthru
      _
    %v164 = vld [vmem:[#allocation2] sm:$0xff]
    %v165 = vmul.f32 %v164, %v164
    %vm166 = vcmask 261120
    %v167 = vsel %vm166, %v165, 0.0
    %168 = vadd.xlane.f32.xlu0 %v167
    %v169 = vpop.xlane.xlu0 %168
    %v170 = vrsqrt.pop %v169
    %v171 = vmul.f32 %v169, %v170
    %vm172 = vcmp.eq.f32.partialorder %v169, inf
    %v173 = vsel %vm172, %v169, %v171
    %vm174 = vcmp.eq.f32.partialorder %v169, 0.0
    %v175 = vand.u32 %v169, 2147483648
    %v176 = vsel %vm174, %v175, %v173
    %v177 = vld [vmem:[%s2] sm:$0xff]
    %v178 = vld [vmem:[%s2 + $0x8] sm:$0xff]
    %v179 = vld [vmem:[%s2 + $0x10] sm:$0xff]
    %v180 = vld [vmem:[%s2 + $0x18] sm:$0xff]
    %v182 = vsel %vm166, %v164, 0
    %184 = vmatprep.subr.mxu0 0.0
    %185 = vmatpush1.msra.mxu0 0.0
    %186 = vmatprep.subr.mxu0 0.0
    %187 = vmatpush1.msra.mxu0 0.0
    %188 = vmatprep.subr.mxu0 0.0
    %189 = vmatpush1.msra.mxu0 0.0
    %190 = vmatprep.subr.mxu0 0.0
    %191 = vmatpush1.msra.mxu0 0.0
    %192 = vmatprep.subr.mxu0 0.0
    %193 = vmatpush1.msra.mxu0 0.0
    %194 = vmatprep.subr.mxu0 0.0
    %195 = vmatpush1.msra.mxu0 0.0
    %196 = vmatprep.subr.mxu0 0.0
    %197 = vmatpush1.msra.mxu0 0.0
    %198 = vmatprep.subr.mxu0 0.0
    %199 = vmatpush1.msra.mxu0 0.0
    %200 = vmatprep.subr.mxu0 0.0
    %201 = vmatpush1.msra.mxu0 0.0
    %202 = vmatprep.subr.mxu0 0.0
    %203 = vmatpush1.msra.mxu0 0.0
    %204 = vmatprep.subr.mxu0 0.0
    %205 = vmatpush1.msra.mxu0 0.0
    %206 = vmatprep.subr.mxu0 0.0
    %207 = vmatpush1.msra.mxu0 0.0
    %208 = vmatprep.subr.mxu0 0.0
    %209 = vmatpush1.msra.mxu0 %v180
    %210 = vmatprep.subr.mxu0 0.0
    %211 = vmatpush1.msra.mxu0 %v179
    %212 = vmatprep.subr.mxu0 0.0
    %213 = vmatpush1.msra.mxu0 %v178
    %214 = vmatprep.subr.mxu0 0.0
    %215 = vmatpush1.msra.mxu0 %v177
    %216 = vmatprep.subr.mxu0 0.0
    %217 = vmatpush2.msra.mxu0 0.0
    %218 = vmatprep.subr.mxu0 0.0
    %219 = vmatpush2.msra.mxu0 0.0
    %220 = vmatprep.subr.mxu0 0.0
    %221 = vmatpush2.msra.mxu0 0.0
    %222 = vmatprep.subr.mxu0 0.0
    %223 = vmatpush2.msra.mxu0 0.0
    %224 = vmatprep.subr.mxu0 0.0
    %225 = vmatpush2.msra.mxu0 0.0
    %226 = vmatprep.subr.mxu0 0.0
    %227 = vmatpush2.msra.mxu0 0.0
    %228 = vmatprep.subr.mxu0 0.0
    %229 = vmatpush2.msra.mxu0 0.0
    %230 = vmatprep.subr.mxu0 0.0
    %231 = vmatpush2.msra.mxu0 0.0
    %232 = vmatprep.subr.mxu0 0.0
    %233 = vmatpush2.msra.mxu0 0.0
    %234 = vmatprep.subr.mxu0 0.0
    %235 = vmatpush2.msra.mxu0 0.0
    %236 = vmatprep.subr.mxu0 0.0
    %237 = vmatpush2.msra.mxu0 0.0
    %238 = vmatprep.subr.mxu0 0.0
    %239 = vmatpush2.msra.mxu0 0.0
    %240 = vmatprep.subr.mxu0 0.0
    %241 = vmatpush2.msra.mxu0 0.0
    %242 = vmatprep.subr.mxu0 0.0
    %243 = vmatpush2.msra.mxu0 0.0
    %244 = vmatprep.subr.mxu0 0.0
    %245 = vmatpush2.msra.mxu0 0.0
    %246 = vmatprep.subr.mxu0 0.0
    %247 = vmatpush2.msra.mxu0 0.0
    %248 = vmatprep.mubr.f32.mxu0 0.0
    %249 = vmatmul.mubr.f32.gmra.mxu0 %v182
    %v250 = vpop.f32.mrf.mxu0
    %v251 = vadd.f32 0.0, %v250
    %v252 = vpop.f32.mrf.mxu0
    %253 = vdwg.mxu0
    %v254 = vld [vmem:[#allocation7] sm:$0x1]
    %v256 = vlaneseq
    %v257 = vshrl.u32 %v256, 7
    %v258 = vsub.s32 0, %v257
    %v259 = vrot.slane %v254, %v258
    %v261 = vmul.f32 %v176, %v259
    %v262 = vmax.f32 %v261, 1e-08
    %v263 = vrcp.pop %v262
    %v264 = vmul.f32 %v251, %v263
    %v265 = vmul.f32 %v264, 0.125
    %v266 = vld [vmem:[#allocation8] sm:$0xff]
    %v267 = vadd.f32 %v265, %v266
    %v268 = vrcp.pop 0.5
    %v269 = vmul.f32 %v267, %v268
    %vm270 = vcmask 64512
    %v271 = vsel %vm270, %v269, -inf
    %272 = vmax.xlane.f32.xlu0 %v271
    %v273 = vpop.xlane.xlu0 %272
    %v274 = vsub.f32 %v269, %v273
    %v275 = vmul.f32 %v274, 1.442695
    %v276 = vpow.pop %v275
    %v277 = vsel %vm270, %v276, 0.0
    %278 = vadd.xlane.f32.xlu0 %v277
    %v279 = vpop.xlane.xlu0 %278
    %v280 = vrcp.pop %v279
    %v281 = vmul.f32 %v276, %v280
    %v282 = vlaneseq
    %v283 = vand.u32 %v282, 127
    %v284 = vsel %vm270, %v281, -inf
    %285 = vmax.xlane.f32.xlu0 %v284
    %v286 = vpop.xlane.xlu0 %285
    %vm287 = vcmp.eq.f32.partialorder %v281, %v286
    %v288 = vsel %vm287, %v283, 8
    %v289 = vsel %vm270, %v288, 2147483647
    %v290 = vand.u32 %v289, 65535
    %v291 = vshra.s32 %v289, 16
    %v292 = vcvt.s32.f32 %v290
    %v293 = vcvt.s32.f32 %v291
    %294 = vmin.xlane.f32.xlu0 %v293
    %v295 = vpop.xlane.xlu0 %294
    %vm296 = vcmp.eq.f32.partialorder %v293, %v295
    %v297 = vsel %vm296, %v292, inf
    %298 = vmin.xlane.f32.xlu0 %v297
    %v299 = vpop.xlane.xlu0 %298
    %v300 = vcvt.f32.s32 %v299
    %v301 = vcvt.f32.s32 %v295
    %v302 = vshll.u32 %v301, 16
    %v303 = vadd.s32 %v302, %v300
    %vm304 = vcmp.eq.s32.totalorder %v283, %v303
    %v305 = vsel %vm304, -inf, %v281
    %v306 = vsel %vm270, %v305, -inf
    %307 = vmax.xlane.f32.xlu0 %v306
    %v308 = vpop.xlane.xlu0 %307
    %vm309 = vcmp.eq.f32.partialorder %v305, %v308
    %v310 = vsel %vm309, %v283, 8
    %v311 = vsel %vm270, %v310, 2147483647
    %v312 = vand.u32 %v311, 65535
    %v313 = vshra.s32 %v311, 16
    %v314 = vcvt.s32.f32 %v312
    %v315 = vcvt.s32.f32 %v313
    %316 = vmin.xlane.f32.xlu0 %v315
    %v317 = vpop.xlane.xlu0 %316
    %vm318 = vcmp.eq.f32.partialorder %v315, %v317
    %v319 = vsel %vm318, %v314, inf
    %320 = vmin.xlane.f32.xlu0 %v319
    %v321 = vpop.xlane.xlu0 %320
    %v322 = vcvt.f32.s32 %v321
    %v323 = vcvt.f32.s32 %v317
    %v324 = vshll.u32 %v323, 16
    %v325 = vadd.s32 %v324, %v322
    %vm326 = vcmp.eq.s32.totalorder %v283, %v325
    %vm327 = vmor %vm304, %vm326
    %v328 = vsel %vm327, %v281, 0.0
    %v329 = vld [vmem:[#allocation5] sm:$0xff]
    %v330 = vld [vmem:[#allocation10] sm:$0xff]
    %v331 = vld [vmem:[#allocation10 + $0x8] sm:$0xff]
    %v332 = vld [vmem:[#allocation10 + $0x10] sm:$0xff]
    %v333 = vld [vmem:[#allocation10 + $0x18] sm:$0xff]
    %v334 = vld [vmem:[#allocation10 + $0x20] sm:$0xff]
    %v335 = vld [vmem:[#allocation10 + $0x28] sm:$0xff]
    %v336 = vld [vmem:[#allocation10 + $0x30] sm:$0xff]
    %v337 = vld [vmem:[#allocation10 + $0x38] sm:$0xff]
    %v338 = vld [vmem:[#allocation10 + $0x40] sm:$0xff]
    %v339 = vld [vmem:[#allocation10 + $0x48] sm:$0xff]
    %v340 = vld [vmem:[#allocation10 + $0x50] sm:$0xff]
    %v341 = vld [vmem:[#allocation10 + $0x58] sm:$0xff]
    %v342 = vld [vmem:[#allocation10 + $0x60] sm:$0xff]
    %v343 = vld [vmem:[#allocation10 + $0x68] sm:$0xff]
    %v344 = vld [vmem:[#allocation10 + $0x70] sm:$0xff]
    %v345 = vld [vmem:[#allocation10 + $0x78] sm:$0xff]
    %v346 = vld [vmem:[#allocation10 + $0x80] sm:$0xff]
    %v347 = vld [vmem:[#allocation10 + $0x88] sm:$0xff]
    %v348 = vld [vmem:[#allocation10 + $0x90] sm:$0xff]
    %v349 = vld [vmem:[#allocation10 + $0x98] sm:$0xff]
    %v350 = vld [vmem:[#allocation10 + $0xa0] sm:$0xff]
    %v351 = vld [vmem:[#allocation10 + $0xa8] sm:$0xff]
    %v352 = vld [vmem:[#allocation10 + $0xb0] sm:$0xff]
    %v353 = vld [vmem:[#allocation10 + $0xb8] sm:$0xff]
    %v354 = vld [vmem:[#allocation10 + $0xc0] sm:$0xff]
    %v355 = vld [vmem:[#allocation10 + $0xc8] sm:$0xff]
    %v356 = vld [vmem:[#allocation10 + $0xd0] sm:$0xff]
    %v357 = vld [vmem:[#allocation10 + $0xd8] sm:$0xff]
    %v358 = vld [vmem:[#allocation10 + $0xe0] sm:$0xff]
    %v359 = vld [vmem:[#allocation10 + $0xe8] sm:$0xff]
    %v360 = vld [vmem:[#allocation10 + $0xf0] sm:$0xff]
    %v361 = vld [vmem:[#allocation10 + $0xf8] sm:$0xff]
    %v362 = vld [vmem:[#allocation11] sm:$0xff]
    %v363 = vld [vmem:[#allocation11 + $0x8] sm:$0xff]
    %v364 = vld [vmem:[#allocation11 + $0x10] sm:$0xff]
    %v365 = vld [vmem:[#allocation11 + $0x18] sm:$0xff]
    %v366 = vld [vmem:[#allocation11 + $0x20] sm:$0xff]
    %v367 = vld [vmem:[#allocation11 + $0x28] sm:$0xff]
    %v368 = vld [vmem:[#allocation11 + $0x30] sm:$0xff]
    %v369 = vld [vmem:[#allocation11 + $0x38] sm:$0xff]
    %v370 = vld [vmem:[#allocation11 + $0x40] sm:$0xff]
    %v371 = vld [vmem:[#allocation11 + $0x48] sm:$0xff]
    %v372 = vld [vmem:[#allocation11 + $0x50] sm:$0xff]
    %v373 = vld [vmem:[#allocation11 + $0x58] sm:$0xff]
    %v374 = vld [vmem:[#allocation11 + $0x60] sm:$0xff]
    %v375 = vld [vmem:[#allocation11 + $0x68] sm:$0xff]
    %v376 = vld [vmem:[#allocation11 + $0x70] sm:$0xff]
    %v377 = vld [vmem:[#allocation11 + $0x78] sm:$0xff]
    %v378 = vld [vmem:[#allocation11 + $0x80] sm:$0xff]
    %v379 = vld [vmem:[#allocation11 + $0x88] sm:$0xff]
    %v380 = vld [vmem:[#allocation11 + $0x90] sm:$0xff]
    %v381 = vld [vmem:[#allocation11 + $0x98] sm:$0xff]
    %v382 = vld [vmem:[#allocation11 + $0xa0] sm:$0xff]
    %v383 = vld [vmem:[#allocation11 + $0xa8] sm:$0xff]
    %v384 = vld [vmem:[#allocation11 + $0xb0] sm:$0xff]
    %v385 = vld [vmem:[#allocation11 + $0xb8] sm:$0xff]
    %v386 = vld [vmem:[#allocation11 + $0xc0] sm:$0xff]
    %v387 = vld [vmem:[#allocation11 + $0xc8] sm:$0xff]
    %v388 = vld [vmem:[#allocation11 + $0xd0] sm:$0xff]
    %v389 = vld [vmem:[#allocation11 + $0xd8] sm:$0xff]
    %v390 = vld [vmem:[#allocation11 + $0xe0] sm:$0xff]
    %v391 = vld [vmem:[#allocation11 + $0xe8] sm:$0xff]
    %v392 = vld [vmem:[#allocation11 + $0xf0] sm:$0xff]
    %v393 = vld [vmem:[#allocation11 + $0xf8] sm:$0xff]
    %394 = vmatprep.subr.mxu0 0.0
    %395 = vmatpush1.msra.mxu0 0.0
    %396 = vmatprep.subr.mxu0 0.0
    %397 = vmatpush1.msra.mxu0 0.0
    %398 = vmatprep.subr.mxu0 0.0
    %399 = vmatpush1.msra.mxu0 0.0
    %400 = vmatprep.subr.mxu0 0.0
    %401 = vmatpush1.msra.mxu0 0.0
    %402 = vmatprep.subr.mxu0 0.0
    %403 = vmatpush1.msra.mxu0 0.0
    %404 = vmatprep.subr.mxu0 0.0
    %405 = vmatpush1.msra.mxu0 0.0
    %406 = vmatprep.subr.mxu0 0.0
    %407 = vmatpush1.msra.mxu0 0.0
    %408 = vmatprep.subr.mxu0 0.0
    %409 = vmatpush1.msra.mxu0 0.0
    %410 = vmatprep.subr.mxu0 0.0
    %411 = vmatpush1.msra.mxu0 0.0
    %412 = vmatprep.subr.mxu0 0.0
    %413 = vmatpush1.msra.mxu0 0.0
    %414 = vmatprep.subr.mxu0 0.0
    %415 = vmatpush1.msra.mxu0 0.0
    %416 = vmatprep.subr.mxu0 0.0
    %417 = vmatpush1.msra.mxu0 0.0
    %418 = vmatprep.subr.mxu0 %v387
    %419 = vmatpush1.msra.mxu0 %v386
    %420 = vmatprep.subr.mxu0 %v379
    %421 = vmatpush1.msra.mxu0 %v378
    %422 = vmatprep.subr.mxu0 %v371
    %423 = vmatpush1.msra.mxu0 %v370
    %424 = vmatprep.subr.mxu0 %v363
    %425 = vmatpush1.msra.mxu0 %v362
    %426 = vmatprep.subr.mxu0 0.0
    %427 = vmatpush2.msra.mxu0 0.0
    %428 = vmatprep.subr.mxu0 0.0
    %429 = vmatpush2.msra.mxu0 0.0
    %430 = vmatprep.subr.mxu0 0.0
    %431 = vmatpush2.msra.mxu0 0.0
    %432 = vmatprep.subr.mxu0 0.0
    %433 = vmatpush2.msra.mxu0 0.0
    %434 = vmatprep.subr.mxu0 0.0
    %435 = vmatpush2.msra.mxu0 0.0
    %436 = vmatprep.subr.mxu0 0.0
    %437 = vmatpush2.msra.mxu0 0.0
    %438 = vmatprep.subr.mxu0 0.0
    %439 = vmatpush2.msra.mxu0 0.0
    %440 = vmatprep.subr.mxu0 0.0
    %441 = vmatpush2.msra.mxu0 0.0
    %442 = vmatprep.subr.mxu0 0.0
    %443 = vmatpush2.msra.mxu0 0.0
    %444 = vmatprep.subr.mxu0 0.0
    %445 = vmatpush2.msra.mxu0 0.0
    %446 = vmatprep.subr.mxu0 0.0
    %447 = vmatpush2.msra.mxu0 0.0
    %448 = vmatprep.subr.mxu0 0.0
    %449 = vmatpush2.msra.mxu0 0.0
    %450 = vmatprep.subr.mxu0 0.0
    %451 = vmatpush2.msra.mxu0 0.0
    %452 = vmatprep.subr.mxu0 0.0
    %453 = vmatpush2.msra.mxu0 0.0
    %454 = vmatprep.subr.mxu0 0.0
    %455 = vmatpush2.msra.mxu0 0.0
    %456 = vmatprep.subr.mxu0 0.0
    %457 = vmatpush2.msra.mxu0 0.0
    %458 = vmatprep.mubr.f32.mxu0 0.0
    %459 = vmatmul.mubr.f32.gmra.mxu0 %v182
    %v460 = vpop.f32.mrf.mxu0
    %v461 = vadd.f32 0.0, %v460
    %v462 = vpop.f32.mrf.mxu0
    %v463 = vadd.f32 0.0, %v462
    %464 = vdwg.mxu0
    %465 = vmatprep.subr.mxu0 0.0
    %466 = vmatpush1.msra.mxu0 0.0
    %467 = vmatprep.subr.mxu0 0.0
    %468 = vmatpush1.msra.mxu0 0.0
    %469 = vmatprep.subr.mxu0 0.0
    %470 = vmatpush1.msra.mxu0 0.0
    %471 = vmatprep.subr.mxu0 0.0
    %472 = vmatpush1.msra.mxu0 0.0
    %473 = vmatprep.subr.mxu0 0.0
    %474 = vmatpush1.msra.mxu0 0.0
    %475 = vmatprep.subr.mxu0 0.0
    %476 = vmatpush1.msra.mxu0 0.0
    %477 = vmatprep.subr.mxu0 0.0
    %478 = vmatpush1.msra.mxu0 0.0
    %479 = vmatprep.subr.mxu0 0.0
    %480 = vmatpush1.msra.mxu0 0.0
    %481 = vmatprep.subr.mxu0 0.0
    %482 = vmatpush1.msra.mxu0 0.0
    %483 = vmatprep.subr.mxu0 0.0
    %484 = vmatpush1.msra.mxu0 0.0
    %485 = vmatprep.subr.mxu0 0.0
    %486 = vmatpush1.msra.mxu0 0.0
    %487 = vmatprep.subr.mxu0 0.0
    %488 = vmatpush1.msra.mxu0 0.0
    %489 = vmatprep.subr.mxu0 %v389
    %490 = vmatpush1.msra.mxu0 %v388
    %491 = vmatprep.subr.mxu0 %v381
    %492 = vmatpush1.msra.mxu0 %v380
    %493 = vmatprep.subr.mxu0 %v373
    %494 = vmatpush1.msra.mxu0 %v372
    %495 = vmatprep.subr.mxu0 %v365
    %496 = vmatpush1.msra.mxu0 %v364
    %497 = vmatprep.subr.mxu0 0.0
    %498 = vmatpush2.msra.mxu0 0.0
    %499 = vmatprep.subr.mxu0 0.0
    %500 = vmatpush2.msra.mxu0 0.0
    %501 = vmatprep.subr.mxu0 0.0
    %502 = vmatpush2.msra.mxu0 0.0
    %503 = vmatprep.subr.mxu0 0.0
    %504 = vmatpush2.msra.mxu0 0.0
    %505 = vmatprep.subr.mxu0 0.0
    %506 = vmatpush2.msra.mxu0 0.0
    %507 = vmatprep.subr.mxu0 0.0
    %508 = vmatpush2.msra.mxu0 0.0
    %509 = vmatprep.subr.mxu0 0.0
    %510 = vmatpush2.msra.mxu0 0.0
    %511 = vmatprep.subr.mxu0 0.0
    %512 = vmatpush2.msra.mxu0 0.0
    %513 = vmatprep.subr.mxu0 0.0
    %514 = vmatpush2.msra.mxu0 0.0
    %515 = vmatprep.subr.mxu0 0.0
    %516 = vmatpush2.msra.mxu0 0.0
    %517 = vmatprep.subr.mxu0 0.0
    %518 = vmatpush2.msra.mxu0 0.0
    %519 = vmatprep.subr.mxu0 0.0
    %520 = vmatpush2.msra.mxu0 0.0
    %521 = vmatprep.subr.mxu0 0.0
    %522 = vmatpush2.msra.mxu0 0.0
    %523 = vmatprep.subr.mxu0 0.0
    %524 = vmatpush2.msra.mxu0 0.0
    %525 = vmatprep.subr.mxu0 0.0
    %526 = vmatpush2.msra.mxu0 0.0
    %527 = vmatprep.subr.mxu0 0.0
    %528 = vmatpush2.msra.mxu0 0.0
    %529 = vmatprep.mubr.f32.mxu0 0.0
    %530 = vmatmul.mubr.f32.gmra.mxu0 %v182
    %v531 = vpop.f32.mrf.mxu0
    %v532 = vadd.f32 0.0, %v531
    %v533 = vpop.f32.mrf.mxu0
    %v534 = vadd.f32 0.0, %v533
    %535 = vdwg.mxu0
    %536 = vmatprep.subr.mxu0 0.0
    %537 = vmatpush1.msra.mxu0 0.0
    %538 = vmatprep.subr.mxu0 0.0
    %539 = vmatpush1.msra.mxu0 0.0
    %540 = vmatprep.subr.mxu0 0.0
    %541 = vmatpush1.msra.mxu0 0.0
    %542 = vmatprep.subr.mxu0 0.0
    %543 = vmatpush1.msra.mxu0 0.0
    %544 = vmatprep.subr.mxu0 0.0
    %545 = vmatpush1.msra.mxu0 0.0
    %546 = vmatprep.subr.mxu0 0.0
    %547 = vmatpush1.msra.mxu0 0.0
    %548 = vmatprep.subr.mxu0 0.0
    %549 = vmatpush1.msra.mxu0 0.0
    %550 = vmatprep.subr.mxu0 0.0
    %551 = vmatpush1.msra.mxu0 0.0
    %552 = vmatprep.subr.mxu0 0.0
    %553 = vmatpush1.msra.mxu0 0.0
    %554 = vmatprep.subr.mxu0 0.0
    %555 = vmatpush1.msra.mxu0 0.0
    %556 = vmatprep.subr.mxu0 0.0
    %557 = vmatpush1.msra.mxu0 0.0
    %558 = vmatprep.subr.mxu0 0.0
    %559 = vmatpush1.msra.mxu0 0.0
    %560 = vmatprep.subr.mxu0 %v391
    %561 = vmatpush1.msra.mxu0 %v390
    %562 = vmatprep.subr.mxu0 %v383
    %563 = vmatpush1.msra.mxu0 %v382
    %564 = vmatprep.subr.mxu0 %v375
    %565 = vmatpush1.msra.mxu0 %v374
    %566 = vmatprep.subr.mxu0 %v367
    %567 = vmatpush1.msra.mxu0 %v366
    %568 = vmatprep.subr.mxu0 0.0
    %569 = vmatpush2.msra.mxu0 0.0
    %570 = vmatprep.subr.mxu0 0.0
    %571 = vmatpush2.msra.mxu0 0.0
    %572 = vmatprep.subr.mxu0 0.0
    %573 = vmatpush2.msra.mxu0 0.0
    %574 = vmatprep.subr.mxu0 0.0
    %575 = vmatpush2.msra.mxu0 0.0
    %576 = vmatprep.subr.mxu0 0.0
    %577 = vmatpush2.msra.mxu0 0.0
    %578 = vmatprep.subr.mxu0 0.0
    %579 = vmatpush2.msra.mxu0 0.0
    %580 = vmatprep.subr.mxu0 0.0
    %581 = vmatpush2.msra.mxu0 0.0
    %582 = vmatprep.subr.mxu0 0.0
    %583 = vmatpush2.msra.mxu0 0.0
    %584 = vmatprep.subr.mxu0 0.0
    %585 = vmatpush2.msra.mxu0 0.0
    %586 = vmatprep.subr.mxu0 0.0
    %587 = vmatpush2.msra.mxu0 0.0
    %588 = vmatprep.subr.mxu0 0.0
    %589 = vmatpush2.msra.mxu0 0.0
    %590 = vmatprep.subr.mxu0 0.0
    %591 = vmatpush2.msra.mxu0 0.0
    %592 = vmatprep.subr.mxu0 0.0
    %593 = vmatpush2.msra.mxu0 0.0
    %594 = vmatprep.subr.mxu0 0.0
    %595 = vmatpush2.msra.mxu0 0.0
    %596 = vmatprep.subr.mxu0 0.0
    %597 = vmatpush2.msra.mxu0 0.0
    %598 = vmatprep.subr.mxu0 0.0
    %599 = vmatpush2.msra.mxu0 0.0
    %600 = vmatprep.mubr.f32.mxu0 0.0
    %601 = vmatmul.mubr.f32.gmra.mxu0 %v182
    %v602 = vpop.f32.mrf.mxu0
    %v603 = vadd.f32 0.0, %v602
    %v604 = vpop.f32.mrf.mxu0
    %v605 = vadd.f32 0.0, %v604
    %606 = vdwg.mxu0
    %607 = vmatprep.subr.mxu0 0.0
    %608 = vmatpush1.msra.mxu0 0.0
    %609 = vmatprep.subr.mxu0 0.0
    %610 = vmatpush1.msra.mxu0 0.0
    %611 = vmatprep.subr.mxu0 0.0
    %612 = vmatpush1.msra.mxu0 0.0
    %613 = vmatprep.subr.mxu0 0.0
    %614 = vmatpush1.msra.mxu0 0.0
    %615 = vmatprep.subr.mxu0 0.0
    %616 = vmatpush1.msra.mxu0 0.0
    %617 = vmatprep.subr.mxu0 0.0
    %618 = vmatpush1.msra.mxu0 0.0
    %619 = vmatprep.subr.mxu0 0.0
    %620 = vmatpush1.msra.mxu0 0.0
    %621 = vmatprep.subr.mxu0 0.0
    %622 = vmatpush1.msra.mxu0 0.0
    %623 = vmatprep.subr.mxu0 0.0
    %624 = vmatpush1.msra.mxu0 0.0
    %625 = vmatprep.subr.mxu0 0.0
    %626 = vmatpush1.msra.mxu0 0.0
    %627 = vmatprep.subr.mxu0 0.0
    %628 = vmatpush1.msra.mxu0 0.0
    %629 = vmatprep.subr.mxu0 0.0
    %630 = vmatpush1.msra.mxu0 0.0
    %631 = vmatprep.subr.mxu0 %v393
    %632 = vmatpush1.msra.mxu0 %v392
    %633 = vmatprep.subr.mxu0 %v385
    %634 = vmatpush1.msra.mxu0 %v384
    %635 = vmatprep.subr.mxu0 %v377
    %636 = vmatpush1.msra.mxu0 %v376
    %637 = vmatprep.subr.mxu0 %v369
    %638 = vmatpush1.msra.mxu0 %v368
    %639 = vmatprep.subr.mxu0 0.0
    %640 = vmatpush2.msra.mxu0 0.0
    %641 = vmatprep.subr.mxu0 0.0
    %642 = vmatpush2.msra.mxu0 0.0
    %643 = vmatprep.subr.mxu0 0.0
    %644 = vmatpush2.msra.mxu0 0.0
    %645 = vmatprep.subr.mxu0 0.0
    %646 = vmatpush2.msra.mxu0 0.0
    %647 = vmatprep.subr.mxu0 0.0
    %648 = vmatpush2.msra.mxu0 0.0
    %649 = vmatprep.subr.mxu0 0.0
    %650 = vmatpush2.msra.mxu0 0.0
    %651 = vmatprep.subr.mxu0 0.0
    %652 = vmatpush2.msra.mxu0 0.0
    %653 = vmatprep.subr.mxu0 0.0
    %654 = vmatpush2.msra.mxu0 0.0
    %655 = vmatprep.subr.mxu0 0.0
    %656 = vmatpush2.msra.mxu0 0.0
    %657 = vmatprep.subr.mxu0 0.0
    %658 = vmatpush2.msra.mxu0 0.0
    %659 = vmatprep.subr.mxu0 0.0
    %660 = vmatpush2.msra.mxu0 0.0
    %661 = vmatprep.subr.mxu0 0.0
    %662 = vmatpush2.msra.mxu0 0.0
    %663 = vmatprep.subr.mxu0 0.0
    %664 = vmatpush2.msra.mxu0 0.0
    %665 = vmatprep.subr.mxu0 0.0
    %666 = vmatpush2.msra.mxu0 0.0
    %667 = vmatprep.subr.mxu0 0.0
    %668 = vmatpush2.msra.mxu0 0.0
    %669 = vmatprep.subr.mxu0 0.0
    %670 = vmatpush2.msra.mxu0 0.0
    %671 = vmatprep.mubr.f32.mxu0 0.0
    %672 = vmatmul.mubr.f32.gmra.mxu0 %v182
    %v673 = vpop.f32.mrf.mxu0
    %v674 = vadd.f32 0.0, %v673
    %v675 = vpop.f32.mrf.mxu0
    %v676 = vadd.f32 0.0, %v675
    %677 = vdwg.mxu0
    %v679 = vsel %vm166, %v329, 0
    %681 = vmatprep.subr.mxu0 0.0
    %682 = vmatpush1.msra.mxu0 0.0
    %683 = vmatprep.subr.mxu0 0.0
    %684 = vmatpush1.msra.mxu0 0.0
    %685 = vmatprep.subr.mxu0 0.0
    %686 = vmatpush1.msra.mxu0 0.0
    %687 = vmatprep.subr.mxu0 0.0
    %688 = vmatpush1.msra.mxu0 0.0
    %689 = vmatprep.subr.mxu0 0.0
    %690 = vmatpush1.msra.mxu0 0.0
    %691 = vmatprep.subr.mxu0 0.0
    %692 = vmatpush1.msra.mxu0 0.0
    %693 = vmatprep.subr.mxu0 0.0
    %694 = vmatpush1.msra.mxu0 0.0
    %695 = vmatprep.subr.mxu0 0.0
    %696 = vmatpush1.msra.mxu0 0.0
    %697 = vmatprep.subr.mxu0 0.0
    %698 = vmatpush1.msra.mxu0 0.0
    %699 = vmatprep.subr.mxu0 0.0
    %700 = vmatpush1.msra.mxu0 0.0
    %701 = vmatprep.subr.mxu0 0.0
    %702 = vmatpush1.msra.mxu0 0.0
    %703 = vmatprep.subr.mxu0 0.0
    %704 = vmatpush1.msra.mxu0 0.0
    %705 = vmatprep.subr.mxu0 %v355
    %706 = vmatpush1.msra.mxu0 %v354
    %707 = vmatprep.subr.mxu0 %v347
    %708 = vmatpush1.msra.mxu0 %v346
    %709 = vmatprep.subr.mxu0 %v339
    %710 = vmatpush1.msra.mxu0 %v338
    %711 = vmatprep.subr.mxu0 %v331
    %712 = vmatpush1.msra.mxu0 %v330
    %713 = vmatprep.subr.mxu0 0.0
    %714 = vmatpush2.msra.mxu0 0.0
    %715 = vmatprep.subr.mxu0 0.0
    %716 = vmatpush2.msra.mxu0 0.0
    %717 = vmatprep.subr.mxu0 0.0
    %718 = vmatpush2.msra.mxu0 0.0
    %719 = vmatprep.subr.mxu0 0.0
    %720 = vmatpush2.msra.mxu0 0.0
    %721 = vmatprep.subr.mxu0 0.0
    %722 = vmatpush2.msra.mxu0 0.0
    %723 = vmatprep.subr.mxu0 0.0
    %724 = vmatpush2.msra.mxu0 0.0
    %725 = vmatprep.subr.mxu0 0.0
    %726 = vmatpush2.msra.mxu0 0.0
    %727 = vmatprep.subr.mxu0 0.0
    %728 = vmatpush2.msra.mxu0 0.0
    %729 = vmatprep.subr.mxu0 0.0
    %730 = vmatpush2.msra.mxu0 0.0
    %731 = vmatprep.subr.mxu0 0.0
    %732 = vmatpush2.msra.mxu0 0.0
    %733 = vmatprep.subr.mxu0 0.0
    %734 = vmatpush2.msra.mxu0 0.0
    %735 = vmatprep.subr.mxu0 0.0
    %736 = vmatpush2.msra.mxu0 0.0
    %737 = vmatprep.subr.mxu0 0.0
    %738 = vmatpush2.msra.mxu0 0.0
    %739 = vmatprep.subr.mxu0 0.0
    %740 = vmatpush2.msra.mxu0 0.0
    %741 = vmatprep.subr.mxu0 0.0
    %742 = vmatpush2.msra.mxu0 0.0
    %743 = vmatprep.subr.mxu0 0.0
    %744 = vmatpush2.msra.mxu0 0.0
    %745 = vmatprep.mubr.f32.mxu0 0.0
    %746 = vmatmul.mubr.f32.gmra.mxu0 %v679
    %v747 = vpop.f32.mrf.mxu0
    %v748 = vadd.f32 %v461, %v747
    %v749 = vpop.f32.mrf.mxu0
    %v750 = vadd.f32 %v463, %v749
    %751 = vdwg.mxu0
    %752 = vmatprep.subr.mxu0 0.0
    %753 = vmatpush1.msra.mxu0 0.0
    %754 = vmatprep.subr.mxu0 0.0
    %755 = vmatpush1.msra.mxu0 0.0
    %756 = vmatprep.subr.mxu0 0.0
    %757 = vmatpush1.msra.mxu0 0.0
    %758 = vmatprep.subr.mxu0 0.0
    %759 = vmatpush1.msra.mxu0 0.0
    %760 = vmatprep.subr.mxu0 0.0
    %761 = vmatpush1.msra.mxu0 0.0
    %762 = vmatprep.subr.mxu0 0.0
    %763 = vmatpush1.msra.mxu0 0.0
    %764 = vmatprep.subr.mxu0 0.0
    %765 = vmatpush1.msra.mxu0 0.0
    %766 = vmatprep.subr.mxu0 0.0
    %767 = vmatpush1.msra.mxu0 0.0
    %768 = vmatprep.subr.mxu0 0.0
    %769 = vmatpush1.msra.mxu0 0.0
    %770 = vmatprep.subr.mxu0 0.0
    %771 = vmatpush1.msra.mxu0 0.0
    %772 = vmatprep.subr.mxu0 0.0
    %773 = vmatpush1.msra.mxu0 0.0
    %774 = vmatprep.subr.mxu0 0.0
    %775 = vmatpush1.msra.mxu0 0.0
    %776 = vmatprep.subr.mxu0 %v357
    %777 = vmatpush1.msra.mxu0 %v356
    %778 = vmatprep.subr.mxu0 %v349
    %779 = vmatpush1.msra.mxu0 %v348
    %780 = vmatprep.subr.mxu0 %v341
    %781 = vmatpush1.msra.mxu0 %v340
    %782 = vmatprep.subr.mxu0 %v333
    %783 = vmatpush1.msra.mxu0 %v332
    %784 = vmatprep.subr.mxu0 0.0
    %785 = vmatpush2.msra.mxu0 0.0
    %786 = vmatprep.subr.mxu0 0.0
    %787 = vmatpush2.msra.mxu0 0.0
    %788 = vmatprep.subr.mxu0 0.0
    %789 = vmatpush2.msra.mxu0 0.0
    %790 = vmatprep.subr.mxu0 0.0
    %791 = vmatpush2.msra.mxu0 0.0
    %792 = vmatprep.subr.mxu0 0.0
    %793 = vmatpush2.msra.mxu0 0.0
    %794 = vmatprep.subr.mxu0 0.0
    %795 = vmatpush2.msra.mxu0 0.0
    %796 = vmatprep.subr.mxu0 0.0
    %797 = vmatpush2.msra.mxu0 0.0
    %798 = vmatprep.subr.mxu0 0.0
    %799 = vmatpush2.msra.mxu0 0.0
    %800 = vmatprep.subr.mxu0 0.0
    %801 = vmatpush2.msra.mxu0 0.0
    %802 = vmatprep.subr.mxu0 0.0
    %803 = vmatpush2.msra.mxu0 0.0
    %804 = vmatprep.subr.mxu0 0.0
    %805 = vmatpush2.msra.mxu0 0.0
    %806 = vmatprep.subr.mxu0 0.0
    %807 = vmatpush2.msra.mxu0 0.0
    %808 = vmatprep.subr.mxu0 0.0
    %809 = vmatpush2.msra.mxu0 0.0
    %810 = vmatprep.subr.mxu0 0.0
    %811 = vmatpush2.msra.mxu0 0.0
    %812 = vmatprep.subr.mxu0 0.0
    %813 = vmatpush2.msra.mxu0 0.0
    %814 = vmatprep.subr.mxu0 0.0
    %815 = vmatpush2.msra.mxu0 0.0
    %816 = vmatprep.mubr.f32.mxu0 0.0
    %817 = vmatmul.mubr.f32.gmra.mxu0 %v679
    %v818 = vpop.f32.mrf.mxu0
    %v819 = vadd.f32 %v532, %v818
    %v820 = vpop.f32.mrf.mxu0
    %v821 = vadd.f32 %v534, %v820
    %822 = vdwg.mxu0
    %823 = vmatprep.subr.mxu0 0.0
    %824 = vmatpush1.msra.mxu0 0.0
    %825 = vmatprep.subr.mxu0 0.0
    %826 = vmatpush1.msra.mxu0 0.0
    %827 = vmatprep.subr.mxu0 0.0
    %828 = vmatpush1.msra.mxu0 0.0
    %829 = vmatprep.subr.mxu0 0.0
    %830 = vmatpush1.msra.mxu0 0.0
    %831 = vmatprep.subr.mxu0 0.0
    %832 = vmatpush1.msra.mxu0 0.0
    %833 = vmatprep.subr.mxu0 0.0
    %834 = vmatpush1.msra.mxu0 0.0
    %835 = vmatprep.subr.mxu0 0.0
    %836 = vmatpush1.msra.mxu0 0.0
    %837 = vmatprep.subr.mxu0 0.0
    %838 = vmatpush1.msra.mxu0 0.0
    %839 = vmatprep.subr.mxu0 0.0
    %840 = vmatpush1.msra.mxu0 0.0
    %841 = vmatprep.subr.mxu0 0.0
    %842 = vmatpush1.msra.mxu0 0.0
    %843 = vmatprep.subr.mxu0 0.0
    %844 = vmatpush1.msra.mxu0 0.0
    %845 = vmatprep.subr.mxu0 0.0
    %846 = vmatpush1.msra.mxu0 0.0
    %847 = vmatprep.subr.mxu0 %v359
    %848 = vmatpush1.msra.mxu0 %v358
    %849 = vmatprep.subr.mxu0 %v351
    %850 = vmatpush1.msra.mxu0 %v350
    %851 = vmatprep.subr.mxu0 %v343
    %852 = vmatpush1.msra.mxu0 %v342
    %853 = vmatprep.subr.mxu0 %v335
    %854 = vmatpush1.msra.mxu0 %v334
    %855 = vmatprep.subr.mxu0 0.0
    %856 = vmatpush2.msra.mxu0 0.0
    %857 = vmatprep.subr.mxu0 0.0
    %858 = vmatpush2.msra.mxu0 0.0
    %859 = vmatprep.subr.mxu0 0.0
    %860 = vmatpush2.msra.mxu0 0.0
    %861 = vmatprep.subr.mxu0 0.0
    %862 = vmatpush2.msra.mxu0 0.0
    %863 = vmatprep.subr.mxu0 0.0
    %864 = vmatpush2.msra.mxu0 0.0
    %865 = vmatprep.subr.mxu0 0.0
    %866 = vmatpush2.msra.mxu0 0.0
    %867 = vmatprep.subr.mxu0 0.0
    %868 = vmatpush2.msra.mxu0 0.0
    %869 = vmatprep.subr.mxu0 0.0
    %870 = vmatpush2.msra.mxu0 0.0
    %871 = vmatprep.subr.mxu0 0.0
    %872 = vmatpush2.msra.mxu0 0.0
    %873 = vmatprep.subr.mxu0 0.0
    %874 = vmatpush2.msra.mxu0 0.0
    %875 = vmatprep.subr.mxu0 0.0
    %876 = vmatpush2.msra.mxu0 0.0
    %877 = vmatprep.subr.mxu0 0.0
    %878 = vmatpush2.msra.mxu0 0.0
    %879 = vmatprep.subr.mxu0 0.0
    %880 = vmatpush2.msra.mxu0 0.0
    %881 = vmatprep.subr.mxu0 0.0
    %882 = vmatpush2.msra.mxu0 0.0
    %883 = vmatprep.subr.mxu0 0.0
    %884 = vmatpush2.msra.mxu0 0.0
    %885 = vmatprep.subr.mxu0 0.0
    %886 = vmatpush2.msra.mxu0 0.0
    %887 = vmatprep.mubr.f32.mxu0 0.0
    %888 = vmatmul.mubr.f32.gmra.mxu0 %v679
    %v889 = vpop.f32.mrf.mxu0
    %v890 = vadd.f32 %v603, %v889
    %v891 = vpop.f32.mrf.mxu0
    %v892 = vadd.f32 %v605, %v891
    %893 = vdwg.mxu0
    %894 = vmatprep.subr.mxu0 0.0
    %895 = vmatpush1.msra.mxu0 0.0
    %896 = vmatprep.subr.mxu0 0.0
    %897 = vmatpush1.msra.mxu0 0.0
    %898 = vmatprep.subr.mxu0 0.0
    %899 = vmatpush1.msra.mxu0 0.0
    %900 = vmatprep.subr.mxu0 0.0
    %901 = vmatpush1.msra.mxu0 0.0
    %902 = vmatprep.subr.mxu0 0.0
    %903 = vmatpush1.msra.mxu0 0.0
    %904 = vmatprep.subr.mxu0 0.0
    %905 = vmatpush1.msra.mxu0 0.0
    %906 = vmatprep.subr.mxu0 0.0
    %907 = vmatpush1.msra.mxu0 0.0
    %908 = vmatprep.subr.mxu0 0.0
    %909 = vmatpush1.msra.mxu0 0.0
    %910 = vmatprep.subr.mxu0 0.0
    %911 = vmatpush1.msra.mxu0 0.0
    %912 = vmatprep.subr.mxu0 0.0
    %913 = vmatpush1.msra.mxu0 0.0
    %914 = vmatprep.subr.mxu0 0.0
    %915 = vmatpush1.msra.mxu0 0.0
    %916 = vmatprep.subr.mxu0 0.0
    %917 = vmatpush1.msra.mxu0 0.0
    %918 = vmatprep.subr.mxu0 %v361
    %919 = vmatpush1.msra.mxu0 %v360
    %920 = vmatprep.subr.mxu0 %v353
    %921 = vmatpush1.msra.mxu0 %v352
    %922 = vmatprep.subr.mxu0 %v345
    %923 = vmatpush1.msra.mxu0 %v344
    %924 = vmatprep.subr.mxu0 %v337
    %925 = vmatpush1.msra.mxu0 %v336
    %926 = vmatprep.subr.mxu0 0.0
    %927 = vmatpush2.msra.mxu0 0.0
    %928 = vmatprep.subr.mxu0 0.0
    %929 = vmatpush2.msra.mxu0 0.0
    %930 = vmatprep.subr.mxu0 0.0
    %931 = vmatpush2.msra.mxu0 0.0
    %932 = vmatprep.subr.mxu0 0.0
    %933 = vmatpush2.msra.mxu0 0.0
    %934 = vmatprep.subr.mxu0 0.0
    %935 = vmatpush2.msra.mxu0 0.0
    %936 = vmatprep.subr.mxu0 0.0
    %937 = vmatpush2.msra.mxu0 0.0
    %938 = vmatprep.subr.mxu0 0.0
    %939 = vmatpush2.msra.mxu0 0.0
    %940 = vmatprep.subr.mxu0 0.0
    %941 = vmatpush2.msra.mxu0 0.0
    %942 = vmatprep.subr.mxu0 0.0
    %943 = vmatpush2.msra.mxu0 0.0
    %944 = vmatprep.subr.mxu0 0.0
    %945 = vmatpush2.msra.mxu0 0.0
    %946 = vmatprep.subr.mxu0 0.0
    %947 = vmatpush2.msra.mxu0 0.0
    %948 = vmatprep.subr.mxu0 0.0
    %949 = vmatpush2.msra.mxu0 0.0
    %950 = vmatprep.subr.mxu0 0.0
    %951 = vmatpush2.msra.mxu0 0.0
    %952 = vmatprep.subr.mxu0 0.0
    %953 = vmatpush2.msra.mxu0 0.0
    %954 = vmatprep.subr.mxu0 0.0
    %955 = vmatpush2.msra.mxu0 0.0
    %956 = vmatprep.subr.mxu0 0.0
    %957 = vmatpush2.msra.mxu0 0.0
    %958 = vmatprep.mubr.f32.mxu0 0.0
    %959 = vmatmul.mubr.f32.gmra.mxu0 %v679
    %v960 = vpop.f32.mrf.mxu0
    %v961 = vadd.f32 %v674, %v960
    %v962 = vpop.f32.mrf.mxu0
    %v963 = vadd.f32 %v676, %v962
    %964 = vdwg.mxu0
    %v965 = vld [vmem:[#allocation13] sm:$0xff]
    %v967 = vlaneseq
    %v968 = vshrl.u32 %v967, 7
    %v969 = vsub.s32 0, %v968
    %v970 = vrot.slane %v965, %v969
    %v971 = vlaneseq
    %v972 = vshrl.u32 %v971, 7
    %v973 = vsub.s32 1, %v972
    %v974 = vrot.slane %v965, %v973
    %v975 = vlaneseq
    %v976 = vshrl.u32 %v975, 7
    %v977 = vsub.s32 2, %v976
    %v978 = vrot.slane %v965, %v977
    %v979 = vlaneseq
    %v980 = vshrl.u32 %v979, 7
    %v981 = vsub.s32 3, %v980
    %v982 = vrot.slane %v965, %v981
    %v983 = vlaneseq
    %v984 = vshrl.u32 %v983, 7
    %v985 = vsub.s32 4, %v984
    %v986 = vrot.slane %v965, %v985
    %v987 = vlaneseq
    %v988 = vshrl.u32 %v987, 7
    %v989 = vsub.s32 5, %v988
    %v990 = vrot.slane %v965, %v989
    %v991 = vlaneseq
    %v992 = vshrl.u32 %v991, 7
    %v993 = vsub.s32 6, %v992
    %v994 = vrot.slane %v965, %v993
    %v995 = vlaneseq
    %v996 = vshrl.u32 %v995, 7
    %v997 = vsub.s32 7, %v996
    %v998 = vrot.slane %v965, %v997
    %v1007 = vadd.f32 %v748, %v970
    %v1008 = vadd.f32 %v750, %v974
    %v1009 = vadd.f32 %v819, %v978
    %v1010 = vadd.f32 %v821, %v982
    %v1011 = vadd.f32 %v890, %v986
    %v1012 = vadd.f32 %v892, %v990
    %v1013 = vadd.f32 %v961, %v994
    %v1014 = vadd.f32 %v963, %v998
    %v1015 = vmul.f32 %v1007, 0.5
    %v1016 = vmul.f32 %v1008, 0.5
    %v1017 = vmul.f32 %v1009, 0.5
    %v1018 = vmul.f32 %v1010, 0.5
    %v1019 = vmul.f32 %v1011, 0.5
    %v1020 = vmul.f32 %v1012, 0.5
    %v1021 = vmul.f32 %v1013, 0.5
    %v1022 = vmul.f32 %v1014, 0.5
    %v1023 = vmul.f32 %v1007, 0.70710677
    %v1024 = vmul.f32 %v1008, 0.70710677
    %v1025 = vmul.f32 %v1009, 0.70710677
    %v1026 = vmul.f32 %v1010, 0.70710677
    %v1027 = vmul.f32 %v1011, 0.70710677
    %v1028 = vmul.f32 %v1012, 0.70710677
    %v1029 = vmul.f32 %v1013, 0.70710677
    %v1030 = vmul.f32 %v1014, 0.70710677
    %v1031 = vand.u32 2147483647, %v1023
    %v1032 = vand.u32 2147483647, %v1024
    %v1033 = vand.u32 2147483647, %v1025
    %v1034 = vand.u32 2147483647, %v1026
    %v1035 = vand.u32 2147483647, %v1027
    %v1036 = vand.u32 2147483647, %v1028
    %v1037 = vand.u32 2147483647, %v1029
    %v1038 = vand.u32 2147483647, %v1030
    %v1039 = vmul.f32 %v1031, 0.3275911
    %v1040 = vmul.f32 %v1032, 0.3275911
    %v1041 = vmul.f32 %v1033, 0.3275911
    %v1042 = vmul.f32 %v1034, 0.3275911
    %v1043 = vmul.f32 %v1035, 0.3275911
    %v1044 = vmul.f32 %v1036, 0.3275911
    %v1045 = vmul.f32 %v1037, 0.3275911
    %v1046 = vmul.f32 %v1038, 0.3275911
    %v1047 = vadd.f32 %v1039, 1.0
    %v1048 = vadd.f32 %v1040, 1.0
    %v1049 = vadd.f32 %v1041, 1.0
    %v1050 = vadd.f32 %v1042, 1.0
    %v1051 = vadd.f32 %v1043, 1.0
    %v1052 = vadd.f32 %v1044, 1.0
    %v1053 = vadd.f32 %v1045, 1.0
    %v1054 = vadd.f32 %v1046, 1.0
    %v1055 = vrcp.pop %v1047
    %v1056 = vmul.f32 1.0, %v1055
    %v1057 = vrcp.pop %v1048
    %v1058 = vmul.f32 1.0, %v1057
    %v1059 = vrcp.pop %v1049
    %v1060 = vmul.f32 1.0, %v1059
    %v1061 = vrcp.pop %v1050
    %v1062 = vmul.f32 1.0, %v1061
    %v1063 = vrcp.pop %v1051
    %v1064 = vmul.f32 1.0, %v1063
    %v1065 = vrcp.pop %v1052
    %v1066 = vmul.f32 1.0, %v1065
    %v1067 = vrcp.pop %v1053
    %v1068 = vmul.f32 1.0, %v1067
    %v1069 = vrcp.pop %v1054
    %v1070 = vmul.f32 1.0, %v1069
    %v1071 = vmul.f32 %v1056, 1.0614054
    %v1072 = vmul.f32 %v1058, 1.0614054
    %v1073 = vmul.f32 %v1060, 1.0614054
    %v1074 = vmul.f32 %v1062, 1.0614054
    %v1075 = vmul.f32 %v1064, 1.0614054
    %v1076 = vmul.f32 %v1066, 1.0614054
    %v1077 = vmul.f32 %v1068, 1.0614054
    %v1078 = vmul.f32 %v1070, 1.0614054
    %v1079 = vadd.f32 %v1071, -1.4531521
    %v1080 = vadd.f32 %v1072, -1.4531521
    %v1081 = vadd.f32 %v1073, -1.4531521
    %v1082 = vadd.f32 %v1074, -1.4531521
    %v1083 = vadd.f32 %v1075, -1.4531521
    %v1084 = vadd.f32 %v1076, -1.4531521
    %v1085 = vadd.f32 %v1077, -1.4531521
    %v1086 = vadd.f32 %v1078, -1.4531521
    %v1087 = vmul.f32 %v1079, %v1056
    %v1088 = vmul.f32 %v1080, %v1058
    %v1089 = vmul.f32 %v1081, %v1060
    %v1090 = vmul.f32 %v1082, %v1062
    %v1091 = vmul.f32 %v1083, %v1064
    %v1092 = vmul.f32 %v1084, %v1066
    %v1093 = vmul.f32 %v1085, %v1068
    %v1094 = vmul.f32 %v1086, %v1070
    %v1095 = vadd.f32 %v1087, 1.4214138
    %v1096 = vadd.f32 %v1088, 1.4214138
    %v1097 = vadd.f32 %v1089, 1.4214138
    %v1098 = vadd.f32 %v1090, 1.4214138
    %v1099 = vadd.f32 %v1091, 1.4214138
    %v1100 = vadd.f32 %v1092, 1.4214138
    %v1101 = vadd.f32 %v1093, 1.4214138
    %v1102 = vadd.f32 %v1094, 1.4214138
    %v1103 = vmul.f32 %v1095, %v1056
    %v1104 = vmul.f32 %v1096, %v1058
    %v1105 = vmul.f32 %v1097, %v1060
    %v1106 = vmul.f32 %v1098, %v1062
    %v1107 = vmul.f32 %v1099, %v1064
    %v1108 = vmul.f32 %v1100, %v1066
    %v1109 = vmul.f32 %v1101, %v1068
    %v1110 = vmul.f32 %v1102, %v1070
    %v1111 = vadd.f32 %v1103, -0.28449672
    %v1112 = vadd.f32 %v1104, -0.28449672
    %v1113 = vadd.f32 %v1105, -0.28449672
    %v1114 = vadd.f32 %v1106, -0.28449672
    %v1115 = vadd.f32 %v1107, -0.28449672
    %v1116 = vadd.f32 %v1108, -0.28449672
    %v1117 = vadd.f32 %v1109, -0.28449672
    %v1118 = vadd.f32 %v1110, -0.28449672
    %v1119 = vmul.f32 %v1111, %v1056
    %v1120 = vmul.f32 %v1112, %v1058
    %v1121 = vmul.f32 %v1113, %v1060
    %v1122 = vmul.f32 %v1114, %v1062
    %v1123 = vmul.f32 %v1115, %v1064
    %v1124 = vmul.f32 %v1116, %v1066
    %v1125 = vmul.f32 %v1117, %v1068
    %v1126 = vmul.f32 %v1118, %v1070
    %v1127 = vadd.f32 %v1119, 0.2548296
    %v1128 = vadd.f32 %v1120, 0.2548296
    %v1129 = vadd.f32 %v1121, 0.2548296
    %v1130 = vadd.f32 %v1122, 0.2548296
    %v1131 = vadd.f32 %v1123, 0.2548296
    %v1132 = vadd.f32 %v1124, 0.2548296
    %v1133 = vadd.f32 %v1125, 0.2548296
    %v1134 = vadd.f32 %v1126, 0.2548296
    %v1135 = vmul.f32 %v1127, %v1056
    %v1136 = vmul.f32 %v1128, %v1058
    %v1137 = vmul.f32 %v1129, %v1060
    %v1138 = vmul.f32 %v1130, %v1062
    %v1139 = vmul.f32 %v1131, %v1064
    %v1140 = vmul.f32 %v1132, %v1066
    %v1141 = vmul.f32 %v1133, %v1068
    %v1142 = vmul.f32 %v1134, %v1070
    %v1143 = vsub.f32 0.0, %v1031
    %v1144 = vsub.f32 0.0, %v1032
    %v1145 = vsub.f32 0.0, %v1033
    %v1146 = vsub.f32 0.0, %v1034
    %v1147 = vsub.f32 0.0, %v1035
    %v1148 = vsub.f32 0.0, %v1036
    %v1149 = vsub.f32 0.0, %v1037
    %v1150 = vsub.f32 0.0, %v1038
    %v1151 = vmul.f32 %v1143, %v1031
    %v1152 = vmul.f32 %v1144, %v1032
    %v1153 = vmul.f32 %v1145, %v1033
    %v1154 = vmul.f32 %v1146, %v1034
    %v1155 = vmul.f32 %v1147, %v1035
    %v1156 = vmul.f32 %v1148, %v1036
    %v1157 = vmul.f32 %v1149, %v1037
    %v1158 = vmul.f32 %v1150, %v1038
    %v1159 = vmul.f32 %v1151, 1.442695
    %v1160 = vpow.pop %v1159
    %v1161 = vmul.f32 %v1152, 1.442695
    %v1162 = vpow.pop %v1161
    %v1163 = vmul.f32 %v1153, 1.442695
    %v1164 = vpow.pop %v1163
    %v1165 = vmul.f32 %v1154, 1.442695
    %v1166 = vpow.pop %v1165
    %v1167 = vmul.f32 %v1155, 1.442695
    %v1168 = vpow.pop %v1167
    %v1169 = vmul.f32 %v1156, 1.442695
    %v1170 = vpow.pop %v1169
    %v1171 = vmul.f32 %v1157, 1.442695
    %v1172 = vpow.pop %v1171
    %v1173 = vmul.f32 %v1158, 1.442695
    %v1174 = vpow.pop %v1173
    %v1175 = vmul.f32 %v1135, %v1160
    %v1176 = vmul.f32 %v1136, %v1162
    %v1177 = vmul.f32 %v1137, %v1164
    %v1178 = vmul.f32 %v1138, %v1166
    %v1179 = vmul.f32 %v1139, %v1168
    %v1180 = vmul.f32 %v1140, %v1170
    %v1181 = vmul.f32 %v1141, %v1172
    %v1182 = vmul.f32 %v1142, %v1174
    %v1183 = vsub.f32 1.0, %v1175
    %v1184 = vsub.f32 1.0, %v1176
    %v1185 = vsub.f32 1.0, %v1177
    %v1186 = vsub.f32 1.0, %v1178
    %v1187 = vsub.f32 1.0, %v1179
    %v1188 = vsub.f32 1.0, %v1180
    %v1189 = vsub.f32 1.0, %v1181
    %v1190 = vsub.f32 1.0, %v1182
    %vm1191 = vcmp.lt.f32.partialorder %v1023, 0.0
    %vm1192 = vcmp.lt.f32.partialorder %v1024, 0.0
    %vm1193 = vcmp.lt.f32.partialorder %v1025, 0.0
    %vm1194 = vcmp.lt.f32.partialorder %v1026, 0.0
    %vm1195 = vcmp.lt.f32.partialorder %v1027, 0.0
    %vm1196 = vcmp.lt.f32.partialorder %v1028, 0.0
    %vm1197 = vcmp.lt.f32.partialorder %v1029, 0.0
    %vm1198 = vcmp.lt.f32.partialorder %v1030, 0.0
    %v1199 = vsub.f32 0.0, %v1183
    %v1200 = vsub.f32 0.0, %v1184
    %v1201 = vsub.f32 0.0, %v1185
    %v1202 = vsub.f32 0.0, %v1186
    %v1203 = vsub.f32 0.0, %v1187
    %v1204 = vsub.f32 0.0, %v1188
    %v1205 = vsub.f32 0.0, %v1189
    %v1206 = vsub.f32 0.0, %v1190
    %v1207 = vsel %vm1191, %v1199, %v1183
    %v1208 = vsel %vm1192, %v1200, %v1184
    %v1209 = vsel %vm1193, %v1201, %v1185
    %v1210 = vsel %vm1194, %v1202, %v1186
    %v1211 = vsel %vm1195, %v1203, %v1187
    %v1212 = vsel %vm1196, %v1204, %v1188
    %v1213 = vsel %vm1197, %v1205, %v1189
    %v1214 = vsel %vm1198, %v1206, %v1190
    %v1215 = vadd.f32 %v1207, 1.0
    %v1216 = vadd.f32 %v1208, 1.0
    %v1217 = vadd.f32 %v1209, 1.0
    %v1218 = vadd.f32 %v1210, 1.0
    %v1219 = vadd.f32 %v1211, 1.0
    %v1220 = vadd.f32 %v1212, 1.0
    %v1221 = vadd.f32 %v1213, 1.0
    %v1222 = vadd.f32 %v1214, 1.0
    %v1223 = vmul.f32 %v1015, %v1215
    %v1224 = vmul.f32 %v1016, %v1216
    %v1225 = vmul.f32 %v1017, %v1217
    %v1226 = vmul.f32 %v1018, %v1218
    %v1227 = vmul.f32 %v1019, %v1219
    %v1228 = vmul.f32 %v1020, %v1220
    %v1229 = vmul.f32 %v1021, %v1221
    %v1230 = vmul.f32 %v1022, %v1222
    %v1231 = vld [vmem:[#allocation14] sm:$0xff]
    %v1232 = vld [vmem:[#allocation14 + $0x8] sm:$0xff]
    %v1233 = vld [vmem:[#allocation14 + $0x10] sm:$0xff]
    %v1234 = vld [vmem:[#allocation14 + $0x18] sm:$0xff]
    %v1235 = vld [vmem:[#allocation14 + $0x20] sm:$0xff]
    %v1236 = vld [vmem:[#allocation14 + $0x28] sm:$0xff]
    %v1237 = vld [vmem:[#allocation14 + $0x30] sm:$0xff]
    %v1238 = vld [vmem:[#allocation14 + $0x38] sm:$0xff]
    %v1239 = vld [vmem:[#allocation14 + $0x40] sm:$0xff]
    %v1240 = vld [vmem:[#allocation14 + $0x48] sm:$0xff]
    %v1241 = vld [vmem:[#allocation14 + $0x50] sm:$0xff]
    %v1242 = vld [vmem:[#allocation14 + $0x58] sm:$0xff]
    %v1243 = vld [vmem:[#allocation14 + $0x60] sm:$0xff]
    %v1244 = vld [vmem:[#allocation14 + $0x68] sm:$0xff]
    %v1245 = vld [vmem:[#allocation14 + $0x70] sm:$0xff]
    %v1246 = vld [vmem:[#allocation14 + $0x78] sm:$0xff]
    %v1247 = vld [vmem:[#allocation14 + $0x80] sm:$0xff]
    %v1248 = vld [vmem:[#allocation14 + $0x88] sm:$0xff]
    %v1249 = vld [vmem:[#allocation14 + $0x90] sm:$0xff]
    %v1250 = vld [vmem:[#allocation14 + $0x98] sm:$0xff]
    %v1251 = vld [vmem:[#allocation14 + $0xa0] sm:$0xff]
    %v1252 = vld [vmem:[#allocation14 + $0xa8] sm:$0xff]
    %v1253 = vld [vmem:[#allocation14 + $0xb0] sm:$0xff]
    %v1254 = vld [vmem:[#allocation14 + $0xb8] sm:$0xff]
    %v1255 = vld [vmem:[#allocation14 + $0xc0] sm:$0xff]
    %v1256 = vld [vmem:[#allocation14 + $0xc8] sm:$0xff]
    %v1257 = vld [vmem:[#allocation14 + $0xd0] sm:$0xff]
    %v1258 = vld [vmem:[#allocation14 + $0xd8] sm:$0xff]
    %v1259 = vld [vmem:[#allocation14 + $0xe0] sm:$0xff]
    %v1260 = vld [vmem:[#allocation14 + $0xe8] sm:$0xff]
    %v1261 = vld [vmem:[#allocation14 + $0xf0] sm:$0xff]
    %v1262 = vld [vmem:[#allocation14 + $0xf8] sm:$0xff]
    %v1263 = vld [vmem:[#allocation14 + $0x100] sm:$0xff]
    %v1264 = vld [vmem:[#allocation14 + $0x108] sm:$0xff]
    %v1265 = vld [vmem:[#allocation14 + $0x110] sm:$0xff]
    %v1266 = vld [vmem:[#allocation14 + $0x118] sm:$0xff]
    %v1267 = vld [vmem:[#allocation14 + $0x120] sm:$0xff]
    %v1268 = vld [vmem:[#allocation14 + $0x128] sm:$0xff]
    %v1269 = vld [vmem:[#allocation14 + $0x130] sm:$0xff]
    %v1270 = vld [vmem:[#allocation14 + $0x138] sm:$0xff]
    %v1271 = vld [vmem:[#allocation14 + $0x140] sm:$0xff]
    %v1272 = vld [vmem:[#allocation14 + $0x148] sm:$0xff]
    %v1273 = vld [vmem:[#allocation14 + $0x150] sm:$0xff]
    %v1274 = vld [vmem:[#allocation14 + $0x158] sm:$0xff]
    %v1275 = vld [vmem:[#allocation14 + $0x160] sm:$0xff]
    %v1276 = vld [vmem:[#allocation14 + $0x168] sm:$0xff]
    %v1277 = vld [vmem:[#allocation14 + $0x170] sm:$0xff]
    %v1278 = vld [vmem:[#allocation14 + $0x178] sm:$0xff]
    %v1279 = vld [vmem:[#allocation14 + $0x180] sm:$0xff]
    %v1280 = vld [vmem:[#allocation14 + $0x188] sm:$0xff]
    %v1281 = vld [vmem:[#allocation14 + $0x190] sm:$0xff]
    %v1282 = vld [vmem:[#allocation14 + $0x198] sm:$0xff]
    %v1283 = vld [vmem:[#allocation14 + $0x1a0] sm:$0xff]
    %v1284 = vld [vmem:[#allocation14 + $0x1a8] sm:$0xff]
    %v1285 = vld [vmem:[#allocation14 + $0x1b0] sm:$0xff]
    %v1286 = vld [vmem:[#allocation14 + $0x1b8] sm:$0xff]
    %v1287 = vld [vmem:[#allocation14 + $0x1c0] sm:$0xff]
    %v1288 = vld [vmem:[#allocation14 + $0x1c8] sm:$0xff]
    %v1289 = vld [vmem:[#allocation14 + $0x1d0] sm:$0xff]
    %v1290 = vld [vmem:[#allocation14 + $0x1d8] sm:$0xff]
    %v1291 = vld [vmem:[#allocation14 + $0x1e0] sm:$0xff]
    %v1292 = vld [vmem:[#allocation14 + $0x1e8] sm:$0xff]
    %v1293 = vld [vmem:[#allocation14 + $0x1f0] sm:$0xff]
    %v1294 = vld [vmem:[#allocation14 + $0x1f8] sm:$0xff]
    %v1295 = vld [vmem:[#allocation14 + $0x200] sm:$0xff]
    %v1296 = vld [vmem:[#allocation14 + $0x208] sm:$0xff]
    %v1297 = vld [vmem:[#allocation14 + $0x210] sm:$0xff]
    %v1298 = vld [vmem:[#allocation14 + $0x218] sm:$0xff]
    %v1299 = vld [vmem:[#allocation14 + $0x220] sm:$0xff]
    %v1300 = vld [vmem:[#allocation14 + $0x228] sm:$0xff]
    %v1301 = vld [vmem:[#allocation14 + $0x230] sm:$0xff]
    %v1302 = vld [vmem:[#allocation14 + $0x238] sm:$0xff]
    %v1303 = vld [vmem:[#allocation14 + $0x240] sm:$0xff]
    %v1304 = vld [vmem:[#allocation14 + $0x248] sm:$0xff]
    %v1305 = vld [vmem:[#allocation14 + $0x250] sm:$0xff]
    %v1306 = vld [vmem:[#allocation14 + $0x258] sm:$0xff]
    %v1307 = vld [vmem:[#allocation14 + $0x260] sm:$0xff]
    %v1308 = vld [vmem:[#allocation14 + $0x268] sm:$0xff]
    %v1309 = vld [vmem:[#allocation14 + $0x270] sm:$0xff]
    %v1310 = vld [vmem:[#allocation14 + $0x278] sm:$0xff]
    %v1311 = vld [vmem:[#allocation14 + $0x280] sm:$0xff]
    %v1312 = vld [vmem:[#allocation14 + $0x288] sm:$0xff]
    %v1313 = vld [vmem:[#allocation14 + $0x290] sm:$0xff]
    %v1314 = vld [vmem:[#allocation14 + $0x298] sm:$0xff]
    %v1315 = vld [vmem:[#allocation14 + $0x2a0] sm:$0xff]
    %v1316 = vld [vmem:[#allocation14 + $0x2a8] sm:$0xff]
    %v1317 = vld [vmem:[#allocation14 + $0x2b0] sm:$0xff]
    %v1318 = vld [vmem:[#allocation14 + $0x2b8] sm:$0xff]
    %v1319 = vld [vmem:[#allocation14 + $0x2c0] sm:$0xff]
    %v1320 = vld [vmem:[#allocation14 + $0x2c8] sm:$0xff]
    %v1321 = vld [vmem:[#allocation14 + $0x2d0] sm:$0xff]
    %v1322 = vld [vmem:[#allocation14 + $0x2d8] sm:$0xff]
    %v1323 = vld [vmem:[#allocation14 + $0x2e0] sm:$0xff]
    %v1324 = vld [vmem:[#allocation14 + $0x2e8] sm:$0xff]
    %v1325 = vld [vmem:[#allocation14 + $0x2f0] sm:$0xff]
    %v1326 = vld [vmem:[#allocation14 + $0x2f8] sm:$0xff]
    %v1327 = vld [vmem:[#allocation14 + $0x300] sm:$0xff]
    %v1328 = vld [vmem:[#allocation14 + $0x308] sm:$0xff]
    %v1329 = vld [vmem:[#allocation14 + $0x310] sm:$0xff]
    %v1330 = vld [vmem:[#allocation14 + $0x318] sm:$0xff]
    %v1331 = vld [vmem:[#allocation14 + $0x320] sm:$0xff]
    %v1332 = vld [vmem:[#allocation14 + $0x328] sm:$0xff]
    %v1333 = vld [vmem:[#allocation14 + $0x330] sm:$0xff]
    %v1334 = vld [vmem:[#allocation14 + $0x338] sm:$0xff]
    %v1335 = vld [vmem:[#allocation14 + $0x340] sm:$0xff]
    %v1336 = vld [vmem:[#allocation14 + $0x348] sm:$0xff]
    %v1337 = vld [vmem:[#allocation14 + $0x350] sm:$0xff]
    %v1338 = vld [vmem:[#allocation14 + $0x358] sm:$0xff]
    %v1339 = vld [vmem:[#allocation14 + $0x360] sm:$0xff]
    %v1340 = vld [vmem:[#allocation14 + $0x368] sm:$0xff]
    %v1341 = vld [vmem:[#allocation14 + $0x370] sm:$0xff]
    %v1342 = vld [vmem:[#allocation14 + $0x378] sm:$0xff]
    %v1343 = vld [vmem:[#allocation14 + $0x380] sm:$0xff]
    %v1344 = vld [vmem:[#allocation14 + $0x388] sm:$0xff]
    %v1345 = vld [vmem:[#allocation14 + $0x390] sm:$0xff]
    %v1346 = vld [vmem:[#allocation14 + $0x398] sm:$0xff]
    %v1347 = vld [vmem:[#allocation14 + $0x3a0] sm:$0xff]
    %v1348 = vld [vmem:[#allocation14 + $0x3a8] sm:$0xff]
    %v1349 = vld [vmem:[#allocation14 + $0x3b0] sm:$0xff]
    %v1350 = vld [vmem:[#allocation14 + $0x3b8] sm:$0xff]
    %v1351 = vld [vmem:[#allocation14 + $0x3c0] sm:$0xff]
    %v1352 = vld [vmem:[#allocation14 + $0x3c8] sm:$0xff]
    %v1353 = vld [vmem:[#allocation14 + $0x3d0] sm:$0xff]
    %v1354 = vld [vmem:[#allocation14 + $0x3d8] sm:$0xff]
    %v1355 = vld [vmem:[#allocation14 + $0x3e0] sm:$0xff]
    %v1356 = vld [vmem:[#allocation14 + $0x3e8] sm:$0xff]
    %v1357 = vld [vmem:[#allocation14 + $0x3f0] sm:$0xff]
    %v1358 = vld [vmem:[#allocation14 + $0x3f8] sm:$0xff]
    %v1359 = vld [vmem:[#allocation14 + $0x400] sm:$0xff]
    %v1360 = vld [vmem:[#allocation14 + $0x408] sm:$0xff]
    %v1361 = vld [vmem:[#allocation14 + $0x410] sm:$0xff]
    %v1362 = vld [vmem:[#allocation14 + $0x418] sm:$0xff]
    %v1363 = vld [vmem:[#allocation14 + $0x420] sm:$0xff]
    %v1364 = vld [vmem:[#allocation14 + $0x428] sm:$0xff]
    %v1365 = vld [vmem:[#allocation14 + $0x430] sm:$0xff]
    %v1366 = vld [vmem:[#allocation14 + $0x438] sm:$0xff]
    %v1367 = vld [vmem:[#allocation14 + $0x440] sm:$0xff]
    %v1368 = vld [vmem:[#allocation14 + $0x448] sm:$0xff]
    %v1369 = vld [vmem:[#allocation14 + $0x450] sm:$0xff]
    %v1370 = vld [vmem:[#allocation14 + $0x458] sm:$0xff]
    %v1371 = vld [vmem:[#allocation14 + $0x460] sm:$0xff]
    %v1372 = vld [vmem:[#allocation14 + $0x468] sm:$0xff]
    %v1373 = vld [vmem:[#allocation14 + $0x470] sm:$0xff]
    %v1374 = vld [vmem:[#allocation14 + $0x478] sm:$0xff]
    %v1375 = vld [vmem:[#allocation14 + $0x480] sm:$0xff]
    %v1376 = vld [vmem:[#allocation14 + $0x488] sm:$0xff]
    %v1377 = vld [vmem:[#allocation14 + $0x490] sm:$0xff]
    %v1378 = vld [vmem:[#allocation14 + $0x498] sm:$0xff]
    %v1379 = vld [vmem:[#allocation14 + $0x4a0] sm:$0xff]
    %v1380 = vld [vmem:[#allocation14 + $0x4a8] sm:$0xff]
    %v1381 = vld [vmem:[#allocation14 + $0x4b0] sm:$0xff]
    %v1382 = vld [vmem:[#allocation14 + $0x4b8] sm:$0xff]
    %v1383 = vld [vmem:[#allocation14 + $0x4c0] sm:$0xff]
    %v1384 = vld [vmem:[#allocation14 + $0x4c8] sm:$0xff]
    %v1385 = vld [vmem:[#allocation14 + $0x4d0] sm:$0xff]
    %v1386 = vld [vmem:[#allocation14 + $0x4d8] sm:$0xff]
    %v1387 = vld [vmem:[#allocation14 + $0x4e0] sm:$0xff]
    %v1388 = vld [vmem:[#allocation14 + $0x4e8] sm:$0xff]
    %v1389 = vld [vmem:[#allocation14 + $0x4f0] sm:$0xff]
    %v1390 = vld [vmem:[#allocation14 + $0x4f8] sm:$0xff]
    %v1391 = vld [vmem:[#allocation14 + $0x500] sm:$0xff]
    %v1392 = vld [vmem:[#allocation14 + $0x508] sm:$0xff]
    %v1393 = vld [vmem:[#allocation14 + $0x510] sm:$0xff]
    %v1394 = vld [vmem:[#allocation14 + $0x518] sm:$0xff]
    %v1395 = vld [vmem:[#allocation14 + $0x520] sm:$0xff]
    %v1396 = vld [vmem:[#allocation14 + $0x528] sm:$0xff]
    %v1397 = vld [vmem:[#allocation14 + $0x530] sm:$0xff]
    %v1398 = vld [vmem:[#allocation14 + $0x538] sm:$0xff]
    %v1399 = vld [vmem:[#allocation14 + $0x540] sm:$0xff]
    %v1400 = vld [vmem:[#allocation14 + $0x548] sm:$0xff]
    %v1401 = vld [vmem:[#allocation14 + $0x550] sm:$0xff]
    %v1402 = vld [vmem:[#allocation14 + $0x558] sm:$0xff]
    %v1403 = vld [vmem:[#allocation14 + $0x560] sm:$0xff]
    %v1404 = vld [vmem:[#allocation14 + $0x568] sm:$0xff]
    %v1405 = vld [vmem:[#allocation14 + $0x570] sm:$0xff]
    %v1406 = vld [vmem:[#allocation14 + $0x578] sm:$0xff]
    %v1407 = vld [vmem:[#allocation14 + $0x580] sm:$0xff]
    %v1408 = vld [vmem:[#allocation14 + $0x588] sm:$0xff]
    %v1409 = vld [vmem:[#allocation14 + $0x590] sm:$0xff]
    %v1410 = vld [vmem:[#allocation14 + $0x598] sm:$0xff]
    %v1411 = vld [vmem:[#allocation14 + $0x5a0] sm:$0xff]
    %v1412 = vld [vmem:[#allocation14 + $0x5a8] sm:$0xff]
    %v1413 = vld [vmem:[#allocation14 + $0x5b0] sm:$0xff]
    %v1414 = vld [vmem:[#allocation14 + $0x5b8] sm:$0xff]
    %v1415 = vld [vmem:[#allocation14 + $0x5c0] sm:$0xff]
    %v1416 = vld [vmem:[#allocation14 + $0x5c8] sm:$0xff]
    %v1417 = vld [vmem:[#allocation14 + $0x5d0] sm:$0xff]
    %v1418 = vld [vmem:[#allocation14 + $0x5d8] sm:$0xff]
    %v1419 = vld [vmem:[#allocation14 + $0x5e0] sm:$0xff]
    %v1420 = vld [vmem:[#allocation14 + $0x5e8] sm:$0xff]
    %v1421 = vld [vmem:[#allocation14 + $0x5f0] sm:$0xff]
    %v1422 = vld [vmem:[#allocation14 + $0x5f8] sm:$0xff]
    %v1423 = vld [vmem:[#allocation14 + $0x600] sm:$0xff]
    %v1424 = vld [vmem:[#allocation14 + $0x608] sm:$0xff]
    %v1425 = vld [vmem:[#allocation14 + $0x610] sm:$0xff]
    %v1426 = vld [vmem:[#allocation14 + $0x618] sm:$0xff]
    %v1427 = vld [vmem:[#allocation14 + $0x620] sm:$0xff]
    %v1428 = vld [vmem:[#allocation14 + $0x628] sm:$0xff]
    %v1429 = vld [vmem:[#allocation14 + $0x630] sm:$0xff]
    %v1430 = vld [vmem:[#allocation14 + $0x638] sm:$0xff]
    %v1431 = vld [vmem:[#allocation14 + $0x640] sm:$0xff]
    %v1432 = vld [vmem:[#allocation14 + $0x648] sm:$0xff]
    %v1433 = vld [vmem:[#allocation14 + $0x650] sm:$0xff]
    %v1434 = vld [vmem:[#allocation14 + $0x658] sm:$0xff]
    %v1435 = vld [vmem:[#allocation14 + $0x660] sm:$0xff]
    %v1436 = vld [vmem:[#allocation14 + $0x668] sm:$0xff]
    %v1437 = vld [vmem:[#allocation14 + $0x670] sm:$0xff]
    %v1438 = vld [vmem:[#allocation14 + $0x678] sm:$0xff]
    %v1439 = vld [vmem:[#allocation14 + $0x680] sm:$0xff]
    %v1440 = vld [vmem:[#allocation14 + $0x688] sm:$0xff]
    %v1441 = vld [vmem:[#allocation14 + $0x690] sm:$0xff]
    %v1442 = vld [vmem:[#allocation14 + $0x698] sm:$0xff]
    %v1443 = vld [vmem:[#allocation14 + $0x6a0] sm:$0xff]
    %v1444 = vld [vmem:[#allocation14 + $0x6a8] sm:$0xff]
    %v1445 = vld [vmem:[#allocation14 + $0x6b0] sm:$0xff]
    %v1446 = vld [vmem:[#allocation14 + $0x6b8] sm:$0xff]
    %v1447 = vld [vmem:[#allocation14 + $0x6c0] sm:$0xff]
    %v1448 = vld [vmem:[#allocation14 + $0x6c8] sm:$0xff]
    %v1449 = vld [vmem:[#allocation14 + $0x6d0] sm:$0xff]
    %v1450 = vld [vmem:[#allocation14 + $0x6d8] sm:$0xff]
    %v1451 = vld [vmem:[#allocation14 + $0x6e0] sm:$0xff]
    %v1452 = vld [vmem:[#allocation14 + $0x6e8] sm:$0xff]
    %v1453 = vld [vmem:[#allocation14 + $0x6f0] sm:$0xff]
    %v1454 = vld [vmem:[#allocation14 + $0x6f8] sm:$0xff]
    %v1455 = vld [vmem:[#allocation14 + $0x700] sm:$0xff]
    %v1456 = vld [vmem:[#allocation14 + $0x708] sm:$0xff]
    %v1457 = vld [vmem:[#allocation14 + $0x710] sm:$0xff]
    %v1458 = vld [vmem:[#allocation14 + $0x718] sm:$0xff]
    %v1459 = vld [vmem:[#allocation14 + $0x720] sm:$0xff]
    %v1460 = vld [vmem:[#allocation14 + $0x728] sm:$0xff]
    %v1461 = vld [vmem:[#allocation14 + $0x730] sm:$0xff]
    %v1462 = vld [vmem:[#allocation14 + $0x738] sm:$0xff]
    %v1463 = vld [vmem:[#allocation14 + $0x740] sm:$0xff]
    %v1464 = vld [vmem:[#allocation14 + $0x748] sm:$0xff]
    %v1465 = vld [vmem:[#allocation14 + $0x750] sm:$0xff]
    %v1466 = vld [vmem:[#allocation14 + $0x758] sm:$0xff]
    %v1467 = vld [vmem:[#allocation14 + $0x760] sm:$0xff]
    %v1468 = vld [vmem:[#allocation14 + $0x768] sm:$0xff]
    %v1469 = vld [vmem:[#allocation14 + $0x770] sm:$0xff]
    %v1470 = vld [vmem:[#allocation14 + $0x778] sm:$0xff]
    %v1471 = vld [vmem:[#allocation14 + $0x780] sm:$0xff]
    %v1472 = vld [vmem:[#allocation14 + $0x788] sm:$0xff]
    %v1473 = vld [vmem:[#allocation14 + $0x790] sm:$0xff]
    %v1474 = vld [vmem:[#allocation14 + $0x798] sm:$0xff]
    %v1475 = vld [vmem:[#allocation14 + $0x7a0] sm:$0xff]
    %v1476 = vld [vmem:[#allocation14 + $0x7a8] sm:$0xff]
    %v1477 = vld [vmem:[#allocation14 + $0x7b0] sm:$0xff]
    %v1478 = vld [vmem:[#allocation14 + $0x7b8] sm:$0xff]
    %v1479 = vld [vmem:[#allocation14 + $0x7c0] sm:$0xff]
    %v1480 = vld [vmem:[#allocation14 + $0x7c8] sm:$0xff]
    %v1481 = vld [vmem:[#allocation14 + $0x7d0] sm:$0xff]
    %v1482 = vld [vmem:[#allocation14 + $0x7d8] sm:$0xff]
    %v1483 = vld [vmem:[#allocation14 + $0x7e0] sm:$0xff]
    %v1484 = vld [vmem:[#allocation14 + $0x7e8] sm:$0xff]
    %v1485 = vld [vmem:[#allocation14 + $0x7f0] sm:$0xff]
    %v1486 = vld [vmem:[#allocation14 + $0x7f8] sm:$0xff]
    %v1487 = vld [vmem:[#allocation14 + $0x800] sm:$0xff]
    %v1488 = vld [vmem:[#allocation14 + $0x808] sm:$0xff]
    %v1489 = vld [vmem:[#allocation14 + $0x810] sm:$0xff]
    %v1490 = vld [vmem:[#allocation14 + $0x818] sm:$0xff]
    %v1491 = vld [vmem:[#allocation14 + $0x820] sm:$0xff]
    %v1492 = vld [vmem:[#allocation14 + $0x828] sm:$0xff]
    %v1493 = vld [vmem:[#allocation14 + $0x830] sm:$0xff]
    %v1494 = vld [vmem:[#allocation14 + $0x838] sm:$0xff]
    %v1495 = vld [vmem:[#allocation14 + $0x840] sm:$0xff]
    %v1496 = vld [vmem:[#allocation14 + $0x848] sm:$0xff]
    %v1497 = vld [vmem:[#allocation14 + $0x850] sm:$0xff]
    %v1498 = vld [vmem:[#allocation14 + $0x858] sm:$0xff]
    %v1499 = vld [vmem:[#allocation14 + $0x860] sm:$0xff]
    %v1500 = vld [vmem:[#allocation14 + $0x868] sm:$0xff]
    %v1501 = vld [vmem:[#allocation14 + $0x870] sm:$0xff]
    %v1502 = vld [vmem:[#allocation14 + $0x878] sm:$0xff]
    %v1503 = vld [vmem:[#allocation14 + $0x880] sm:$0xff]
    %v1504 = vld [vmem:[#allocation14 + $0x888] sm:$0xff]
    %v1505 = vld [vmem:[#allocation14 + $0x890] sm:$0xff]
    %v1506 = vld [vmem:[#allocation14 + $0x898] sm:$0xff]
    %v1507 = vld [vmem:[#allocation14 + $0x8a0] sm:$0xff]
    %v1508 = vld [vmem:[#allocation14 + $0x8a8] sm:$0xff]
    %v1509 = vld [vmem:[#allocation14 + $0x8b0] sm:$0xff]
    %v1510 = vld [vmem:[#allocation14 + $0x8b8] sm:$0xff]
    %v1511 = vld [vmem:[#allocation14 + $0x8c0] sm:$0xff]
    %v1512 = vld [vmem:[#allocation14 + $0x8c8] sm:$0xff]
    %v1513 = vld [vmem:[#allocation14 + $0x8d0] sm:$0xff]
    %v1514 = vld [vmem:[#allocation14 + $0x8d8] sm:$0xff]
    %v1515 = vld [vmem:[#allocation14 + $0x8e0] sm:$0xff]
    %v1516 = vld [vmem:[#allocation14 + $0x8e8] sm:$0xff]
    %v1517 = vld [vmem:[#allocation14 + $0x8f0] sm:$0xff]
    %v1518 = vld [vmem:[#allocation14 + $0x8f8] sm:$0xff]
    %v1519 = vld [vmem:[#allocation14 + $0x900] sm:$0xff]
    %v1520 = vld [vmem:[#allocation14 + $0x908] sm:$0xff]
    %v1521 = vld [vmem:[#allocation14 + $0x910] sm:$0xff]
    %v1522 = vld [vmem:[#allocation14 + $0x918] sm:$0xff]
    %v1523 = vld [vmem:[#allocation14 + $0x920] sm:$0xff]
    %v1524 = vld [vmem:[#allocation14 + $0x928] sm:$0xff]
    %v1525 = vld [vmem:[#allocation14 + $0x930] sm:$0xff]
    %v1526 = vld [vmem:[#allocation14 + $0x938] sm:$0xff]
    %v1527 = vld [vmem:[#allocation14 + $0x940] sm:$0xff]
    %v1528 = vld [vmem:[#allocation14 + $0x948] sm:$0xff]
    %v1529 = vld [vmem:[#allocation14 + $0x950] sm:$0xff]
    %v1530 = vld [vmem:[#allocation14 + $0x958] sm:$0xff]
    %v1531 = vld [vmem:[#allocation14 + $0x960] sm:$0xff]
    %v1532 = vld [vmem:[#allocation14 + $0x968] sm:$0xff]
    %v1533 = vld [vmem:[#allocation14 + $0x970] sm:$0xff]
    %v1534 = vld [vmem:[#allocation14 + $0x978] sm:$0xff]
    %v1535 = vld [vmem:[#allocation14 + $0x980] sm:$0xff]
    %v1536 = vld [vmem:[#allocation14 + $0x988] sm:$0xff]
    %v1537 = vld [vmem:[#allocation14 + $0x990] sm:$0xff]
    %v1538 = vld [vmem:[#allocation14 + $0x998] sm:$0xff]
    %v1539 = vld [vmem:[#allocation14 + $0x9a0] sm:$0xff]
    %v1540 = vld [vmem:[#allocation14 + $0x9a8] sm:$0xff]
    %v1541 = vld [vmem:[#allocation14 + $0x9b0] sm:$0xff]
    %v1542 = vld [vmem:[#allocation14 + $0x9b8] sm:$0xff]
    %v1543 = vld [vmem:[#allocation14 + $0x9c0] sm:$0xff]
    %v1544 = vld [vmem:[#allocation14 + $0x9c8] sm:$0xff]
    %v1545 = vld [vmem:[#allocation14 + $0x9d0] sm:$0xff]
    %v1546 = vld [vmem:[#allocation14 + $0x9d8] sm:$0xff]
    %v1547 = vld [vmem:[#allocation14 + $0x9e0] sm:$0xff]
    %v1548 = vld [vmem:[#allocation14 + $0x9e8] sm:$0xff]
    %v1549 = vld [vmem:[#allocation14 + $0x9f0] sm:$0xff]
    %v1550 = vld [vmem:[#allocation14 + $0x9f8] sm:$0xff]
    %v1551 = vld [vmem:[#allocation14 + $0xa00] sm:$0xff]
    %v1552 = vld [vmem:[#allocation14 + $0xa08] sm:$0xff]
    %v1553 = vld [vmem:[#allocation14 + $0xa10] sm:$0xff]
    %v1554 = vld [vmem:[#allocation14 + $0xa18] sm:$0xff]
    %v1555 = vld [vmem:[#allocation14 + $0xa20] sm:$0xff]
    %v1556 = vld [vmem:[#allocation14 + $0xa28] sm:$0xff]
    %v1557 = vld [vmem:[#allocation14 + $0xa30] sm:$0xff]
    %v1558 = vld [vmem:[#allocation14 + $0xa38] sm:$0xff]
    %v1559 = vld [vmem:[#allocation14 + $0xa40] sm:$0xff]
    %v1560 = vld [vmem:[#allocation14 + $0xa48] sm:$0xff]
    %v1561 = vld [vmem:[#allocation14 + $0xa50] sm:$0xff]
    %v1562 = vld [vmem:[#allocation14 + $0xa58] sm:$0xff]
    %v1563 = vld [vmem:[#allocation14 + $0xa60] sm:$0xff]
    %v1564 = vld [vmem:[#allocation14 + $0xa68] sm:$0xff]
    %v1565 = vld [vmem:[#allocation14 + $0xa70] sm:$0xff]
    %v1566 = vld [vmem:[#allocation14 + $0xa78] sm:$0xff]
    %v1567 = vld [vmem:[#allocation14 + $0xa80] sm:$0xff]
    %v1568 = vld [vmem:[#allocation14 + $0xa88] sm:$0xff]
    %v1569 = vld [vmem:[#allocation14 + $0xa90] sm:$0xff]
    %v1570 = vld [vmem:[#allocation14 + $0xa98] sm:$0xff]
    %v1571 = vld [vmem:[#allocation14 + $0xaa0] sm:$0xff]
    %v1572 = vld [vmem:[#allocation14 + $0xaa8] sm:$0xff]
    %v1573 = vld [vmem:[#allocation14 + $0xab0] sm:$0xff]
    %v1574 = vld [vmem:[#allocation14 + $0xab8] sm:$0xff]
    %v1575 = vld [vmem:[#allocation14 + $0xac0] sm:$0xff]
    %v1576 = vld [vmem:[#allocation14 + $0xac8] sm:$0xff]
    %v1577 = vld [vmem:[#allocation14 + $0xad0] sm:$0xff]
    %v1578 = vld [vmem:[#allocation14 + $0xad8] sm:$0xff]
    %v1579 = vld [vmem:[#allocation14 + $0xae0] sm:$0xff]
    %v1580 = vld [vmem:[#allocation14 + $0xae8] sm:$0xff]
    %v1581 = vld [vmem:[#allocation14 + $0xaf0] sm:$0xff]
    %v1582 = vld [vmem:[#allocation14 + $0xaf8] sm:$0xff]
    %v1583 = vld [vmem:[#allocation14 + $0xb00] sm:$0xff]
    %v1584 = vld [vmem:[#allocation14 + $0xb08] sm:$0xff]
    %v1585 = vld [vmem:[#allocation14 + $0xb10] sm:$0xff]
    %v1586 = vld [vmem:[#allocation14 + $0xb18] sm:$0xff]
    %v1587 = vld [vmem:[#allocation14 + $0xb20] sm:$0xff]
    %v1588 = vld [vmem:[#allocation14 + $0xb28] sm:$0xff]
    %v1589 = vld [vmem:[#allocation14 + $0xb30] sm:$0xff]
    %v1590 = vld [vmem:[#allocation14 + $0xb38] sm:$0xff]
    %v1591 = vld [vmem:[#allocation14 + $0xb40] sm:$0xff]
    %v1592 = vld [vmem:[#allocation14 + $0xb48] sm:$0xff]
    %v1593 = vld [vmem:[#allocation14 + $0xb50] sm:$0xff]
    %v1594 = vld [vmem:[#allocation14 + $0xb58] sm:$0xff]
    %v1595 = vld [vmem:[#allocation14 + $0xb60] sm:$0xff]
    %v1596 = vld [vmem:[#allocation14 + $0xb68] sm:$0xff]
    %v1597 = vld [vmem:[#allocation14 + $0xb70] sm:$0xff]
    %v1598 = vld [vmem:[#allocation14 + $0xb78] sm:$0xff]
    %v1599 = vld [vmem:[#allocation14 + $0xb80] sm:$0xff]
    %v1600 = vld [vmem:[#allocation14 + $0xb88] sm:$0xff]
    %v1601 = vld [vmem:[#allocation14 + $0xb90] sm:$0xff]
    %v1602 = vld [vmem:[#allocation14 + $0xb98] sm:$0xff]
    %v1603 = vld [vmem:[#allocation14 + $0xba0] sm:$0xff]
    %v1604 = vld [vmem:[#allocation14 + $0xba8] sm:$0xff]
    %v1605 = vld [vmem:[#allocation14 + $0xbb0] sm:$0xff]
    %v1606 = vld [vmem:[#allocation14 + $0xbb8] sm:$0xff]
    %v1607 = vld [vmem:[#allocation14 + $0xbc0] sm:$0xff]
    %v1608 = vld [vmem:[#allocation14 + $0xbc8] sm:$0xff]
    %v1609 = vld [vmem:[#allocation14 + $0xbd0] sm:$0xff]
    %v1610 = vld [vmem:[#allocation14 + $0xbd8] sm:$0xff]
    %v1611 = vld [vmem:[#allocation14 + $0xbe0] sm:$0xff]
    %v1612 = vld [vmem:[#allocation14 + $0xbe8] sm:$0xff]
    %v1613 = vld [vmem:[#allocation14 + $0xbf0] sm:$0xff]
    %v1614 = vld [vmem:[#allocation14 + $0xbf8] sm:$0xff]
    %v1615 = vld [vmem:[#allocation14 + $0xc00] sm:$0xff]
    %v1616 = vld [vmem:[#allocation14 + $0xc08] sm:$0xff]
    %v1617 = vld [vmem:[#allocation14 + $0xc10] sm:$0xff]
    %v1618 = vld [vmem:[#allocation14 + $0xc18] sm:$0xff]
    %v1619 = vld [vmem:[#allocation14 + $0xc20] sm:$0xff]
    %v1620 = vld [vmem:[#allocation14 + $0xc28] sm:$0xff]
    %v1621 = vld [vmem:[#allocation14 + $0xc30] sm:$0xff]
    %v1622 = vld [vmem:[#allocation14 + $0xc38] sm:$0xff]
    %v1623 = vld [vmem:[#allocation14 + $0xc40] sm:$0xff]
    %v1624 = vld [vmem:[#allocation14 + $0xc48] sm:$0xff]
    %v1625 = vld [vmem:[#allocation14 + $0xc50] sm:$0xff]
    %v1626 = vld [vmem:[#allocation14 + $0xc58] sm:$0xff]
    %v1627 = vld [vmem:[#allocation14 + $0xc60] sm:$0xff]
    %v1628 = vld [vmem:[#allocation14 + $0xc68] sm:$0xff]
    %v1629 = vld [vmem:[#allocation14 + $0xc70] sm:$0xff]
    %v1630 = vld [vmem:[#allocation14 + $0xc78] sm:$0xff]
    %v1631 = vld [vmem:[#allocation14 + $0xc80] sm:$0xff]
    %v1632 = vld [vmem:[#allocation14 + $0xc88] sm:$0xff]
    %v1633 = vld [vmem:[#allocation14 + $0xc90] sm:$0xff]
    %v1634 = vld [vmem:[#allocation14 + $0xc98] sm:$0xff]
    %v1635 = vld [vmem:[#allocation14 + $0xca0] sm:$0xff]
    %v1636 = vld [vmem:[#allocation14 + $0xca8] sm:$0xff]
    %v1637 = vld [vmem:[#allocation14 + $0xcb0] sm:$0xff]
    %v1638 = vld [vmem:[#allocation14 + $0xcb8] sm:$0xff]
    %v1639 = vld [vmem:[#allocation14 + $0xcc0] sm:$0xff]
    %v1640 = vld [vmem:[#allocation14 + $0xcc8] sm:$0xff]
    %v1641 = vld [vmem:[#allocation14 + $0xcd0] sm:$0xff]
    %v1642 = vld [vmem:[#allocation14 + $0xcd8] sm:$0xff]
    %v1643 = vld [vmem:[#allocation14 + $0xce0] sm:$0xff]
    %v1644 = vld [vmem:[#allocation14 + $0xce8] sm:$0xff]
    %v1645 = vld [vmem:[#allocation14 + $0xcf0] sm:$0xff]
    %v1646 = vld [vmem:[#allocation14 + $0xcf8] sm:$0xff]
    %v1647 = vld [vmem:[#allocation14 + $0xd00] sm:$0xff]
    %v1648 = vld [vmem:[#allocation14 + $0xd08] sm:$0xff]
    %v1649 = vld [vmem:[#allocation14 + $0xd10] sm:$0xff]
    %v1650 = vld [vmem:[#allocation14 + $0xd18] sm:$0xff]
    %v1651 = vld [vmem:[#allocation14 + $0xd20] sm:$0xff]
    %v1652 = vld [vmem:[#allocation14 + $0xd28] sm:$0xff]
    %v1653 = vld [vmem:[#allocation14 + $0xd30] sm:$0xff]
    %v1654 = vld [vmem:[#allocation14 + $0xd38] sm:$0xff]
    %v1655 = vld [vmem:[#allocation14 + $0xd40] sm:$0xff]
    %v1656 = vld [vmem:[#allocation14 + $0xd48] sm:$0xff]
    %v1657 = vld [vmem:[#allocation14 + $0xd50] sm:$0xff]
    %v1658 = vld [vmem:[#allocation14 + $0xd58] sm:$0xff]
    %v1659 = vld [vmem:[#allocation14 + $0xd60] sm:$0xff]
    %v1660 = vld [vmem:[#allocation14 + $0xd68] sm:$0xff]
    %v1661 = vld [vmem:[#allocation14 + $0xd70] sm:$0xff]
    %v1662 = vld [vmem:[#allocation14 + $0xd78] sm:$0xff]
    %v1663 = vld [vmem:[#allocation14 + $0xd80] sm:$0xff]
    %v1664 = vld [vmem:[#allocation14 + $0xd88] sm:$0xff]
    %v1665 = vld [vmem:[#allocation14 + $0xd90] sm:$0xff]
    %v1666 = vld [vmem:[#allocation14 + $0xd98] sm:$0xff]
    %v1667 = vld [vmem:[#allocation14 + $0xda0] sm:$0xff]
    %v1668 = vld [vmem:[#allocation14 + $0xda8] sm:$0xff]
    %v1669 = vld [vmem:[#allocation14 + $0xdb0] sm:$0xff]
    %v1670 = vld [vmem:[#allocation14 + $0xdb8] sm:$0xff]
    %v1671 = vld [vmem:[#allocation14 + $0xdc0] sm:$0xff]
    %v1672 = vld [vmem:[#allocation14 + $0xdc8] sm:$0xff]
    %v1673 = vld [vmem:[#allocation14 + $0xdd0] sm:$0xff]
    %v1674 = vld [vmem:[#allocation14 + $0xdd8] sm:$0xff]
    %v1675 = vld [vmem:[#allocation14 + $0xde0] sm:$0xff]
    %v1676 = vld [vmem:[#allocation14 + $0xde8] sm:$0xff]
    %v1677 = vld [vmem:[#allocation14 + $0xdf0] sm:$0xff]
    %v1678 = vld [vmem:[#allocation14 + $0xdf8] sm:$0xff]
    %v1679 = vld [vmem:[#allocation14 + $0xe00] sm:$0xff]
    %v1680 = vld [vmem:[#allocation14 + $0xe08] sm:$0xff]
    %v1681 = vld [vmem:[#allocation14 + $0xe10] sm:$0xff]
    %v1682 = vld [vmem:[#allocation14 + $0xe18] sm:$0xff]
    %v1683 = vld [vmem:[#allocation14 + $0xe20] sm:$0xff]
    %v1684 = vld [vmem:[#allocation14 + $0xe28] sm:$0xff]
    %v1685 = vld [vmem:[#allocation14 + $0xe30] sm:$0xff]
    %v1686 = vld [vmem:[#allocation14 + $0xe38] sm:$0xff]
    %v1687 = vld [vmem:[#allocation14 + $0xe40] sm:$0xff]
    %v1688 = vld [vmem:[#allocation14 + $0xe48] sm:$0xff]
    %v1689 = vld [vmem:[#allocation14 + $0xe50] sm:$0xff]
    %v1690 = vld [vmem:[#allocation14 + $0xe58] sm:$0xff]
    %v1691 = vld [vmem:[#allocation14 + $0xe60] sm:$0xff]
    %v1692 = vld [vmem:[#allocation14 + $0xe68] sm:$0xff]
    %v1693 = vld [vmem:[#allocation14 + $0xe70] sm:$0xff]
    %v1694 = vld [vmem:[#allocation14 + $0xe78] sm:$0xff]
    %v1695 = vld [vmem:[#allocation14 + $0xe80] sm:$0xff]
    %v1696 = vld [vmem:[#allocation14 + $0xe88] sm:$0xff]
    %v1697 = vld [vmem:[#allocation14 + $0xe90] sm:$0xff]
    %v1698 = vld [vmem:[#allocation14 + $0xe98] sm:$0xff]
    %v1699 = vld [vmem:[#allocation14 + $0xea0] sm:$0xff]
    %v1700 = vld [vmem:[#allocation14 + $0xea8] sm:$0xff]
    %v1701 = vld [vmem:[#allocation14 + $0xeb0] sm:$0xff]
    %v1702 = vld [vmem:[#allocation14 + $0xeb8] sm:$0xff]
    %v1703 = vld [vmem:[#allocation14 + $0xec0] sm:$0xff]
    %v1704 = vld [vmem:[#allocation14 + $0xec8] sm:$0xff]
    %v1705 = vld [vmem:[#allocation14 + $0xed0] sm:$0xff]
    %v1706 = vld [vmem:[#allocation14 + $0xed8] sm:$0xff]
    %v1707 = vld [vmem:[#allocation14 + $0xee0] sm:$0xff]
    %v1708 = vld [vmem:[#allocation14 + $0xee8] sm:$0xff]
    %v1709 = vld [vmem:[#allocation14 + $0xef0] sm:$0xff]
    %v1710 = vld [vmem:[#allocation14 + $0xef8] sm:$0xff]
    %v1711 = vld [vmem:[#allocation14 + $0xf00] sm:$0xff]
    %v1712 = vld [vmem:[#allocation14 + $0xf08] sm:$0xff]
    %v1713 = vld [vmem:[#allocation14 + $0xf10] sm:$0xff]
    %v1714 = vld [vmem:[#allocation14 + $0xf18] sm:$0xff]
    %v1715 = vld [vmem:[#allocation14 + $0xf20] sm:$0xff]
    %v1716 = vld [vmem:[#allocation14 + $0xf28] sm:$0xff]
    %v1717 = vld [vmem:[#allocation14 + $0xf30] sm:$0xff]
    %v1718 = vld [vmem:[#allocation14 + $0xf38] sm:$0xff]
    %v1719 = vld [vmem:[#allocation14 + $0xf40] sm:$0xff]
    %v1720 = vld [vmem:[#allocation14 + $0xf48] sm:$0xff]
    %v1721 = vld [vmem:[#allocation14 + $0xf50] sm:$0xff]
    %v1722 = vld [vmem:[#allocation14 + $0xf58] sm:$0xff]
    %v1723 = vld [vmem:[#allocation14 + $0xf60] sm:$0xff]
    %v1724 = vld [vmem:[#allocation14 + $0xf68] sm:$0xff]
    %v1725 = vld [vmem:[#allocation14 + $0xf70] sm:$0xff]
    %v1726 = vld [vmem:[#allocation14 + $0xf78] sm:$0xff]
    %v1727 = vld [vmem:[#allocation14 + $0xf80] sm:$0xff]
    %v1728 = vld [vmem:[#allocation14 + $0xf88] sm:$0xff]
    %v1729 = vld [vmem:[#allocation14 + $0xf90] sm:$0xff]
    %v1730 = vld [vmem:[#allocation14 + $0xf98] sm:$0xff]
    %v1731 = vld [vmem:[#allocation14 + $0xfa0] sm:$0xff]
    %v1732 = vld [vmem:[#allocation14 + $0xfa8] sm:$0xff]
    %v1733 = vld [vmem:[#allocation14 + $0xfb0] sm:$0xff]
    %v1734 = vld [vmem:[#allocation14 + $0xfb8] sm:$0xff]
    %v1735 = vld [vmem:[#allocation14 + $0xfc0] sm:$0xff]
    %v1736 = vld [vmem:[#allocation14 + $0xfc8] sm:$0xff]
    %v1737 = vld [vmem:[#allocation14 + $0xfd0] sm:$0xff]
    %v1738 = vld [vmem:[#allocation14 + $0xfd8] sm:$0xff]
    %v1739 = vld [vmem:[#allocation14 + $0xfe0] sm:$0xff]
    %v1740 = vld [vmem:[#allocation14 + $0xfe8] sm:$0xff]
    %v1741 = vld [vmem:[#allocation14 + $0xff0] sm:$0xff]
    %v1742 = vld [vmem:[#allocation14 + $0xff8] sm:$0xff]
    %v1743 = vld [vmem:[#allocation14 + $0x1000] sm:$0xff]
    %v1744 = vld [vmem:[#allocation14 + $0x1008] sm:$0xff]
    %v1745 = vld [vmem:[#allocation14 + $0x1010] sm:$0xff]
    %v1746 = vld [vmem:[#allocation14 + $0x1018] sm:$0xff]
    %v1747 = vld [vmem:[#allocation14 + $0x1020] sm:$0xff]
    %v1748 = vld [vmem:[#allocation14 + $0x1028] sm:$0xff]
    %v1749 = vld [vmem:[#allocation14 + $0x1030] sm:$0xff]
    %v1750 = vld [vmem:[#allocation14 + $0x1038] sm:$0xff]
    %v1751 = vld [vmem:[#allocation14 + $0x1040] sm:$0xff]
    %v1752 = vld [vmem:[#allocation14 + $0x1048] sm:$0xff]
    %v1753 = vld [vmem:[#allocation14 + $0x1050] sm:$0xff]
    %v1754 = vld [vmem:[#allocation14 + $0x1058] sm:$0xff]
    %v1755 = vld [vmem:[#allocation14 + $0x1060] sm:$0xff]
    %v1756 = vld [vmem:[#allocation14 + $0x1068] sm:$0xff]
    %v1757 = vld [vmem:[#allocation14 + $0x1070] sm:$0xff]
    %v1758 = vld [vmem:[#allocation14 + $0x1078] sm:$0xff]
    %v1759 = vld [vmem:[#allocation14 + $0x1080] sm:$0xff]
    %v1760 = vld [vmem:[#allocation14 + $0x1088] sm:$0xff]
    %v1761 = vld [vmem:[#allocation14 + $0x1090] sm:$0xff]
    %v1762 = vld [vmem:[#allocation14 + $0x1098] sm:$0xff]
    %v1763 = vld [vmem:[#allocation14 + $0x10a0] sm:$0xff]
    %v1764 = vld [vmem:[#allocation14 + $0x10a8] sm:$0xff]
    %v1765 = vld [vmem:[#allocation14 + $0x10b0] sm:$0xff]
    %v1766 = vld [vmem:[#allocation14 + $0x10b8] sm:$0xff]
    %v1767 = vld [vmem:[#allocation14 + $0x10c0] sm:$0xff]
    %v1768 = vld [vmem:[#allocation14 + $0x10c8] sm:$0xff]
    %v1769 = vld [vmem:[#allocation14 + $0x10d0] sm:$0xff]
    %v1770 = vld [vmem:[#allocation14 + $0x10d8] sm:$0xff]
    %v1771 = vld [vmem:[#allocation14 + $0x10e0] sm:$0xff]
    %v1772 = vld [vmem:[#allocation14 + $0x10e8] sm:$0xff]
    %v1773 = vld [vmem:[#allocation14 + $0x10f0] sm:$0xff]
    %v1774 = vld [vmem:[#allocation14 + $0x10f8] sm:$0xff]
    %v1775 = vld [vmem:[#allocation14 + $0x1100] sm:$0xff]
    %v1776 = vld [vmem:[#allocation14 + $0x1108] sm:$0xff]
    %v1777 = vld [vmem:[#allocation14 + $0x1110] sm:$0xff]
    %v1778 = vld [vmem:[#allocation14 + $0x1118] sm:$0xff]
    %v1779 = vld [vmem:[#allocation14 + $0x1120] sm:$0xff]
    %v1780 = vld [vmem:[#allocation14 + $0x1128] sm:$0xff]
    %v1781 = vld [vmem:[#allocation14 + $0x1130] sm:$0xff]
    %v1782 = vld [vmem:[#allocation14 + $0x1138] sm:$0xff]
    %v1783 = vld [vmem:[#allocation14 + $0x1140] sm:$0xff]
    %v1784 = vld [vmem:[#allocation14 + $0x1148] sm:$0xff]
    %v1785 = vld [vmem:[#allocation14 + $0x1150] sm:$0xff]
    %v1786 = vld [vmem:[#allocation14 + $0x1158] sm:$0xff]
    %v1787 = vld [vmem:[#allocation14 + $0x1160] sm:$0xff]
    %v1788 = vld [vmem:[#allocation14 + $0x1168] sm:$0xff]
    %v1789 = vld [vmem:[#allocation14 + $0x1170] sm:$0xff]
    %v1790 = vld [vmem:[#allocation14 + $0x1178] sm:$0xff]
    %v1791 = vld [vmem:[#allocation14 + $0x1180] sm:$0xff]
    %v1792 = vld [vmem:[#allocation14 + $0x1188] sm:$0xff]
    %v1793 = vld [vmem:[#allocation14 + $0x1190] sm:$0xff]
    %v1794 = vld [vmem:[#allocation14 + $0x1198] sm:$0xff]
    %v1795 = vld [vmem:[#allocation14 + $0x11a0] sm:$0xff]
    %v1796 = vld [vmem:[#allocation14 + $0x11a8] sm:$0xff]
    %v1797 = vld [vmem:[#allocation14 + $0x11b0] sm:$0xff]
    %v1798 = vld [vmem:[#allocation14 + $0x11b8] sm:$0xff]
    %v1799 = vld [vmem:[#allocation14 + $0x11c0] sm:$0xff]
    %v1800 = vld [vmem:[#allocation14 + $0x11c8] sm:$0xff]
    %v1801 = vld [vmem:[#allocation14 + $0x11d0] sm:$0xff]
    %v1802 = vld [vmem:[#allocation14 + $0x11d8] sm:$0xff]
    %v1803 = vld [vmem:[#allocation14 + $0x11e0] sm:$0xff]
    %v1804 = vld [vmem:[#allocation14 + $0x11e8] sm:$0xff]
    %v1805 = vld [vmem:[#allocation14 + $0x11f0] sm:$0xff]
    %v1806 = vld [vmem:[#allocation14 + $0x11f8] sm:$0xff]
    %v1807 = vld [vmem:[#allocation14 + $0x1200] sm:$0xff]
    %v1808 = vld [vmem:[#allocation14 + $0x1208] sm:$0xff]
    %v1809 = vld [vmem:[#allocation14 + $0x1210] sm:$0xff]
    %v1810 = vld [vmem:[#allocation14 + $0x1218] sm:$0xff]
    %v1811 = vld [vmem:[#allocation14 + $0x1220] sm:$0xff]
    %v1812 = vld [vmem:[#allocation14 + $0x1228] sm:$0xff]
    %v1813 = vld [vmem:[#allocation14 + $0x1230] sm:$0xff]
    %v1814 = vld [vmem:[#allocation14 + $0x1238] sm:$0xff]
    %v1815 = vld [vmem:[#allocation14 + $0x1240] sm:$0xff]
    %v1816 = vld [vmem:[#allocation14 + $0x1248] sm:$0xff]
    %v1817 = vld [vmem:[#allocation14 + $0x1250] sm:$0xff]
    %v1818 = vld [vmem:[#allocation14 + $0x1258] sm:$0xff]
    %v1819 = vld [vmem:[#allocation14 + $0x1260] sm:$0xff]
    %v1820 = vld [vmem:[#allocation14 + $0x1268] sm:$0xff]
    %v1821 = vld [vmem:[#allocation14 + $0x1270] sm:$0xff]
    %v1822 = vld [vmem:[#allocation14 + $0x1278] sm:$0xff]
    %v1823 = vld [vmem:[#allocation14 + $0x1280] sm:$0xff]
    %v1824 = vld [vmem:[#allocation14 + $0x1288] sm:$0xff]
    %v1825 = vld [vmem:[#allocation14 + $0x1290] sm:$0xff]
    %v1826 = vld [vmem:[#allocation14 + $0x1298] sm:$0xff]
    %v1827 = vld [vmem:[#allocation14 + $0x12a0] sm:$0xff]
    %v1828 = vld [vmem:[#allocation14 + $0x12a8] sm:$0xff]
    %v1829 = vld [vmem:[#allocation14 + $0x12b0] sm:$0xff]
    %v1830 = vld [vmem:[#allocation14 + $0x12b8] sm:$0xff]
    %v1831 = vld [vmem:[#allocation14 + $0x12c0] sm:$0xff]
    %v1832 = vld [vmem:[#allocation14 + $0x12c8] sm:$0xff]
    %v1833 = vld [vmem:[#allocation14 + $0x12d0] sm:$0xff]
    %v1834 = vld [vmem:[#allocation14 + $0x12d8] sm:$0xff]
    %v1835 = vld [vmem:[#allocation14 + $0x12e0] sm:$0xff]
    %v1836 = vld [vmem:[#allocation14 + $0x12e8] sm:$0xff]
    %v1837 = vld [vmem:[#allocation14 + $0x12f0] sm:$0xff]
    %v1838 = vld [vmem:[#allocation14 + $0x12f8] sm:$0xff]
    %v1839 = vld [vmem:[#allocation14 + $0x1300] sm:$0xff]
    %v1840 = vld [vmem:[#allocation14 + $0x1308] sm:$0xff]
    %v1841 = vld [vmem:[#allocation14 + $0x1310] sm:$0xff]
    %v1842 = vld [vmem:[#allocation14 + $0x1318] sm:$0xff]
    %v1843 = vld [vmem:[#allocation14 + $0x1320] sm:$0xff]
    %v1844 = vld [vmem:[#allocation14 + $0x1328] sm:$0xff]
    %v1845 = vld [vmem:[#allocation14 + $0x1330] sm:$0xff]
    %v1846 = vld [vmem:[#allocation14 + $0x1338] sm:$0xff]
    %v1847 = vld [vmem:[#allocation14 + $0x1340] sm:$0xff]
    %v1848 = vld [vmem:[#allocation14 + $0x1348] sm:$0xff]
    %v1849 = vld [vmem:[#allocation14 + $0x1350] sm:$0xff]
    %v1850 = vld [vmem:[#allocation14 + $0x1358] sm:$0xff]
    %v1851 = vld [vmem:[#allocation14 + $0x1360] sm:$0xff]
    %v1852 = vld [vmem:[#allocation14 + $0x1368] sm:$0xff]
    %v1853 = vld [vmem:[#allocation14 + $0x1370] sm:$0xff]
    %v1854 = vld [vmem:[#allocation14 + $0x1378] sm:$0xff]
    %v1855 = vld [vmem:[#allocation14 + $0x1380] sm:$0xff]
    %v1856 = vld [vmem:[#allocation14 + $0x1388] sm:$0xff]
    %v1857 = vld [vmem:[#allocation14 + $0x1390] sm:$0xff]
    %v1858 = vld [vmem:[#allocation14 + $0x1398] sm:$0xff]
    %v1859 = vld [vmem:[#allocation14 + $0x13a0] sm:$0xff]
    %v1860 = vld [vmem:[#allocation14 + $0x13a8] sm:$0xff]
    %v1861 = vld [vmem:[#allocation14 + $0x13b0] sm:$0xff]
    %v1862 = vld [vmem:[#allocation14 + $0x13b8] sm:$0xff]
    %v1863 = vld [vmem:[#allocation14 + $0x13c0] sm:$0xff]
    %v1864 = vld [vmem:[#allocation14 + $0x13c8] sm:$0xff]
    %v1865 = vld [vmem:[#allocation14 + $0x13d0] sm:$0xff]
    %v1866 = vld [vmem:[#allocation14 + $0x13d8] sm:$0xff]
    %v1867 = vld [vmem:[#allocation14 + $0x13e0] sm:$0xff]
    %v1868 = vld [vmem:[#allocation14 + $0x13e8] sm:$0xff]
    %v1869 = vld [vmem:[#allocation14 + $0x13f0] sm:$0xff]
    %v1870 = vld [vmem:[#allocation14 + $0x13f8] sm:$0xff]
    %v1871 = vld [vmem:[#allocation14 + $0x1400] sm:$0xff]
    %v1872 = vld [vmem:[#allocation14 + $0x1408] sm:$0xff]
    %v1873 = vld [vmem:[#allocation14 + $0x1410] sm:$0xff]
    %v1874 = vld [vmem:[#allocation14 + $0x1418] sm:$0xff]
    %v1875 = vld [vmem:[#allocation14 + $0x1420] sm:$0xff]
    %v1876 = vld [vmem:[#allocation14 + $0x1428] sm:$0xff]
    %v1877 = vld [vmem:[#allocation14 + $0x1430] sm:$0xff]
    %v1878 = vld [vmem:[#allocation14 + $0x1438] sm:$0xff]
    %v1879 = vld [vmem:[#allocation14 + $0x1440] sm:$0xff]
    %v1880 = vld [vmem:[#allocation14 + $0x1448] sm:$0xff]
    %v1881 = vld [vmem:[#allocation14 + $0x1450] sm:$0xff]
    %v1882 = vld [vmem:[#allocation14 + $0x1458] sm:$0xff]
    %v1883 = vld [vmem:[#allocation14 + $0x1460] sm:$0xff]
    %v1884 = vld [vmem:[#allocation14 + $0x1468] sm:$0xff]
    %v1885 = vld [vmem:[#allocation14 + $0x1470] sm:$0xff]
    %v1886 = vld [vmem:[#allocation14 + $0x1478] sm:$0xff]
    %v1887 = vld [vmem:[#allocation14 + $0x1480] sm:$0xff]
    %v1888 = vld [vmem:[#allocation14 + $0x1488] sm:$0xff]
    %v1889 = vld [vmem:[#allocation14 + $0x1490] sm:$0xff]
    %v1890 = vld [vmem:[#allocation14 + $0x1498] sm:$0xff]
    %v1891 = vld [vmem:[#allocation14 + $0x14a0] sm:$0xff]
    %v1892 = vld [vmem:[#allocation14 + $0x14a8] sm:$0xff]
    %v1893 = vld [vmem:[#allocation14 + $0x14b0] sm:$0xff]
    %v1894 = vld [vmem:[#allocation14 + $0x14b8] sm:$0xff]
    %v1895 = vld [vmem:[#allocation14 + $0x14c0] sm:$0xff]
    %v1896 = vld [vmem:[#allocation14 + $0x14c8] sm:$0xff]
    %v1897 = vld [vmem:[#allocation14 + $0x14d0] sm:$0xff]
    %v1898 = vld [vmem:[#allocation14 + $0x14d8] sm:$0xff]
    %v1899 = vld [vmem:[#allocation14 + $0x14e0] sm:$0xff]
    %v1900 = vld [vmem:[#allocation14 + $0x14e8] sm:$0xff]
    %v1901 = vld [vmem:[#allocation14 + $0x14f0] sm:$0xff]
    %v1902 = vld [vmem:[#allocation14 + $0x14f8] sm:$0xff]
    %v1903 = vld [vmem:[#allocation14 + $0x1500] sm:$0xff]
    %v1904 = vld [vmem:[#allocation14 + $0x1508] sm:$0xff]
    %v1905 = vld [vmem:[#allocation14 + $0x1510] sm:$0xff]
    %v1906 = vld [vmem:[#allocation14 + $0x1518] sm:$0xff]
    %v1907 = vld [vmem:[#allocation14 + $0x1520] sm:$0xff]
    %v1908 = vld [vmem:[#allocation14 + $0x1528] sm:$0xff]
    %v1909 = vld [vmem:[#allocation14 + $0x1530] sm:$0xff]
    %v1910 = vld [vmem:[#allocation14 + $0x1538] sm:$0xff]
    %v1911 = vld [vmem:[#allocation14 + $0x1540] sm:$0xff]
    %v1912 = vld [vmem:[#allocation14 + $0x1548] sm:$0xff]
    %v1913 = vld [vmem:[#allocation14 + $0x1550] sm:$0xff]
    %v1914 = vld [vmem:[#allocation14 + $0x1558] sm:$0xff]
    %v1915 = vld [vmem:[#allocation14 + $0x1560] sm:$0xff]
    %v1916 = vld [vmem:[#allocation14 + $0x1568] sm:$0xff]
    %v1917 = vld [vmem:[#allocation14 + $0x1570] sm:$0xff]
    %v1918 = vld [vmem:[#allocation14 + $0x1578] sm:$0xff]
    %v1919 = vld [vmem:[#allocation14 + $0x1580] sm:$0xff]
    %v1920 = vld [vmem:[#allocation14 + $0x1588] sm:$0xff]
    %v1921 = vld [vmem:[#allocation14 + $0x1590] sm:$0xff]
    %v1922 = vld [vmem:[#allocation14 + $0x1598] sm:$0xff]
    %v1923 = vld [vmem:[#allocation14 + $0x15a0] sm:$0xff]
    %v1924 = vld [vmem:[#allocation14 + $0x15a8] sm:$0xff]
    %v1925 = vld [vmem:[#allocation14 + $0x15b0] sm:$0xff]
    %v1926 = vld [vmem:[#allocation14 + $0x15b8] sm:$0xff]
    %v1927 = vld [vmem:[#allocation14 + $0x15c0] sm:$0xff]
    %v1928 = vld [vmem:[#allocation14 + $0x15c8] sm:$0xff]
    %v1929 = vld [vmem:[#allocation14 + $0x15d0] sm:$0xff]
    %v1930 = vld [vmem:[#allocation14 + $0x15d8] sm:$0xff]
    %v1931 = vld [vmem:[#allocation14 + $0x15e0] sm:$0xff]
    %v1932 = vld [vmem:[#allocation14 + $0x15e8] sm:$0xff]
    %v1933 = vld [vmem:[#allocation14 + $0x15f0] sm:$0xff]
    %v1934 = vld [vmem:[#allocation14 + $0x15f8] sm:$0xff]
    %v1935 = vld [vmem:[#allocation14 + $0x1600] sm:$0xff]
    %v1936 = vld [vmem:[#allocation14 + $0x1608] sm:$0xff]
    %v1937 = vld [vmem:[#allocation14 + $0x1610] sm:$0xff]
    %v1938 = vld [vmem:[#allocation14 + $0x1618] sm:$0xff]
    %v1939 = vld [vmem:[#allocation14 + $0x1620] sm:$0xff]
    %v1940 = vld [vmem:[#allocation14 + $0x1628] sm:$0xff]
    %v1941 = vld [vmem:[#allocation14 + $0x1630] sm:$0xff]
    %v1942 = vld [vmem:[#allocation14 + $0x1638] sm:$0xff]
    %v1943 = vld [vmem:[#allocation14 + $0x1640] sm:$0xff]
    %v1944 = vld [vmem:[#allocation14 + $0x1648] sm:$0xff]
    %v1945 = vld [vmem:[#allocation14 + $0x1650] sm:$0xff]
    %v1946 = vld [vmem:[#allocation14 + $0x1658] sm:$0xff]
    %v1947 = vld [vmem:[#allocation14 + $0x1660] sm:$0xff]
    %v1948 = vld [vmem:[#allocation14 + $0x1668] sm:$0xff]
    %v1949 = vld [vmem:[#allocation14 + $0x1670] sm:$0xff]
    %v1950 = vld [vmem:[#allocation14 + $0x1678] sm:$0xff]
    %v1951 = vld [vmem:[#allocation14 + $0x1680] sm:$0xff]
    %v1952 = vld [vmem:[#allocation14 + $0x1688] sm:$0xff]
    %v1953 = vld [vmem:[#allocation14 + $0x1690] sm:$0xff]
    %v1954 = vld [vmem:[#allocation14 + $0x1698] sm:$0xff]
    %v1955 = vld [vmem:[#allocation14 + $0x16a0] sm:$0xff]
    %v1956 = vld [vmem:[#allocation14 + $0x16a8] sm:$0xff]
    %v1957 = vld [vmem:[#allocation14 + $0x16b0] sm:$0xff]
    %v1958 = vld [vmem:[#allocation14 + $0x16b8] sm:$0xff]
    %v1959 = vld [vmem:[#allocation14 + $0x16c0] sm:$0xff]
    %v1960 = vld [vmem:[#allocation14 + $0x16c8] sm:$0xff]
    %v1961 = vld [vmem:[#allocation14 + $0x16d0] sm:$0xff]
    %v1962 = vld [vmem:[#allocation14 + $0x16d8] sm:$0xff]
    %v1963 = vld [vmem:[#allocation14 + $0x16e0] sm:$0xff]
    %v1964 = vld [vmem:[#allocation14 + $0x16e8] sm:$0xff]
    %v1965 = vld [vmem:[#allocation14 + $0x16f0] sm:$0xff]
    %v1966 = vld [vmem:[#allocation14 + $0x16f8] sm:$0xff]
    %v1967 = vld [vmem:[#allocation14 + $0x1700] sm:$0xff]
    %v1968 = vld [vmem:[#allocation14 + $0x1708] sm:$0xff]
    %v1969 = vld [vmem:[#allocation14 + $0x1710] sm:$0xff]
    %v1970 = vld [vmem:[#allocation14 + $0x1718] sm:$0xff]
    %v1971 = vld [vmem:[#allocation14 + $0x1720] sm:$0xff]
    %v1972 = vld [vmem:[#allocation14 + $0x1728] sm:$0xff]
    %v1973 = vld [vmem:[#allocation14 + $0x1730] sm:$0xff]
    %v1974 = vld [vmem:[#allocation14 + $0x1738] sm:$0xff]
    %v1975 = vld [vmem:[#allocation14 + $0x1740] sm:$0xff]
    %v1976 = vld [vmem:[#allocation14 + $0x1748] sm:$0xff]
    %v1977 = vld [vmem:[#allocation14 + $0x1750] sm:$0xff]
    %v1978 = vld [vmem:[#allocation14 + $0x1758] sm:$0xff]
    %v1979 = vld [vmem:[#allocation14 + $0x1760] sm:$0xff]
    %v1980 = vld [vmem:[#allocation14 + $0x1768] sm:$0xff]
    %v1981 = vld [vmem:[#allocation14 + $0x1770] sm:$0xff]
    %v1982 = vld [vmem:[#allocation14 + $0x1778] sm:$0xff]
    %v1983 = vld [vmem:[#allocation14 + $0x1780] sm:$0xff]
    %v1984 = vld [vmem:[#allocation14 + $0x1788] sm:$0xff]
    %v1985 = vld [vmem:[#allocation14 + $0x1790] sm:$0xff]
    %v1986 = vld [vmem:[#allocation14 + $0x1798] sm:$0xff]
    %v1987 = vld [vmem:[#allocation14 + $0x17a0] sm:$0xff]
    %v1988 = vld [vmem:[#allocation14 + $0x17a8] sm:$0xff]
    %v1989 = vld [vmem:[#allocation14 + $0x17b0] sm:$0xff]
    %v1990 = vld [vmem:[#allocation14 + $0x17b8] sm:$0xff]
    %v1991 = vld [vmem:[#allocation14 + $0x17c0] sm:$0xff]
    %v1992 = vld [vmem:[#allocation14 + $0x17c8] sm:$0xff]
    %v1993 = vld [vmem:[#allocation14 + $0x17d0] sm:$0xff]
    %v1994 = vld [vmem:[#allocation14 + $0x17d8] sm:$0xff]
    %v1995 = vld [vmem:[#allocation14 + $0x17e0] sm:$0xff]
    %v1996 = vld [vmem:[#allocation14 + $0x17e8] sm:$0xff]
    %v1997 = vld [vmem:[#allocation14 + $0x17f0] sm:$0xff]
    %v1998 = vld [vmem:[#allocation14 + $0x17f8] sm:$0xff]
    %v1999 = vld [vmem:[#allocation14 + $0x1800] sm:$0xff]
    %v2000 = vld [vmem:[#allocation14 + $0x1808] sm:$0xff]
    %v2001 = vld [vmem:[#allocation14 + $0x1810] sm:$0xff]
    %v2002 = vld [vmem:[#allocation14 + $0x1818] sm:$0xff]
    %v2003 = vld [vmem:[#allocation14 + $0x1820] sm:$0xff]
    %v2004 = vld [vmem:[#allocation14 + $0x1828] sm:$0xff]
    %v2005 = vld [vmem:[#allocation14 + $0x1830] sm:$0xff]
    %v2006 = vld [vmem:[#allocation14 + $0x1838] sm:$0xff]
    %v2007 = vld [vmem:[#allocation14 + $0x1840] sm:$0xff]
    %v2008 = vld [vmem:[#allocation14 + $0x1848] sm:$0xff]
    %v2009 = vld [vmem:[#allocation14 + $0x1850] sm:$0xff]
    %v2010 = vld [vmem:[#allocation14 + $0x1858] sm:$0xff]
    %v2011 = vld [vmem:[#allocation14 + $0x1860] sm:$0xff]
    %v2012 = vld [vmem:[#allocation14 + $0x1868] sm:$0xff]
    %v2013 = vld [vmem:[#allocation14 + $0x1870] sm:$0xff]
    %v2014 = vld [vmem:[#allocation14 + $0x1878] sm:$0xff]
    %v2015 = vld [vmem:[#allocation14 + $0x1880] sm:$0xff]
    %v2016 = vld [vmem:[#allocation14 + $0x1888] sm:$0xff]
    %v2017 = vld [vmem:[#allocation14 + $0x1890] sm:$0xff]
    %v2018 = vld [vmem:[#allocation14 + $0x1898] sm:$0xff]
    %v2019 = vld [vmem:[#allocation14 + $0x18a0] sm:$0xff]
    %v2020 = vld [vmem:[#allocation14 + $0x18a8] sm:$0xff]
    %v2021 = vld [vmem:[#allocation14 + $0x18b0] sm:$0xff]
    %v2022 = vld [vmem:[#allocation14 + $0x18b8] sm:$0xff]
    %v2023 = vld [vmem:[#allocation14 + $0x18c0] sm:$0xff]
    %v2024 = vld [vmem:[#allocation14 + $0x18c8] sm:$0xff]
    %v2025 = vld [vmem:[#allocation14 + $0x18d0] sm:$0xff]
    %v2026 = vld [vmem:[#allocation14 + $0x18d8] sm:$0xff]
    %v2027 = vld [vmem:[#allocation14 + $0x18e0] sm:$0xff]
    %v2028 = vld [vmem:[#allocation14 + $0x18e8] sm:$0xff]
    %v2029 = vld [vmem:[#allocation14 + $0x18f0] sm:$0xff]
    %v2030 = vld [vmem:[#allocation14 + $0x18f8] sm:$0xff]
    %v2031 = vld [vmem:[#allocation14 + $0x1900] sm:$0xff]
    %v2032 = vld [vmem:[#allocation14 + $0x1908] sm:$0xff]
    %v2033 = vld [vmem:[#allocation14 + $0x1910] sm:$0xff]
    %v2034 = vld [vmem:[#allocation14 + $0x1918] sm:$0xff]
    %v2035 = vld [vmem:[#allocation14 + $0x1920] sm:$0xff]
    %v2036 = vld [vmem:[#allocation14 + $0x1928] sm:$0xff]
    %v2037 = vld [vmem:[#allocation14 + $0x1930] sm:$0xff]
    %v2038 = vld [vmem:[#allocation14 + $0x1938] sm:$0xff]
    %v2039 = vld [vmem:[#allocation14 + $0x1940] sm:$0xff]
    %v2040 = vld [vmem:[#allocation14 + $0x1948] sm:$0xff]
    %v2041 = vld [vmem:[#allocation14 + $0x1950] sm:$0xff]
    %v2042 = vld [vmem:[#allocation14 + $0x1958] sm:$0xff]
    %v2043 = vld [vmem:[#allocation14 + $0x1960] sm:$0xff]
    %v2044 = vld [vmem:[#allocation14 + $0x1968] sm:$0xff]
    %v2045 = vld [vmem:[#allocation14 + $0x1970] sm:$0xff]
    %v2046 = vld [vmem:[#allocation14 + $0x1978] sm:$0xff]
    %v2047 = vld [vmem:[#allocation14 + $0x1980] sm:$0xff]
    %v2048 = vld [vmem:[#allocation14 + $0x1988] sm:$0xff]
    %v2049 = vld [vmem:[#allocation14 + $0x1990] sm:$0xff]
    %v2050 = vld [vmem:[#allocation14 + $0x1998] sm:$0xff]
    %v2051 = vld [vmem:[#allocation14 + $0x19a0] sm:$0xff]
    %v2052 = vld [vmem:[#allocation14 + $0x19a8] sm:$0xff]
    %v2053 = vld [vmem:[#allocation14 + $0x19b0] sm:$0xff]
    %v2054 = vld [vmem:[#allocation14 + $0x19b8] sm:$0xff]
    %v2055 = vld [vmem:[#allocation14 + $0x19c0] sm:$0xff]
    %v2056 = vld [vmem:[#allocation14 + $0x19c8] sm:$0xff]
    %v2057 = vld [vmem:[#allocation14 + $0x19d0] sm:$0xff]
    %v2058 = vld [vmem:[#allocation14 + $0x19d8] sm:$0xff]
    %v2059 = vld [vmem:[#allocation14 + $0x19e0] sm:$0xff]
    %v2060 = vld [vmem:[#allocation14 + $0x19e8] sm:$0xff]
    %v2061 = vld [vmem:[#allocation14 + $0x19f0] sm:$0xff]
    %v2062 = vld [vmem:[#allocation14 + $0x19f8] sm:$0xff]
    %v2063 = vld [vmem:[#allocation14 + $0x1a00] sm:$0xff]
    %v2064 = vld [vmem:[#allocation14 + $0x1a08] sm:$0xff]
    %v2065 = vld [vmem:[#allocation14 + $0x1a10] sm:$0xff]
    %v2066 = vld [vmem:[#allocation14 + $0x1a18] sm:$0xff]
    %v2067 = vld [vmem:[#allocation14 + $0x1a20] sm:$0xff]
    %v2068 = vld [vmem:[#allocation14 + $0x1a28] sm:$0xff]
    %v2069 = vld [vmem:[#allocation14 + $0x1a30] sm:$0xff]
    %v2070 = vld [vmem:[#allocation14 + $0x1a38] sm:$0xff]
    %v2071 = vld [vmem:[#allocation14 + $0x1a40] sm:$0xff]
    %v2072 = vld [vmem:[#allocation14 + $0x1a48] sm:$0xff]
    %v2073 = vld [vmem:[#allocation14 + $0x1a50] sm:$0xff]
    %v2074 = vld [vmem:[#allocation14 + $0x1a58] sm:$0xff]
    %v2075 = vld [vmem:[#allocation14 + $0x1a60] sm:$0xff]
    %v2076 = vld [vmem:[#allocation14 + $0x1a68] sm:$0xff]
    %v2077 = vld [vmem:[#allocation14 + $0x1a70] sm:$0xff]
    %v2078 = vld [vmem:[#allocation14 + $0x1a78] sm:$0xff]
    %v2079 = vld [vmem:[#allocation14 + $0x1a80] sm:$0xff]
    %v2080 = vld [vmem:[#allocation14 + $0x1a88] sm:$0xff]
    %v2081 = vld [vmem:[#allocation14 + $0x1a90] sm:$0xff]
    %v2082 = vld [vmem:[#allocation14 + $0x1a98] sm:$0xff]
    %v2083 = vld [vmem:[#allocation14 + $0x1aa0] sm:$0xff]
    %v2084 = vld [vmem:[#allocation14 + $0x1aa8] sm:$0xff]
    %v2085 = vld [vmem:[#allocation14 + $0x1ab0] sm:$0xff]
    %v2086 = vld [vmem:[#allocation14 + $0x1ab8] sm:$0xff]
    %v2087 = vld [vmem:[#allocation14 + $0x1ac0] sm:$0xff]
    %v2088 = vld [vmem:[#allocation14 + $0x1ac8] sm:$0xff]
    %v2089 = vld [vmem:[#allocation14 + $0x1ad0] sm:$0xff]
    %v2090 = vld [vmem:[#allocation14 + $0x1ad8] sm:$0xff]
    %v2091 = vld [vmem:[#allocation14 + $0x1ae0] sm:$0xff]
    %v2092 = vld [vmem:[#allocation14 + $0x1ae8] sm:$0xff]
    %v2093 = vld [vmem:[#allocation14 + $0x1af0] sm:$0xff]
    %v2094 = vld [vmem:[#allocation14 + $0x1af8] sm:$0xff]
    %v2095 = vld [vmem:[#allocation14 + $0x1b00] sm:$0xff]
    %v2096 = vld [vmem:[#allocation14 + $0x1b08] sm:$0xff]
    %v2097 = vld [vmem:[#allocation14 + $0x1b10] sm:$0xff]
    %v2098 = vld [vmem:[#allocation14 + $0x1b18] sm:$0xff]
    %v2099 = vld [vmem:[#allocation14 + $0x1b20] sm:$0xff]
    %v2100 = vld [vmem:[#allocation14 + $0x1b28] sm:$0xff]
    %v2101 = vld [vmem:[#allocation14 + $0x1b30] sm:$0xff]
    %v2102 = vld [vmem:[#allocation14 + $0x1b38] sm:$0xff]
    %v2103 = vld [vmem:[#allocation14 + $0x1b40] sm:$0xff]
    %v2104 = vld [vmem:[#allocation14 + $0x1b48] sm:$0xff]
    %v2105 = vld [vmem:[#allocation14 + $0x1b50] sm:$0xff]
    %v2106 = vld [vmem:[#allocation14 + $0x1b58] sm:$0xff]
    %v2107 = vld [vmem:[#allocation14 + $0x1b60] sm:$0xff]
    %v2108 = vld [vmem:[#allocation14 + $0x1b68] sm:$0xff]
    %v2109 = vld [vmem:[#allocation14 + $0x1b70] sm:$0xff]
    %v2110 = vld [vmem:[#allocation14 + $0x1b78] sm:$0xff]
    %v2111 = vld [vmem:[#allocation14 + $0x1b80] sm:$0xff]
    %v2112 = vld [vmem:[#allocation14 + $0x1b88] sm:$0xff]
    %v2113 = vld [vmem:[#allocation14 + $0x1b90] sm:$0xff]
    %v2114 = vld [vmem:[#allocation14 + $0x1b98] sm:$0xff]
    %v2115 = vld [vmem:[#allocation14 + $0x1ba0] sm:$0xff]
    %v2116 = vld [vmem:[#allocation14 + $0x1ba8] sm:$0xff]
    %v2117 = vld [vmem:[#allocation14 + $0x1bb0] sm:$0xff]
    %v2118 = vld [vmem:[#allocation14 + $0x1bb8] sm:$0xff]
    %v2119 = vld [vmem:[#allocation14 + $0x1bc0] sm:$0xff]
    %v2120 = vld [vmem:[#allocation14 + $0x1bc8] sm:$0xff]
    %v2121 = vld [vmem:[#allocation14 + $0x1bd0] sm:$0xff]
    %v2122 = vld [vmem:[#allocation14 + $0x1bd8] sm:$0xff]
    %v2123 = vld [vmem:[#allocation14 + $0x1be0] sm:$0xff]
    %v2124 = vld [vmem:[#allocation14 + $0x1be8] sm:$0xff]
    %v2125 = vld [vmem:[#allocation14 + $0x1bf0] sm:$0xff]
    %v2126 = vld [vmem:[#allocation14 + $0x1bf8] sm:$0xff]
    %v2127 = vld [vmem:[#allocation14 + $0x1c00] sm:$0xff]
    %v2128 = vld [vmem:[#allocation14 + $0x1c08] sm:$0xff]
    %v2129 = vld [vmem:[#allocation14 + $0x1c10] sm:$0xff]
    %v2130 = vld [vmem:[#allocation14 + $0x1c18] sm:$0xff]
    %v2131 = vld [vmem:[#allocation14 + $0x1c20] sm:$0xff]
    %v2132 = vld [vmem:[#allocation14 + $0x1c28] sm:$0xff]
    %v2133 = vld [vmem:[#allocation14 + $0x1c30] sm:$0xff]
    %v2134 = vld [vmem:[#allocation14 + $0x1c38] sm:$0xff]
    %v2135 = vld [vmem:[#allocation14 + $0x1c40] sm:$0xff]
    %v2136 = vld [vmem:[#allocation14 + $0x1c48] sm:$0xff]
    %v2137 = vld [vmem:[#allocation14 + $0x1c50] sm:$0xff]
    %v2138 = vld [vmem:[#allocation14 + $0x1c58] sm:$0xff]
    %v2139 = vld [vmem:[#allocation14 + $0x1c60] sm:$0xff]
    %v2140 = vld [vmem:[#allocation14 + $0x1c68] sm:$0xff]
    %v2141 = vld [vmem:[#allocation14 + $0x1c70] sm:$0xff]
    %v2142 = vld [vmem:[#allocation14 + $0x1c78] sm:$0xff]
    %v2143 = vld [vmem:[#allocation14 + $0x1c80] sm:$0xff]
    %v2144 = vld [vmem:[#allocation14 + $0x1c88] sm:$0xff]
    %v2145 = vld [vmem:[#allocation14 + $0x1c90] sm:$0xff]
    %v2146 = vld [vmem:[#allocation14 + $0x1c98] sm:$0xff]
    %v2147 = vld [vmem:[#allocation14 + $0x1ca0] sm:$0xff]
    %v2148 = vld [vmem:[#allocation14 + $0x1ca8] sm:$0xff]
    %v2149 = vld [vmem:[#allocation14 + $0x1cb0] sm:$0xff]
    %v2150 = vld [vmem:[#allocation14 + $0x1cb8] sm:$0xff]
    %v2151 = vld [vmem:[#allocation14 + $0x1cc0] sm:$0xff]
    %v2152 = vld [vmem:[#allocation14 + $0x1cc8] sm:$0xff]
    %v2153 = vld [vmem:[#allocation14 + $0x1cd0] sm:$0xff]
    %v2154 = vld [vmem:[#allocation14 + $0x1cd8] sm:$0xff]
    %v2155 = vld [vmem:[#allocation14 + $0x1ce0] sm:$0xff]
    %v2156 = vld [vmem:[#allocation14 + $0x1ce8] sm:$0xff]
    %v2157 = vld [vmem:[#allocation14 + $0x1cf0] sm:$0xff]
    %v2158 = vld [vmem:[#allocation14 + $0x1cf8] sm:$0xff]
    %v2159 = vld [vmem:[#allocation14 + $0x1d00] sm:$0xff]
    %v2160 = vld [vmem:[#allocation14 + $0x1d08] sm:$0xff]
    %v2161 = vld [vmem:[#allocation14 + $0x1d10] sm:$0xff]
    %v2162 = vld [vmem:[#allocation14 + $0x1d18] sm:$0xff]
    %v2163 = vld [vmem:[#allocation14 + $0x1d20] sm:$0xff]
    %v2164 = vld [vmem:[#allocation14 + $0x1d28] sm:$0xff]
    %v2165 = vld [vmem:[#allocation14 + $0x1d30] sm:$0xff]
    %v2166 = vld [vmem:[#allocation14 + $0x1d38] sm:$0xff]
    %v2167 = vld [vmem:[#allocation14 + $0x1d40] sm:$0xff]
    %v2168 = vld [vmem:[#allocation14 + $0x1d48] sm:$0xff]
    %v2169 = vld [vmem:[#allocation14 + $0x1d50] sm:$0xff]
    %v2170 = vld [vmem:[#allocation14 + $0x1d58] sm:$0xff]
    %v2171 = vld [vmem:[#allocation14 + $0x1d60] sm:$0xff]
    %v2172 = vld [vmem:[#allocation14 + $0x1d68] sm:$0xff]
    %v2173 = vld [vmem:[#allocation14 + $0x1d70] sm:$0xff]
    %v2174 = vld [vmem:[#allocation14 + $0x1d78] sm:$0xff]
    %v2175 = vld [vmem:[#allocation14 + $0x1d80] sm:$0xff]
    %v2176 = vld [vmem:[#allocation14 + $0x1d88] sm:$0xff]
    %v2177 = vld [vmem:[#allocation14 + $0x1d90] sm:$0xff]
    %v2178 = vld [vmem:[#allocation14 + $0x1d98] sm:$0xff]
    %v2179 = vld [vmem:[#allocation14 + $0x1da0] sm:$0xff]
    %v2180 = vld [vmem:[#allocation14 + $0x1da8] sm:$0xff]
    %v2181 = vld [vmem:[#allocation14 + $0x1db0] sm:$0xff]
    %v2182 = vld [vmem:[#allocation14 + $0x1db8] sm:$0xff]
    %v2183 = vld [vmem:[#allocation14 + $0x1dc0] sm:$0xff]
    %v2184 = vld [vmem:[#allocation14 + $0x1dc8] sm:$0xff]
    %v2185 = vld [vmem:[#allocation14 + $0x1dd0] sm:$0xff]
    %v2186 = vld [vmem:[#allocation14 + $0x1dd8] sm:$0xff]
    %v2187 = vld [vmem:[#allocation14 + $0x1de0] sm:$0xff]
    %v2188 = vld [vmem:[#allocation14 + $0x1de8] sm:$0xff]
    %v2189 = vld [vmem:[#allocation14 + $0x1df0] sm:$0xff]
    %v2190 = vld [vmem:[#allocation14 + $0x1df8] sm:$0xff]
    %v2191 = vld [vmem:[#allocation14 + $0x1e00] sm:$0xff]
    %v2192 = vld [vmem:[#allocation14 + $0x1e08] sm:$0xff]
    %v2193 = vld [vmem:[#allocation14 + $0x1e10] sm:$0xff]
    %v2194 = vld [vmem:[#allocation14 + $0x1e18] sm:$0xff]
    %v2195 = vld [vmem:[#allocation14 + $0x1e20] sm:$0xff]
    %v2196 = vld [vmem:[#allocation14 + $0x1e28] sm:$0xff]
    %v2197 = vld [vmem:[#allocation14 + $0x1e30] sm:$0xff]
    %v2198 = vld [vmem:[#allocation14 + $0x1e38] sm:$0xff]
    %v2199 = vld [vmem:[#allocation14 + $0x1e40] sm:$0xff]
    %v2200 = vld [vmem:[#allocation14 + $0x1e48] sm:$0xff]
    %v2201 = vld [vmem:[#allocation14 + $0x1e50] sm:$0xff]
    %v2202 = vld [vmem:[#allocation14 + $0x1e58] sm:$0xff]
    %v2203 = vld [vmem:[#allocation14 + $0x1e60] sm:$0xff]
    %v2204 = vld [vmem:[#allocation14 + $0x1e68] sm:$0xff]
    %v2205 = vld [vmem:[#allocation14 + $0x1e70] sm:$0xff]
    %v2206 = vld [vmem:[#allocation14 + $0x1e78] sm:$0xff]
    %v2207 = vld [vmem:[#allocation14 + $0x1e80] sm:$0xff]
    %v2208 = vld [vmem:[#allocation14 + $0x1e88] sm:$0xff]
    %v2209 = vld [vmem:[#allocation14 + $0x1e90] sm:$0xff]
    %v2210 = vld [vmem:[#allocation14 + $0x1e98] sm:$0xff]
    %v2211 = vld [vmem:[#allocation14 + $0x1ea0] sm:$0xff]
    %v2212 = vld [vmem:[#allocation14 + $0x1ea8] sm:$0xff]
    %v2213 = vld [vmem:[#allocation14 + $0x1eb0] sm:$0xff]
    %v2214 = vld [vmem:[#allocation14 + $0x1eb8] sm:$0xff]
    %v2215 = vld [vmem:[#allocation14 + $0x1ec0] sm:$0xff]
    %v2216 = vld [vmem:[#allocation14 + $0x1ec8] sm:$0xff]
    %v2217 = vld [vmem:[#allocation14 + $0x1ed0] sm:$0xff]
    %v2218 = vld [vmem:[#allocation14 + $0x1ed8] sm:$0xff]
    %v2219 = vld [vmem:[#allocation14 + $0x1ee0] sm:$0xff]
    %v2220 = vld [vmem:[#allocation14 + $0x1ee8] sm:$0xff]
    %v2221 = vld [vmem:[#allocation14 + $0x1ef0] sm:$0xff]
    %v2222 = vld [vmem:[#allocation14 + $0x1ef8] sm:$0xff]
    %v2223 = vld [vmem:[#allocation14 + $0x1f00] sm:$0xff]
    %v2224 = vld [vmem:[#allocation14 + $0x1f08] sm:$0xff]
    %v2225 = vld [vmem:[#allocation14 + $0x1f10] sm:$0xff]
    %v2226 = vld [vmem:[#allocation14 + $0x1f18] sm:$0xff]
    %v2227 = vld [vmem:[#allocation14 + $0x1f20] sm:$0xff]
    %v2228 = vld [vmem:[#allocation14 + $0x1f28] sm:$0xff]
    %v2229 = vld [vmem:[#allocation14 + $0x1f30] sm:$0xff]
    %v2230 = vld [vmem:[#allocation14 + $0x1f38] sm:$0xff]
    %v2231 = vld [vmem:[#allocation14 + $0x1f40] sm:$0xff]
    %v2232 = vld [vmem:[#allocation14 + $0x1f48] sm:$0xff]
    %v2233 = vld [vmem:[#allocation14 + $0x1f50] sm:$0xff]
    %v2234 = vld [vmem:[#allocation14 + $0x1f58] sm:$0xff]
    %v2235 = vld [vmem:[#allocation14 + $0x1f60] sm:$0xff]
    %v2236 = vld [vmem:[#allocation14 + $0x1f68] sm:$0xff]
    %v2237 = vld [vmem:[#allocation14 + $0x1f70] sm:$0xff]
    %v2238 = vld [vmem:[#allocation14 + $0x1f78] sm:$0xff]
    %v2239 = vld [vmem:[#allocation14 + $0x1f80] sm:$0xff]
    %v2240 = vld [vmem:[#allocation14 + $0x1f88] sm:$0xff]
    %v2241 = vld [vmem:[#allocation14 + $0x1f90] sm:$0xff]
    %v2242 = vld [vmem:[#allocation14 + $0x1f98] sm:$0xff]
    %v2243 = vld [vmem:[#allocation14 + $0x1fa0] sm:$0xff]
    %v2244 = vld [vmem:[#allocation14 + $0x1fa8] sm:$0xff]
    %v2245 = vld [vmem:[#allocation14 + $0x1fb0] sm:$0xff]
    %v2246 = vld [vmem:[#allocation14 + $0x1fb8] sm:$0xff]
    %v2247 = vld [vmem:[#allocation14 + $0x1fc0] sm:$0xff]
    %v2248 = vld [vmem:[#allocation14 + $0x1fc8] sm:$0xff]
    %v2249 = vld [vmem:[#allocation14 + $0x1fd0] sm:$0xff]
    %v2250 = vld [vmem:[#allocation14 + $0x1fd8] sm:$0xff]
    %v2251 = vld [vmem:[#allocation14 + $0x1fe0] sm:$0xff]
    %v2252 = vld [vmem:[#allocation14 + $0x1fe8] sm:$0xff]
    %v2253 = vld [vmem:[#allocation14 + $0x1ff0] sm:$0xff]
    %v2254 = vld [vmem:[#allocation14 + $0x1ff8] sm:$0xff]
    %v2255 = vld [vmem:[#allocation17] sm:$0xff]
    %v2256 = vld [vmem:[#allocation17 + $0x8] sm:$0xff]
    %v2257 = vld [vmem:[#allocation17 + $0x10] sm:$0xff]
    %v2258 = vld [vmem:[#allocation17 + $0x18] sm:$0xff]
    %v2259 = vld [vmem:[#allocation17 + $0x20] sm:$0xff]
    %v2260 = vld [vmem:[#allocation17 + $0x28] sm:$0xff]
    %v2261 = vld [vmem:[#allocation17 + $0x30] sm:$0xff]
    %v2262 = vld [vmem:[#allocation17 + $0x38] sm:$0xff]
    %v2264 = vsel %vm270, %v328, 0
    %2266 = vmatprep.subr.mxu0 0.0
    %2267 = vmatpush1.msra.mxu0 0.0
    %2268 = vmatprep.subr.mxu0 0.0
    %2269 = vmatpush1.msra.mxu0 0.0
    %2270 = vmatprep.subr.mxu0 0.0
    %2271 = vmatpush1.msra.mxu0 0.0
    %2272 = vmatprep.subr.mxu0 0.0
    %2273 = vmatpush1.msra.mxu0 0.0
    %2274 = vmatprep.subr.mxu0 0.0
    %2275 = vmatpush1.msra.mxu0 0.0
    %2276 = vmatprep.subr.mxu0 0.0
    %2277 = vmatpush1.msra.mxu0 0.0
    %2278 = vmatprep.subr.mxu0 0.0
    %2279 = vmatpush1.msra.mxu0 0.0
    %2280 = vmatprep.subr.mxu0 0.0
    %2281 = vmatpush1.msra.mxu0 0.0
    %2282 = vmatprep.subr.mxu0 0.0
    %2283 = vmatpush1.msra.mxu0 0.0
    %2284 = vmatprep.subr.mxu0 0.0
    %2285 = vmatpush1.msra.mxu0 0.0
    %2286 = vmatprep.subr.mxu0 0.0
    %2287 = vmatpush1.msra.mxu0 0.0
    %2288 = vmatprep.subr.mxu0 0.0
    %2289 = vmatpush1.msra.mxu0 0.0
    %2290 = vmatprep.subr.mxu0 0.0
    %2291 = vmatpush1.msra.mxu0 0.0
    %2292 = vmatprep.subr.mxu0 0.0
    %2293 = vmatpush1.msra.mxu0 0.0
    %2294 = vmatprep.subr.mxu0 0.0
    %2295 = vmatpush1.msra.mxu0 0.0
    %2296 = vmatprep.subr.mxu0 %v2256
    %2297 = vmatpush1.msra.mxu0 %v2255
    %2298 = vmatprep.subr.mxu0 0.0
    %2299 = vmatpush2.msra.mxu0 0.0
    %2300 = vmatprep.subr.mxu0 0.0
    %2301 = vmatpush2.msra.mxu0 0.0
    %2302 = vmatprep.subr.mxu0 0.0
    %2303 = vmatpush2.msra.mxu0 0.0
    %2304 = vmatprep.subr.mxu0 0.0
    %2305 = vmatpush2.msra.mxu0 0.0
    %2306 = vmatprep.subr.mxu0 0.0
    %2307 = vmatpush2.msra.mxu0 0.0
    %2308 = vmatprep.subr.mxu0 0.0
    %2309 = vmatpush2.msra.mxu0 0.0
    %2310 = vmatprep.subr.mxu0 0.0
    %2311 = vmatpush2.msra.mxu0 0.0
    %2312 = vmatprep.subr.mxu0 0.0
    %2313 = vmatpush2.msra.mxu0 0.0
    %2314 = vmatprep.subr.mxu0 0.0
    %2315 = vmatpush2.msra.mxu0 0.0
    %2316 = vmatprep.subr.mxu0 0.0
    %2317 = vmatpush2.msra.mxu0 0.0
    %2318 = vmatprep.subr.mxu0 0.0
    %2319 = vmatpush2.msra.mxu0 0.0
    %2320 = vmatprep.subr.mxu0 0.0
    %2321 = vmatpush2.msra.mxu0 0.0
    %2322 = vmatprep.subr.mxu0 0.0
    %2323 = vmatpush2.msra.mxu0 0.0
    %2324 = vmatprep.subr.mxu0 0.0
    %2325 = vmatpush2.msra.mxu0 0.0
    %2326 = vmatprep.subr.mxu0 0.0
    %2327 = vmatpush2.msra.mxu0 0.0
    %2328 = vmatprep.subr.mxu0 0.0
    %2329 = vmatpush2.msra.mxu0 0.0
    %2330 = vmatprep.mubr.f32.mxu0 0.0
    %2331 = vmatmul.mubr.f32.gmra.mxu0 %v2264
    %v2332 = vpop.f32.mrf.mxu0
    %v2333 = vadd.f32 0.0, %v2332
    %v2334 = vpop.f32.mrf.mxu0
    %v2335 = vadd.f32 0.0, %v2334
    %2336 = vdwg.mxu0
    %2337 = vmatprep.subr.mxu0 0.0
    %2338 = vmatpush1.msra.mxu0 0.0
    %2339 = vmatprep.subr.mxu0 0.0
    %2340 = vmatpush1.msra.mxu0 0.0
    %2341 = vmatprep.subr.mxu0 0.0
    %2342 = vmatpush1.msra.mxu0 0.0
    %2343 = vmatprep.subr.mxu0 0.0
    %2344 = vmatpush1.msra.mxu0 0.0
    %2345 = vmatprep.subr.mxu0 0.0
    %2346 = vmatpush1.msra.mxu0 0.0
    %2347 = vmatprep.subr.mxu0 0.0
    %2348 = vmatpush1.msra.mxu0 0.0
    %2349 = vmatprep.subr.mxu0 0.0
    %2350 = vmatpush1.msra.mxu0 0.0
    %2351 = vmatprep.subr.mxu0 0.0
    %2352 = vmatpush1.msra.mxu0 0.0
    %2353 = vmatprep.subr.mxu0 0.0
    %2354 = vmatpush1.msra.mxu0 0.0
    %2355 = vmatprep.subr.mxu0 0.0
    %2356 = vmatpush1.msra.mxu0 0.0
    %2357 = vmatprep.subr.mxu0 0.0
    %2358 = vmatpush1.msra.mxu0 0.0
    %2359 = vmatprep.subr.mxu0 0.0
    %2360 = vmatpush1.msra.mxu0 0.0
    %2361 = vmatprep.subr.mxu0 0.0
    %2362 = vmatpush1.msra.mxu0 0.0
    %2363 = vmatprep.subr.mxu0 0.0
    %2364 = vmatpush1.msra.mxu0 0.0
    %2365 = vmatprep.subr.mxu0 0.0
    %2366 = vmatpush1.msra.mxu0 0.0
    %2367 = vmatprep.subr.mxu0 %v2258
    %2368 = vmatpush1.msra.mxu0 %v2257
    %2369 = vmatprep.subr.mxu0 0.0
    %2370 = vmatpush2.msra.mxu0 0.0
    %2371 = vmatprep.subr.mxu0 0.0
    %2372 = vmatpush2.msra.mxu0 0.0
    %2373 = vmatprep.subr.mxu0 0.0
    %2374 = vmatpush2.msra.mxu0 0.0
    %2375 = vmatprep.subr.mxu0 0.0
    %2376 = vmatpush2.msra.mxu0 0.0
    %2377 = vmatprep.subr.mxu0 0.0
    %2378 = vmatpush2.msra.mxu0 0.0
    %2379 = vmatprep.subr.mxu0 0.0
    %2380 = vmatpush2.msra.mxu0 0.0
    %2381 = vmatprep.subr.mxu0 0.0
    %2382 = vmatpush2.msra.mxu0 0.0
    %2383 = vmatprep.subr.mxu0 0.0
    %2384 = vmatpush2.msra.mxu0 0.0
    %2385 = vmatprep.subr.mxu0 0.0
    %2386 = vmatpush2.msra.mxu0 0.0
    %2387 = vmatprep.subr.mxu0 0.0
    %2388 = vmatpush2.msra.mxu0 0.0
    %2389 = vmatprep.subr.mxu0 0.0
    %2390 = vmatpush2.msra.mxu0 0.0
    %2391 = vmatprep.subr.mxu0 0.0
    %2392 = vmatpush2.msra.mxu0 0.0
    %2393 = vmatprep.subr.mxu0 0.0
    %2394 = vmatpush2.msra.mxu0 0.0
    %2395 = vmatprep.subr.mxu0 0.0
    %2396 = vmatpush2.msra.mxu0 0.0
    %2397 = vmatprep.subr.mxu0 0.0
    %2398 = vmatpush2.msra.mxu0 0.0
    %2399 = vmatprep.subr.mxu0 0.0
    %2400 = vmatpush2.msra.mxu0 0.0
    %2401 = vmatprep.mubr.f32.mxu0 0.0
    %2402 = vmatmul.mubr.f32.gmra.mxu0 %v2264
    %v2403 = vpop.f32.mrf.mxu0
    %v2404 = vadd.f32 0.0, %v2403
    %v2405 = vpop.f32.mrf.mxu0
    %v2406 = vadd.f32 0.0, %v2405
    %2407 = vdwg.mxu0
    %2408 = vmatprep.subr.mxu0 0.0
    %2409 = vmatpush1.msra.mxu0 0.0
    %2410 = vmatprep.subr.mxu0 0.0
    %2411 = vmatpush1.msra.mxu0 0.0
    %2412 = vmatprep.subr.mxu0 0.0
    %2413 = vmatpush1.msra.mxu0 0.0
    %2414 = vmatprep.subr.mxu0 0.0
    %2415 = vmatpush1.msra.mxu0 0.0
    %2416 = vmatprep.subr.mxu0 0.0
    %2417 = vmatpush1.msra.mxu0 0.0
    %2418 = vmatprep.subr.mxu0 0.0
    %2419 = vmatpush1.msra.mxu0 0.0
    %2420 = vmatprep.subr.mxu0 0.0
    %2421 = vmatpush1.msra.mxu0 0.0
    %2422 = vmatprep.subr.mxu0 0.0
    %2423 = vmatpush1.msra.mxu0 0.0
    %2424 = vmatprep.subr.mxu0 0.0
    %2425 = vmatpush1.msra.mxu0 0.0
    %2426 = vmatprep.subr.mxu0 0.0
    %2427 = vmatpush1.msra.mxu0 0.0
    %2428 = vmatprep.subr.mxu0 0.0
    %2429 = vmatpush1.msra.mxu0 0.0
    %2430 = vmatprep.subr.mxu0 0.0
    %2431 = vmatpush1.msra.mxu0 0.0
    %2432 = vmatprep.subr.mxu0 0.0
    %2433 = vmatpush1.msra.mxu0 0.0
    %2434 = vmatprep.subr.mxu0 0.0
    %2435 = vmatpush1.msra.mxu0 0.0
    %2436 = vmatprep.subr.mxu0 0.0
    %2437 = vmatpush1.msra.mxu0 0.0
    %2438 = vmatprep.subr.mxu0 %v2260
    %2439 = vmatpush1.msra.mxu0 %v2259
    %2440 = vmatprep.subr.mxu0 0.0
    %2441 = vmatpush2.msra.mxu0 0.0
    %2442 = vmatprep.subr.mxu0 0.0
    %2443 = vmatpush2.msra.mxu0 0.0
    %2444 = vmatprep.subr.mxu0 0.0
    %2445 = vmatpush2.msra.mxu0 0.0
    %2446 = vmatprep.subr.mxu0 0.0
    %2447 = vmatpush2.msra.mxu0 0.0
    %2448 = vmatprep.subr.mxu0 0.0
    %2449 = vmatpush2.msra.mxu0 0.0
    %2450 = vmatprep.subr.mxu0 0.0
    %2451 = vmatpush2.msra.mxu0 0.0
    %2452 = vmatprep.subr.mxu0 0.0
    %2453 = vmatpush2.msra.mxu0 0.0
    %2454 = vmatprep.subr.mxu0 0.0
    %2455 = vmatpush2.msra.mxu0 0.0
    %2456 = vmatprep.subr.mxu0 0.0
    %2457 = vmatpush2.msra.mxu0 0.0
    %2458 = vmatprep.subr.mxu0 0.0
    %2459 = vmatpush2.msra.mxu0 0.0
    %2460 = vmatprep.subr.mxu0 0.0
    %2461 = vmatpush2.msra.mxu0 0.0
    %2462 = vmatprep.subr.mxu0 0.0
    %2463 = vmatpush2.msra.mxu0 0.0
    %2464 = vmatprep.subr.mxu0 0.0
    %2465 = vmatpush2.msra.mxu0 0.0
    %2466 = vmatprep.subr.mxu0 0.0
    %2467 = vmatpush2.msra.mxu0 0.0
    %2468 = vmatprep.subr.mxu0 0.0
    %2469 = vmatpush2.msra.mxu0 0.0
    %2470 = vmatprep.subr.mxu0 0.0
    %2471 = vmatpush2.msra.mxu0 0.0
    %2472 = vmatprep.mubr.f32.mxu0 0.0
    %2473 = vmatmul.mubr.f32.gmra.mxu0 %v2264
    %v2474 = vpop.f32.mrf.mxu0
    %v2475 = vadd.f32 0.0, %v2474
    %v2476 = vpop.f32.mrf.mxu0
    %v2477 = vadd.f32 0.0, %v2476
    %2478 = vdwg.mxu0
    %2479 = vmatprep.subr.mxu0 0.0
    %2480 = vmatpush1.msra.mxu0 0.0
    %2481 = vmatprep.subr.mxu0 0.0
    %2482 = vmatpush1.msra.mxu0 0.0
    %2483 = vmatprep.subr.mxu0 0.0
    %2484 = vmatpush1.msra.mxu0 0.0
    %2485 = vmatprep.subr.mxu0 0.0
    %2486 = vmatpush1.msra.mxu0 0.0
    %2487 = vmatprep.subr.mxu0 0.0
    %2488 = vmatpush1.msra.mxu0 0.0
    %2489 = vmatprep.subr.mxu0 0.0
    %2490 = vmatpush1.msra.mxu0 0.0
    %2491 = vmatprep.subr.mxu0 0.0
    %2492 = vmatpush1.msra.mxu0 0.0
    %2493 = vmatprep.subr.mxu0 0.0
    %2494 = vmatpush1.msra.mxu0 0.0
    %2495 = vmatprep.subr.mxu0 0.0
    %2496 = vmatpush1.msra.mxu0 0.0
    %2497 = vmatprep.subr.mxu0 0.0
    %2498 = vmatpush1.msra.mxu0 0.0
    %2499 = vmatprep.subr.mxu0 0.0
    %2500 = vmatpush1.msra.mxu0 0.0
    %2501 = vmatprep.subr.mxu0 0.0
    %2502 = vmatpush1.msra.mxu0 0.0
    %2503 = vmatprep.subr.mxu0 0.0
    %2504 = vmatpush1.msra.mxu0 0.0
    %2505 = vmatprep.subr.mxu0 0.0
    %2506 = vmatpush1.msra.mxu0 0.0
    %2507 = vmatprep.subr.mxu0 0.0
    %2508 = vmatpush1.msra.mxu0 0.0
    %2509 = vmatprep.subr.mxu0 %v2262
    %2510 = vmatpush1.msra.mxu0 %v2261
    %2511 = vmatprep.subr.mxu0 0.0
    %2512 = vmatpush2.msra.mxu0 0.0
    %2513 = vmatprep.subr.mxu0 0.0
    %2514 = vmatpush2.msra.mxu0 0.0
    %2515 = vmatprep.subr.mxu0 0.0
    %2516 = vmatpush2.msra.mxu0 0.0
    %2517 = vmatprep.subr.mxu0 0.0
    %2518 = vmatpush2.msra.mxu0 0.0
    %2519 = vmatprep.subr.mxu0 0.0
    %2520 = vmatpush2.msra.mxu0 0.0
    %2521 = vmatprep.subr.mxu0 0.0
    %2522 = vmatpush2.msra.mxu0 0.0
    %2523 = vmatprep.subr.mxu0 0.0
    %2524 = vmatpush2.msra.mxu0 0.0
    %2525 = vmatprep.subr.mxu0 0.0
    %2526 = vmatpush2.msra.mxu0 0.0
    %2527 = vmatprep.subr.mxu0 0.0
    %2528 = vmatpush2.msra.mxu0 0.0
    %2529 = vmatprep.subr.mxu0 0.0
    %2530 = vmatpush2.msra.mxu0 0.0
    %2531 = vmatprep.subr.mxu0 0.0
    %2532 = vmatpush2.msra.mxu0 0.0
    %2533 = vmatprep.subr.mxu0 0.0
    %2534 = vmatpush2.msra.mxu0 0.0
    %2535 = vmatprep.subr.mxu0 0.0
    %2536 = vmatpush2.msra.mxu0 0.0
    %2537 = vmatprep.subr.mxu0 0.0
    %2538 = vmatpush2.msra.mxu0 0.0
    %2539 = vmatprep.subr.mxu0 0.0
    %2540 = vmatpush2.msra.mxu0 0.0
    %2541 = vmatprep.subr.mxu0 0.0
    %2542 = vmatpush2.msra.mxu0 0.0
    %2543 = vmatprep.mubr.f32.mxu0 0.0
    %2544 = vmatmul.mubr.f32.gmra.mxu0 %v2264
    %v2545 = vpop.f32.mrf.mxu0
    %v2546 = vadd.f32 0.0, %v2545
    %v2547 = vpop.f32.mrf.mxu0
    %v2548 = vadd.f32 0.0, %v2547
    %2549 = vdwg.mxu0
    %v2550 = vld [vmem:[#allocation16] sm:$0xff]
    %v2552 = vlaneseq
    %v2553 = vshrl.u32 %v2552, 7
    %v2554 = vsub.s32 0, %v2553
    %v2555 = vrot.slane %v2550, %v2554
    %v2556 = vlaneseq
    %v2557 = vshrl.u32 %v2556, 7
    %v2558 = vsub.s32 1, %v2557
    %v2559 = vrot.slane %v2550, %v2558
    %v2560 = vlaneseq
    %v2561 = vshrl.u32 %v2560, 7
    %v2562 = vsub.s32 2, %v2561
    %v2563 = vrot.slane %v2550, %v2562
    %v2564 = vlaneseq
    %v2565 = vshrl.u32 %v2564, 7
    %v2566 = vsub.s32 3, %v2565
    %v2567 = vrot.slane %v2550, %v2566
    %v2568 = vlaneseq
    %v2569 = vshrl.u32 %v2568, 7
    %v2570 = vsub.s32 4, %v2569
    %v2571 = vrot.slane %v2550, %v2570
    %v2572 = vlaneseq
    %v2573 = vshrl.u32 %v2572, 7
    %v2574 = vsub.s32 5, %v2573
    %v2575 = vrot.slane %v2550, %v2574
    %v2576 = vlaneseq
    %v2577 = vshrl.u32 %v2576, 7
    %v2578 = vsub.s32 6, %v2577
    %v2579 = vrot.slane %v2550, %v2578
    %v2580 = vlaneseq
    %v2581 = vshrl.u32 %v2580, 7
    %v2582 = vsub.s32 7, %v2581
    %v2583 = vrot.slane %v2550, %v2582
    %2592 = vmatprep.subr.mxu0 %v1352
    %2593 = vmatpush1.msra.mxu0 %v1351
    %2594 = vmatprep.subr.mxu0 %v1344
    %2595 = vmatpush1.msra.mxu0 %v1343
    %2596 = vmatprep.subr.mxu0 %v1336
    %2597 = vmatpush1.msra.mxu0 %v1335
    %2598 = vmatprep.subr.mxu0 %v1328
    %2599 = vmatpush1.msra.mxu0 %v1327
    %2600 = vmatprep.subr.mxu0 %v1320
    %2601 = vmatpush1.msra.mxu0 %v1319
    %2602 = vmatprep.subr.mxu0 %v1312
    %2603 = vmatpush1.msra.mxu0 %v1311
    %2604 = vmatprep.subr.mxu0 %v1304
    %2605 = vmatpush1.msra.mxu0 %v1303
    %2606 = vmatprep.subr.mxu0 %v1296
    %2607 = vmatpush1.msra.mxu0 %v1295
    %2608 = vmatprep.subr.mxu0 %v1288
    %2609 = vmatpush1.msra.mxu0 %v1287
    %2610 = vmatprep.subr.mxu0 %v1280
    %2611 = vmatpush1.msra.mxu0 %v1279
    %2612 = vmatprep.subr.mxu0 %v1272
    %2613 = vmatpush1.msra.mxu0 %v1271
    %2614 = vmatprep.subr.mxu0 %v1264
    %2615 = vmatpush1.msra.mxu0 %v1263
    %2616 = vmatprep.subr.mxu0 %v1256
    %2617 = vmatpush1.msra.mxu0 %v1255
    %2618 = vmatprep.subr.mxu0 %v1248
    %2619 = vmatpush1.msra.mxu0 %v1247
    %2620 = vmatprep.subr.mxu0 %v1240
    %2621 = vmatpush1.msra.mxu0 %v1239
    %2622 = vmatprep.subr.mxu0 %v1232
    %2623 = vmatpush1.msra.mxu0 %v1231
    %2624 = vmatprep.subr.mxu0 %v1480
    %2625 = vmatpush2.msra.mxu0 %v1479
    %2626 = vmatprep.subr.mxu0 %v1472
    %2627 = vmatpush2.msra.mxu0 %v1471
    %2628 = vmatprep.subr.mxu0 %v1464
    %2629 = vmatpush2.msra.mxu0 %v1463
    %2630 = vmatprep.subr.mxu0 %v1456
    %2631 = vmatpush2.msra.mxu0 %v1455
    %2632 = vmatprep.subr.mxu0 %v1448
    %2633 = vmatpush2.msra.mxu0 %v1447
    %2634 = vmatprep.subr.mxu0 %v1440
    %2635 = vmatpush2.msra.mxu0 %v1439
    %2636 = vmatprep.subr.mxu0 %v1432
    %2637 = vmatpush2.msra.mxu0 %v1431
    %2638 = vmatprep.subr.mxu0 %v1424
    %2639 = vmatpush2.msra.mxu0 %v1423
    %2640 = vmatprep.subr.mxu0 %v1416
    %2641 = vmatpush2.msra.mxu0 %v1415
    %2642 = vmatprep.subr.mxu0 %v1408
    %2643 = vmatpush2.msra.mxu0 %v1407
    %2644 = vmatprep.subr.mxu0 %v1400
    %2645 = vmatpush2.msra.mxu0 %v1399
    %2646 = vmatprep.subr.mxu0 %v1392
    %2647 = vmatpush2.msra.mxu0 %v1391
    %2648 = vmatprep.subr.mxu0 %v1384
    %2649 = vmatpush2.msra.mxu0 %v1383
    %2650 = vmatprep.subr.mxu0 %v1376
    %2651 = vmatpush2.msra.mxu0 %v1375
    %2652 = vmatprep.subr.mxu0 %v1368
    %2653 = vmatpush2.msra.mxu0 %v1367
    %2654 = vmatprep.subr.mxu0 %v1360
    %2655 = vmatpush2.msra.mxu0 %v1359
    %2656 = vmatprep.mubr.f32.mxu0 %v1224
    %2657 = vmatmul.mubr.f32.gmra.mxu0 %v1223
    %v2658 = vpop.f32.mrf.mxu0
    %v2659 = vadd.f32 %v2555, %v2658
    %v2660 = vpop.f32.mrf.mxu0
    %v2661 = vadd.f32 %v2559, %v2660
    %2662 = vdwg.mxu0
    %2663 = vmatprep.subr.mxu0 %v1608
    %2664 = vmatpush1.msra.mxu0 %v1607
    %2665 = vmatprep.subr.mxu0 %v1600
    %2666 = vmatpush1.msra.mxu0 %v1599
    %2667 = vmatprep.subr.mxu0 %v1592
    %2668 = vmatpush1.msra.mxu0 %v1591
    %2669 = vmatprep.subr.mxu0 %v1584
    %2670 = vmatpush1.msra.mxu0 %v1583
    %2671 = vmatprep.subr.mxu0 %v1576
    %2672 = vmatpush1.msra.mxu0 %v1575
    %2673 = vmatprep.subr.mxu0 %v1568
    %2674 = vmatpush1.msra.mxu0 %v1567
    %2675 = vmatprep.subr.mxu0 %v1560
    %2676 = vmatpush1.msra.mxu0 %v1559
    %2677 = vmatprep.subr.mxu0 %v1552
    %2678 = vmatpush1.msra.mxu0 %v1551
    %2679 = vmatprep.subr.mxu0 %v1544
    %2680 = vmatpush1.msra.mxu0 %v1543
    %2681 = vmatprep.subr.mxu0 %v1536
    %2682 = vmatpush1.msra.mxu0 %v1535
    %2683 = vmatprep.subr.mxu0 %v1528
    %2684 = vmatpush1.msra.mxu0 %v1527
    %2685 = vmatprep.subr.mxu0 %v1520
    %2686 = vmatpush1.msra.mxu0 %v1519
    %2687 = vmatprep.subr.mxu0 %v1512
    %2688 = vmatpush1.msra.mxu0 %v1511
    %2689 = vmatprep.subr.mxu0 %v1504
    %2690 = vmatpush1.msra.mxu0 %v1503
    %2691 = vmatprep.subr.mxu0 %v1496
    %2692 = vmatpush1.msra.mxu0 %v1495
    %2693 = vmatprep.subr.mxu0 %v1488
    %2694 = vmatpush1.msra.mxu0 %v1487
    %2695 = vmatprep.subr.mxu0 %v1736
    %2696 = vmatpush2.msra.mxu0 %v1735
    %2697 = vmatprep.subr.mxu0 %v1728
    %2698 = vmatpush2.msra.mxu0 %v1727
    %2699 = vmatprep.subr.mxu0 %v1720
    %2700 = vmatpush2.msra.mxu0 %v1719
    %2701 = vmatprep.subr.mxu0 %v1712
    %2702 = vmatpush2.msra.mxu0 %v1711
    %2703 = vmatprep.subr.mxu0 %v1704
    %2704 = vmatpush2.msra.mxu0 %v1703
    %2705 = vmatprep.subr.mxu0 %v1696
    %2706 = vmatpush2.msra.mxu0 %v1695
    %2707 = vmatprep.subr.mxu0 %v1688
    %2708 = vmatpush2.msra.mxu0 %v1687
    %2709 = vmatprep.subr.mxu0 %v1680
    %2710 = vmatpush2.msra.mxu0 %v1679
    %2711 = vmatprep.subr.mxu0 %v1672
    %2712 = vmatpush2.msra.mxu0 %v1671
    %2713 = vmatprep.subr.mxu0 %v1664
    %2714 = vmatpush2.msra.mxu0 %v1663
    %2715 = vmatprep.subr.mxu0 %v1656
    %2716 = vmatpush2.msra.mxu0 %v1655
    %2717 = vmatprep.subr.mxu0 %v1648
    %2718 = vmatpush2.msra.mxu0 %v1647
    %2719 = vmatprep.subr.mxu0 %v1640
    %2720 = vmatpush2.msra.mxu0 %v1639
    %2721 = vmatprep.subr.mxu0 %v1632
    %2722 = vmatpush2.msra.mxu0 %v1631
    %2723 = vmatprep.subr.mxu0 %v1624
    %2724 = vmatpush2.msra.mxu0 %v1623
    %2725 = vmatprep.subr.mxu0 %v1616
    %2726 = vmatpush2.msra.mxu0 %v1615
    %2727 = vmatprep.mubr.f32.mxu0 %v1226
    %2728 = vmatmul.mubr.f32.gmra.mxu0 %v1225
    %v2729 = vpop.f32.mrf.mxu0
    %v2730 = vadd.f32 %v2659, %v2729
    %v2731 = vpop.f32.mrf.mxu0
    %v2732 = vadd.f32 %v2661, %v2731
    %2733 = vdwg.mxu0
    %2734 = vmatprep.subr.mxu0 %v1864
    %2735 = vmatpush1.msra.mxu0 %v1863
    %2736 = vmatprep.subr.mxu0 %v1856
    %2737 = vmatpush1.msra.mxu0 %v1855
    %2738 = vmatprep.subr.mxu0 %v1848
    %2739 = vmatpush1.msra.mxu0 %v1847
    %2740 = vmatprep.subr.mxu0 %v1840
    %2741 = vmatpush1.msra.mxu0 %v1839
    %2742 = vmatprep.subr.mxu0 %v1832
    %2743 = vmatpush1.msra.mxu0 %v1831
    %2744 = vmatprep.subr.mxu0 %v1824
    %2745 = vmatpush1.msra.mxu0 %v1823
    %2746 = vmatprep.subr.mxu0 %v1816
    %2747 = vmatpush1.msra.mxu0 %v1815
    %2748 = vmatprep.subr.mxu0 %v1808
    %2749 = vmatpush1.msra.mxu0 %v1807
    %2750 = vmatprep.subr.mxu0 %v1800
    %2751 = vmatpush1.msra.mxu0 %v1799
    %2752 = vmatprep.subr.mxu0 %v1792
    %2753 = vmatpush1.msra.mxu0 %v1791
    %2754 = vmatprep.subr.mxu0 %v1784
    %2755 = vmatpush1.msra.mxu0 %v1783
    %2756 = vmatprep.subr.mxu0 %v1776
    %2757 = vmatpush1.msra.mxu0 %v1775
    %2758 = vmatprep.subr.mxu0 %v1768
    %2759 = vmatpush1.msra.mxu0 %v1767
    %2760 = vmatprep.subr.mxu0 %v1760
    %2761 = vmatpush1.msra.mxu0 %v1759
    %2762 = vmatprep.subr.mxu0 %v1752
    %2763 = vmatpush1.msra.mxu0 %v1751
    %2764 = vmatprep.subr.mxu0 %v1744
    %2765 = vmatpush1.msra.mxu0 %v1743
    %2766 = vmatprep.subr.mxu0 %v1992
    %2767 = vmatpush2.msra.mxu0 %v1991
    %2768 = vmatprep.subr.mxu0 %v1984
    %2769 = vmatpush2.msra.mxu0 %v1983
    %2770 = vmatprep.subr.mxu0 %v1976
    %2771 = vmatpush2.msra.mxu0 %v1975
    %2772 = vmatprep.subr.mxu0 %v1968
    %2773 = vmatpush2.msra.mxu0 %v1967
    %2774 = vmatprep.subr.mxu0 %v1960
    %2775 = vmatpush2.msra.mxu0 %v1959
    %2776 = vmatprep.subr.mxu0 %v1952
    %2777 = vmatpush2.msra.mxu0 %v1951
    %2778 = vmatprep.subr.mxu0 %v1944
    %2779 = vmatpush2.msra.mxu0 %v1943
    %2780 = vmatprep.subr.mxu0 %v1936
    %2781 = vmatpush2.msra.mxu0 %v1935
    %2782 = vmatprep.subr.mxu0 %v1928
    %2783 = vmatpush2.msra.mxu0 %v1927
    %2784 = vmatprep.subr.mxu0 %v1920
    %2785 = vmatpush2.msra.mxu0 %v1919
    %2786 = vmatprep.subr.mxu0 %v1912
    %2787 = vmatpush2.msra.mxu0 %v1911
    %2788 = vmatprep.subr.mxu0 %v1904
    %2789 = vmatpush2.msra.mxu0 %v1903
    %2790 = vmatprep.subr.mxu0 %v1896
    %2791 = vmatpush2.msra.mxu0 %v1895
    %2792 = vmatprep.subr.mxu0 %v1888
    %2793 = vmatpush2.msra.mxu0 %v1887
    %2794 = vmatprep.subr.mxu0 %v1880
    %2795 = vmatpush2.msra.mxu0 %v1879
    %2796 = vmatprep.subr.mxu0 %v1872
    %2797 = vmatpush2.msra.mxu0 %v1871
    %2798 = vmatprep.mubr.f32.mxu0 %v1228
    %2799 = vmatmul.mubr.f32.gmra.mxu0 %v1227
    %v2800 = vpop.f32.mrf.mxu0
    %v2801 = vadd.f32 %v2730, %v2800
    %v2802 = vpop.f32.mrf.mxu0
    %v2803 = vadd.f32 %v2732, %v2802
    %2804 = vdwg.mxu0
    %2805 = vmatprep.subr.mxu0 %v2120
    %2806 = vmatpush1.msra.mxu0 %v2119
    %2807 = vmatprep.subr.mxu0 %v2112
    %2808 = vmatpush1.msra.mxu0 %v2111
    %2809 = vmatprep.subr.mxu0 %v2104
    %2810 = vmatpush1.msra.mxu0 %v2103
    %2811 = vmatprep.subr.mxu0 %v2096
    %2812 = vmatpush1.msra.mxu0 %v2095
    %2813 = vmatprep.subr.mxu0 %v2088
    %2814 = vmatpush1.msra.mxu0 %v2087
    %2815 = vmatprep.subr.mxu0 %v2080
    %2816 = vmatpush1.msra.mxu0 %v2079
    %2817 = vmatprep.subr.mxu0 %v2072
    %2818 = vmatpush1.msra.mxu0 %v2071
    %2819 = vmatprep.subr.mxu0 %v2064
    %2820 = vmatpush1.msra.mxu0 %v2063
    %2821 = vmatprep.subr.mxu0 %v2056
    %2822 = vmatpush1.msra.mxu0 %v2055
    %2823 = vmatprep.subr.mxu0 %v2048
    %2824 = vmatpush1.msra.mxu0 %v2047
    %2825 = vmatprep.subr.mxu0 %v2040
    %2826 = vmatpush1.msra.mxu0 %v2039
    %2827 = vmatprep.subr.mxu0 %v2032
    %2828 = vmatpush1.msra.mxu0 %v2031
    %2829 = vmatprep.subr.mxu0 %v2024
    %2830 = vmatpush1.msra.mxu0 %v2023
    %2831 = vmatprep.subr.mxu0 %v2016
    %2832 = vmatpush1.msra.mxu0 %v2015
    %2833 = vmatprep.subr.mxu0 %v2008
    %2834 = vmatpush1.msra.mxu0 %v2007
    %2835 = vmatprep.subr.mxu0 %v2000
    %2836 = vmatpush1.msra.mxu0 %v1999
    %2837 = vmatprep.subr.mxu0 %v2248
    %2838 = vmatpush2.msra.mxu0 %v2247
    %2839 = vmatprep.subr.mxu0 %v2240
    %2840 = vmatpush2.msra.mxu0 %v2239
    %2841 = vmatprep.subr.mxu0 %v2232
    %2842 = vmatpush2.msra.mxu0 %v2231
    %2843 = vmatprep.subr.mxu0 %v2224
    %2844 = vmatpush2.msra.mxu0 %v2223
    %2845 = vmatprep.subr.mxu0 %v2216
    %2846 = vmatpush2.msra.mxu0 %v2215
    %2847 = vmatprep.subr.mxu0 %v2208
    %2848 = vmatpush2.msra.mxu0 %v2207
    %2849 = vmatprep.subr.mxu0 %v2200
    %2850 = vmatpush2.msra.mxu0 %v2199
    %2851 = vmatprep.subr.mxu0 %v2192
    %2852 = vmatpush2.msra.mxu0 %v2191
    %2853 = vmatprep.subr.mxu0 %v2184
    %2854 = vmatpush2.msra.mxu0 %v2183
    %2855 = vmatprep.subr.mxu0 %v2176
    %2856 = vmatpush2.msra.mxu0 %v2175
    %2857 = vmatprep.subr.mxu0 %v2168
    %2858 = vmatpush2.msra.mxu0 %v2167
    %2859 = vmatprep.subr.mxu0 %v2160
    %2860 = vmatpush2.msra.mxu0 %v2159
    %2861 = vmatprep.subr.mxu0 %v2152
    %2862 = vmatpush2.msra.mxu0 %v2151
    %2863 = vmatprep.subr.mxu0 %v2144
    %2864 = vmatpush2.msra.mxu0 %v2143
    %2865 = vmatprep.subr.mxu0 %v2136
    %2866 = vmatpush2.msra.mxu0 %v2135
    %2867 = vmatprep.subr.mxu0 %v2128
    %2868 = vmatpush2.msra.mxu0 %v2127
    %2869 = vmatprep.mubr.f32.mxu0 %v1230
    %2870 = vmatmul.mubr.f32.gmra.mxu0 %v1229
    %v2871 = vpop.f32.mrf.mxu0
    %v2872 = vadd.f32 %v2801, %v2871
    %v2873 = vpop.f32.mrf.mxu0
    %v2874 = vadd.f32 %v2803, %v2873
    %2875 = vdwg.mxu0
    %2876 = vmatprep.subr.mxu0 %v1354
    %2877 = vmatpush1.msra.mxu0 %v1353
    %2878 = vmatprep.subr.mxu0 %v1346
    %2879 = vmatpush1.msra.mxu0 %v1345
    %2880 = vmatprep.subr.mxu0 %v1338
    %2881 = vmatpush1.msra.mxu0 %v1337
    %2882 = vmatprep.subr.mxu0 %v1330
    %2883 = vmatpush1.msra.mxu0 %v1329
    %2884 = vmatprep.subr.mxu0 %v1322
    %2885 = vmatpush1.msra.mxu0 %v1321
    %2886 = vmatprep.subr.mxu0 %v1314
    %2887 = vmatpush1.msra.mxu0 %v1313
    %2888 = vmatprep.subr.mxu0 %v1306
    %2889 = vmatpush1.msra.mxu0 %v1305
    %2890 = vmatprep.subr.mxu0 %v1298
    %2891 = vmatpush1.msra.mxu0 %v1297
    %2892 = vmatprep.subr.mxu0 %v1290
    %2893 = vmatpush1.msra.mxu0 %v1289
    %2894 = vmatprep.subr.mxu0 %v1282
    %2895 = vmatpush1.msra.mxu0 %v1281
    %2896 = vmatprep.subr.mxu0 %v1274
    %2897 = vmatpush1.msra.mxu0 %v1273
    %2898 = vmatprep.subr.mxu0 %v1266
    %2899 = vmatpush1.msra.mxu0 %v1265
    %2900 = vmatprep.subr.mxu0 %v1258
    %2901 = vmatpush1.msra.mxu0 %v1257
    %2902 = vmatprep.subr.mxu0 %v1250
    %2903 = vmatpush1.msra.mxu0 %v1249
    %2904 = vmatprep.subr.mxu0 %v1242
    %2905 = vmatpush1.msra.mxu0 %v1241
    %2906 = vmatprep.subr.mxu0 %v1234
    %2907 = vmatpush1.msra.mxu0 %v1233
    %2908 = vmatprep.subr.mxu0 %v1482
    %2909 = vmatpush2.msra.mxu0 %v1481
    %2910 = vmatprep.subr.mxu0 %v1474
    %2911 = vmatpush2.msra.mxu0 %v1473
    %2912 = vmatprep.subr.mxu0 %v1466
    %2913 = vmatpush2.msra.mxu0 %v1465
    %2914 = vmatprep.subr.mxu0 %v1458
    %2915 = vmatpush2.msra.mxu0 %v1457
    %2916 = vmatprep.subr.mxu0 %v1450
    %2917 = vmatpush2.msra.mxu0 %v1449
    %2918 = vmatprep.subr.mxu0 %v1442
    %2919 = vmatpush2.msra.mxu0 %v1441
    %2920 = vmatprep.subr.mxu0 %v1434
    %2921 = vmatpush2.msra.mxu0 %v1433
    %2922 = vmatprep.subr.mxu0 %v1426
    %2923 = vmatpush2.msra.mxu0 %v1425
    %2924 = vmatprep.subr.mxu0 %v1418
    %2925 = vmatpush2.msra.mxu0 %v1417
    %2926 = vmatprep.subr.mxu0 %v1410
    %2927 = vmatpush2.msra.mxu0 %v1409
    %2928 = vmatprep.subr.mxu0 %v1402
    %2929 = vmatpush2.msra.mxu0 %v1401
    %2930 = vmatprep.subr.mxu0 %v1394
    %2931 = vmatpush2.msra.mxu0 %v1393
    %2932 = vmatprep.subr.mxu0 %v1386
    %2933 = vmatpush2.msra.mxu0 %v1385
    %2934 = vmatprep.subr.mxu0 %v1378
    %2935 = vmatpush2.msra.mxu0 %v1377
    %2936 = vmatprep.subr.mxu0 %v1370
    %2937 = vmatpush2.msra.mxu0 %v1369
    %2938 = vmatprep.subr.mxu0 %v1362
    %2939 = vmatpush2.msra.mxu0 %v1361
    %2940 = vmatprep.mubr.f32.mxu0 %v1224
    %2941 = vmatmul.mubr.f32.gmra.mxu0 %v1223
    %v2942 = vpop.f32.mrf.mxu0
    %v2943 = vadd.f32 %v2563, %v2942
    %v2944 = vpop.f32.mrf.mxu0
    %v2945 = vadd.f32 %v2567, %v2944
    %2946 = vdwg.mxu0
    %2947 = vmatprep.subr.mxu0 %v1610
    %2948 = vmatpush1.msra.mxu0 %v1609
    %2949 = vmatprep.subr.mxu0 %v1602
    %2950 = vmatpush1.msra.mxu0 %v1601
    %2951 = vmatprep.subr.mxu0 %v1594
    %2952 = vmatpush1.msra.mxu0 %v1593
    %2953 = vmatprep.subr.mxu0 %v1586
    %2954 = vmatpush1.msra.mxu0 %v1585
    %2955 = vmatprep.subr.mxu0 %v1578
    %2956 = vmatpush1.msra.mxu0 %v1577
    %2957 = vmatprep.subr.mxu0 %v1570
    %2958 = vmatpush1.msra.mxu0 %v1569
    %2959 = vmatprep.subr.mxu0 %v1562
    %2960 = vmatpush1.msra.mxu0 %v1561
    %2961 = vmatprep.subr.mxu0 %v1554
    %2962 = vmatpush1.msra.mxu0 %v1553
    %2963 = vmatprep.subr.mxu0 %v1546
    %2964 = vmatpush1.msra.mxu0 %v1545
    %2965 = vmatprep.subr.mxu0 %v1538
    %2966 = vmatpush1.msra.mxu0 %v1537
    %2967 = vmatprep.subr.mxu0 %v1530
    %2968 = vmatpush1.msra.mxu0 %v1529
    %2969 = vmatprep.subr.mxu0 %v1522
    %2970 = vmatpush1.msra.mxu0 %v1521
    %2971 = vmatprep.subr.mxu0 %v1514
    %2972 = vmatpush1.msra.mxu0 %v1513
    %2973 = vmatprep.subr.mxu0 %v1506
    %2974 = vmatpush1.msra.mxu0 %v1505
    %2975 = vmatprep.subr.mxu0 %v1498
    %2976 = vmatpush1.msra.mxu0 %v1497
    %2977 = vmatprep.subr.mxu0 %v1490
    %2978 = vmatpush1.msra.mxu0 %v1489
    %2979 = vmatprep.subr.mxu0 %v1738
    %2980 = vmatpush2.msra.mxu0 %v1737
    %2981 = vmatprep.subr.mxu0 %v1730
    %2982 = vmatpush2.msra.mxu0 %v1729
    %2983 = vmatprep.subr.mxu0 %v1722
    %2984 = vmatpush2.msra.mxu0 %v1721
    %2985 = vmatprep.subr.mxu0 %v1714
    %2986 = vmatpush2.msra.mxu0 %v1713
    %2987 = vmatprep.subr.mxu0 %v1706
    %2988 = vmatpush2.msra.mxu0 %v1705
    %2989 = vmatprep.subr.mxu0 %v1698
    %2990 = vmatpush2.msra.mxu0 %v1697
    %2991 = vmatprep.subr.mxu0 %v1690
    %2992 = vmatpush2.msra.mxu0 %v1689
    %2993 = vmatprep.subr.mxu0 %v1682
    %2994 = vmatpush2.msra.mxu0 %v1681
    %2995 = vmatprep.subr.mxu0 %v1674
    %2996 = vmatpush2.msra.mxu0 %v1673
    %2997 = vmatprep.subr.mxu0 %v1666
    %2998 = vmatpush2.msra.mxu0 %v1665
    %2999 = vmatprep.subr.mxu0 %v1658
    %3000 = vmatpush2.msra.mxu0 %v1657
    %3001 = vmatprep.subr.mxu0 %v1650
    %3002 = vmatpush2.msra.mxu0 %v1649
    %3003 = vmatprep.subr.mxu0 %v1642
    %3004 = vmatpush2.msra.mxu0 %v1641
    %3005 = vmatprep.subr.mxu0 %v1634
    %3006 = vmatpush2.msra.mxu0 %v1633
    %3007 = vmatprep.subr.mxu0 %v1626
    %3008 = vmatpush2.msra.mxu0 %v1625
    %3009 = vmatprep.subr.mxu0 %v1618
    %3010 = vmatpush2.msra.mxu0 %v1617
    %3011 = vmatprep.mubr.f32.mxu0 %v1226
    %3012 = vmatmul.mubr.f32.gmra.mxu0 %v1225
    %v3013 = vpop.f32.mrf.mxu0
    %v3014 = vadd.f32 %v2943, %v3013
    %v3015 = vpop.f32.mrf.mxu0
    %v3016 = vadd.f32 %v2945, %v3015
    %3017 = vdwg.mxu0
    %3018 = vmatprep.subr.mxu0 %v1866
    %3019 = vmatpush1.msra.mxu0 %v1865
    %3020 = vmatprep.subr.mxu0 %v1858
    %3021 = vmatpush1.msra.mxu0 %v1857
    %3022 = vmatprep.subr.mxu0 %v1850
    %3023 = vmatpush1.msra.mxu0 %v1849
    %3024 = vmatprep.subr.mxu0 %v1842
    %3025 = vmatpush1.msra.mxu0 %v1841
    %3026 = vmatprep.subr.mxu0 %v1834
    %3027 = vmatpush1.msra.mxu0 %v1833
    %3028 = vmatprep.subr.mxu0 %v1826
    %3029 = vmatpush1.msra.mxu0 %v1825
    %3030 = vmatprep.subr.mxu0 %v1818
    %3031 = vmatpush1.msra.mxu0 %v1817
    %3032 = vmatprep.subr.mxu0 %v1810
    %3033 = vmatpush1.msra.mxu0 %v1809
    %3034 = vmatprep.subr.mxu0 %v1802
    %3035 = vmatpush1.msra.mxu0 %v1801
    %3036 = vmatprep.subr.mxu0 %v1794
    %3037 = vmatpush1.msra.mxu0 %v1793
    %3038 = vmatprep.subr.mxu0 %v1786
    %3039 = vmatpush1.msra.mxu0 %v1785
    %3040 = vmatprep.subr.mxu0 %v1778
    %3041 = vmatpush1.msra.mxu0 %v1777
    %3042 = vmatprep.subr.mxu0 %v1770
    %3043 = vmatpush1.msra.mxu0 %v1769
    %3044 = vmatprep.subr.mxu0 %v1762
    %3045 = vmatpush1.msra.mxu0 %v1761
    %3046 = vmatprep.subr.mxu0 %v1754
    %3047 = vmatpush1.msra.mxu0 %v1753
    %3048 = vmatprep.subr.mxu0 %v1746
    %3049 = vmatpush1.msra.mxu0 %v1745
    %3050 = vmatprep.subr.mxu0 %v1994
    %3051 = vmatpush2.msra.mxu0 %v1993
    %3052 = vmatprep.subr.mxu0 %v1986
    %3053 = vmatpush2.msra.mxu0 %v1985
    %3054 = vmatprep.subr.mxu0 %v1978
    %3055 = vmatpush2.msra.mxu0 %v1977
    %3056 = vmatprep.subr.mxu0 %v1970
    %3057 = vmatpush2.msra.mxu0 %v1969
    %3058 = vmatprep.subr.mxu0 %v1962
    %3059 = vmatpush2.msra.mxu0 %v1961
    %3060 = vmatprep.subr.mxu0 %v1954
    %3061 = vmatpush2.msra.mxu0 %v1953
    %3062 = vmatprep.subr.mxu0 %v1946
    %3063 = vmatpush2.msra.mxu0 %v1945
    %3064 = vmatprep.subr.mxu0 %v1938
    %3065 = vmatpush2.msra.mxu0 %v1937
    %3066 = vmatprep.subr.mxu0 %v1930
    %3067 = vmatpush2.msra.mxu0 %v1929
    %3068 = vmatprep.subr.mxu0 %v1922
    %3069 = vmatpush2.msra.mxu0 %v1921
    %3070 = vmatprep.subr.mxu0 %v1914
    %3071 = vmatpush2.msra.mxu0 %v1913
    %3072 = vmatprep.subr.mxu0 %v1906
    %3073 = vmatpush2.msra.mxu0 %v1905
    %3074 = vmatprep.subr.mxu0 %v1898
    %3075 = vmatpush2.msra.mxu0 %v1897
    %3076 = vmatprep.subr.mxu0 %v1890
    %3077 = vmatpush2.msra.mxu0 %v1889
    %3078 = vmatprep.subr.mxu0 %v1882
    %3079 = vmatpush2.msra.mxu0 %v1881
    %3080 = vmatprep.subr.mxu0 %v1874
    %3081 = vmatpush2.msra.mxu0 %v1873
    %3082 = vmatprep.mubr.f32.mxu0 %v1228
    %3083 = vmatmul.mubr.f32.gmra.mxu0 %v1227
    %v3084 = vpop.f32.mrf.mxu0
    %v3085 = vadd.f32 %v3014, %v3084
    %v3086 = vpop.f32.mrf.mxu0
    %v3087 = vadd.f32 %v3016, %v3086
    %3088 = vdwg.mxu0
    %3089 = vmatprep.subr.mxu0 %v2122
    %3090 = vmatpush1.msra.mxu0 %v2121
    %3091 = vmatprep.subr.mxu0 %v2114
    %3092 = vmatpush1.msra.mxu0 %v2113
    %3093 = vmatprep.subr.mxu0 %v2106
    %3094 = vmatpush1.msra.mxu0 %v2105
    %3095 = vmatprep.subr.mxu0 %v2098
    %3096 = vmatpush1.msra.mxu0 %v2097
    %3097 = vmatprep.subr.mxu0 %v2090
    %3098 = vmatpush1.msra.mxu0 %v2089
    %3099 = vmatprep.subr.mxu0 %v2082
    %3100 = vmatpush1.msra.mxu0 %v2081
    %3101 = vmatprep.subr.mxu0 %v2074
    %3102 = vmatpush1.msra.mxu0 %v2073
    %3103 = vmatprep.subr.mxu0 %v2066
    %3104 = vmatpush1.msra.mxu0 %v2065
    %3105 = vmatprep.subr.mxu0 %v2058
    %3106 = vmatpush1.msra.mxu0 %v2057
    %3107 = vmatprep.subr.mxu0 %v2050
    %3108 = vmatpush1.msra.mxu0 %v2049
    %3109 = vmatprep.subr.mxu0 %v2042
    %3110 = vmatpush1.msra.mxu0 %v2041
    %3111 = vmatprep.subr.mxu0 %v2034
    %3112 = vmatpush1.msra.mxu0 %v2033
    %3113 = vmatprep.subr.mxu0 %v2026
    %3114 = vmatpush1.msra.mxu0 %v2025
    %3115 = vmatprep.subr.mxu0 %v2018
    %3116 = vmatpush1.msra.mxu0 %v2017
    %3117 = vmatprep.subr.mxu0 %v2010
    %3118 = vmatpush1.msra.mxu0 %v2009
    %3119 = vmatprep.subr.mxu0 %v2002
    %3120 = vmatpush1.msra.mxu0 %v2001
    %3121 = vmatprep.subr.mxu0 %v2250
    %3122 = vmatpush2.msra.mxu0 %v2249
    %3123 = vmatprep.subr.mxu0 %v2242
    %3124 = vmatpush2.msra.mxu0 %v2241
    %3125 = vmatprep.subr.mxu0 %v2234
    %3126 = vmatpush2.msra.mxu0 %v2233
    %3127 = vmatprep.subr.mxu0 %v2226
    %3128 = vmatpush2.msra.mxu0 %v2225
    %3129 = vmatprep.subr.mxu0 %v2218
    %3130 = vmatpush2.msra.mxu0 %v2217
    %3131 = vmatprep.subr.mxu0 %v2210
    %3132 = vmatpush2.msra.mxu0 %v2209
    %3133 = vmatprep.subr.mxu0 %v2202
    %3134 = vmatpush2.msra.mxu0 %v2201
    %3135 = vmatprep.subr.mxu0 %v2194
    %3136 = vmatpush2.msra.mxu0 %v2193
    %3137 = vmatprep.subr.mxu0 %v2186
    %3138 = vmatpush2.msra.mxu0 %v2185
    %3139 = vmatprep.subr.mxu0 %v2178
    %3140 = vmatpush2.msra.mxu0 %v2177
    %3141 = vmatprep.subr.mxu0 %v2170
    %3142 = vmatpush2.msra.mxu0 %v2169
    %3143 = vmatprep.subr.mxu0 %v2162
    %3144 = vmatpush2.msra.mxu0 %v2161
    %3145 = vmatprep.subr.mxu0 %v2154
    %3146 = vmatpush2.msra.mxu0 %v2153
    %3147 = vmatprep.subr.mxu0 %v2146
    %3148 = vmatpush2.msra.mxu0 %v2145
    %3149 = vmatprep.subr.mxu0 %v2138
    %3150 = vmatpush2.msra.mxu0 %v2137
    %3151 = vmatprep.subr.mxu0 %v2130
    %3152 = vmatpush2.msra.mxu0 %v2129
    %3153 = vmatprep.mubr.f32.mxu0 %v1230
    %3154 = vmatmul.mubr.f32.gmra.mxu0 %v1229
    %v3155 = vpop.f32.mrf.mxu0
    %v3156 = vadd.f32 %v3085, %v3155
    %v3157 = vpop.f32.mrf.mxu0
    %v3158 = vadd.f32 %v3087, %v3157
    %3159 = vdwg.mxu0
    %3160 = vmatprep.subr.mxu0 %v1356
    %3161 = vmatpush1.msra.mxu0 %v1355
    %3162 = vmatprep.subr.mxu0 %v1348
    %3163 = vmatpush1.msra.mxu0 %v1347
    %3164 = vmatprep.subr.mxu0 %v1340
    %3165 = vmatpush1.msra.mxu0 %v1339
    %3166 = vmatprep.subr.mxu0 %v1332
    %3167 = vmatpush1.msra.mxu0 %v1331
    %3168 = vmatprep.subr.mxu0 %v1324
    %3169 = vmatpush1.msra.mxu0 %v1323
    %3170 = vmatprep.subr.mxu0 %v1316
    %3171 = vmatpush1.msra.mxu0 %v1315
    %3172 = vmatprep.subr.mxu0 %v1308
    %3173 = vmatpush1.msra.mxu0 %v1307
    %3174 = vmatprep.subr.mxu0 %v1300
    %3175 = vmatpush1.msra.mxu0 %v1299
    %3176 = vmatprep.subr.mxu0 %v1292
    %3177 = vmatpush1.msra.mxu0 %v1291
    %3178 = vmatprep.subr.mxu0 %v1284
    %3179 = vmatpush1.msra.mxu0 %v1283
    %3180 = vmatprep.subr.mxu0 %v1276
    %3181 = vmatpush1.msra.mxu0 %v1275
    %3182 = vmatprep.subr.mxu0 %v1268
    %3183 = vmatpush1.msra.mxu0 %v1267
    %3184 = vmatprep.subr.mxu0 %v1260
    %3185 = vmatpush1.msra.mxu0 %v1259
    %3186 = vmatprep.subr.mxu0 %v1252
    %3187 = vmatpush1.msra.mxu0 %v1251
    %3188 = vmatprep.subr.mxu0 %v1244
    %3189 = vmatpush1.msra.mxu0 %v1243
    %3190 = vmatprep.subr.mxu0 %v1236
    %3191 = vmatpush1.msra.mxu0 %v1235
    %3192 = vmatprep.subr.mxu0 %v1484
    %3193 = vmatpush2.msra.mxu0 %v1483
    %3194 = vmatprep.subr.mxu0 %v1476
    %3195 = vmatpush2.msra.mxu0 %v1475
    %3196 = vmatprep.subr.mxu0 %v1468
    %3197 = vmatpush2.msra.mxu0 %v1467
    %3198 = vmatprep.subr.mxu0 %v1460
    %3199 = vmatpush2.msra.mxu0 %v1459
    %3200 = vmatprep.subr.mxu0 %v1452
    %3201 = vmatpush2.msra.mxu0 %v1451
    %3202 = vmatprep.subr.mxu0 %v1444
    %3203 = vmatpush2.msra.mxu0 %v1443
    %3204 = vmatprep.subr.mxu0 %v1436
    %3205 = vmatpush2.msra.mxu0 %v1435
    %3206 = vmatprep.subr.mxu0 %v1428
    %3207 = vmatpush2.msra.mxu0 %v1427
    %3208 = vmatprep.subr.mxu0 %v1420
    %3209 = vmatpush2.msra.mxu0 %v1419
    %3210 = vmatprep.subr.mxu0 %v1412
    %3211 = vmatpush2.msra.mxu0 %v1411
    %3212 = vmatprep.subr.mxu0 %v1404
    %3213 = vmatpush2.msra.mxu0 %v1403
    %3214 = vmatprep.subr.mxu0 %v1396
    %3215 = vmatpush2.msra.mxu0 %v1395
    %3216 = vmatprep.subr.mxu0 %v1388
    %3217 = vmatpush2.msra.mxu0 %v1387
    %3218 = vmatprep.subr.mxu0 %v1380
    %3219 = vmatpush2.msra.mxu0 %v1379
    %3220 = vmatprep.subr.mxu0 %v1372
    %3221 = vmatpush2.msra.mxu0 %v1371
    %3222 = vmatprep.subr.mxu0 %v1364
    %3223 = vmatpush2.msra.mxu0 %v1363
    %3224 = vmatprep.mubr.f32.mxu0 %v1224
    %3225 = vmatmul.mubr.f32.gmra.mxu0 %v1223
    %v3226 = vpop.f32.mrf.mxu0
    %v3227 = vadd.f32 %v2571, %v3226
    %v3228 = vpop.f32.mrf.mxu0
    %v3229 = vadd.f32 %v2575, %v3228
    %3230 = vdwg.mxu0
    %3231 = vmatprep.subr.mxu0 %v1612
    %3232 = vmatpush1.msra.mxu0 %v1611
    %3233 = vmatprep.subr.mxu0 %v1604
    %3234 = vmatpush1.msra.mxu0 %v1603
    %3235 = vmatprep.subr.mxu0 %v1596
    %3236 = vmatpush1.msra.mxu0 %v1595
    %3237 = vmatprep.subr.mxu0 %v1588
    %3238 = vmatpush1.msra.mxu0 %v1587
    %3239 = vmatprep.subr.mxu0 %v1580
    %3240 = vmatpush1.msra.mxu0 %v1579
    %3241 = vmatprep.subr.mxu0 %v1572
    %3242 = vmatpush1.msra.mxu0 %v1571
    %3243 = vmatprep.subr.mxu0 %v1564
    %3244 = vmatpush1.msra.mxu0 %v1563
    %3245 = vmatprep.subr.mxu0 %v1556
    %3246 = vmatpush1.msra.mxu0 %v1555
    %3247 = vmatprep.subr.mxu0 %v1548
    %3248 = vmatpush1.msra.mxu0 %v1547
    %3249 = vmatprep.subr.mxu0 %v1540
    %3250 = vmatpush1.msra.mxu0 %v1539
    %3251 = vmatprep.subr.mxu0 %v1532
    %3252 = vmatpush1.msra.mxu0 %v1531
    %3253 = vmatprep.subr.mxu0 %v1524
    %3254 = vmatpush1.msra.mxu0 %v1523
    %3255 = vmatprep.subr.mxu0 %v1516
    %3256 = vmatpush1.msra.mxu0 %v1515
    %3257 = vmatprep.subr.mxu0 %v1508
    %3258 = vmatpush1.msra.mxu0 %v1507
    %3259 = vmatprep.subr.mxu0 %v1500
    %3260 = vmatpush1.msra.mxu0 %v1499
    %3261 = vmatprep.subr.mxu0 %v1492
    %3262 = vmatpush1.msra.mxu0 %v1491
    %3263 = vmatprep.subr.mxu0 %v1740
    %3264 = vmatpush2.msra.mxu0 %v1739
    %3265 = vmatprep.subr.mxu0 %v1732
    %3266 = vmatpush2.msra.mxu0 %v1731
    %3267 = vmatprep.subr.mxu0 %v1724
    %3268 = vmatpush2.msra.mxu0 %v1723
    %3269 = vmatprep.subr.mxu0 %v1716
    %3270 = vmatpush2.msra.mxu0 %v1715
    %3271 = vmatprep.subr.mxu0 %v1708
    %3272 = vmatpush2.msra.mxu0 %v1707
    %3273 = vmatprep.subr.mxu0 %v1700
    %3274 = vmatpush2.msra.mxu0 %v1699
    %3275 = vmatprep.subr.mxu0 %v1692
    %3276 = vmatpush2.msra.mxu0 %v1691
    %3277 = vmatprep.subr.mxu0 %v1684
    %3278 = vmatpush2.msra.mxu0 %v1683
    %3279 = vmatprep.subr.mxu0 %v1676
    %3280 = vmatpush2.msra.mxu0 %v1675
    %3281 = vmatprep.subr.mxu0 %v1668
    %3282 = vmatpush2.msra.mxu0 %v1667
    %3283 = vmatprep.subr.mxu0 %v1660
    %3284 = vmatpush2.msra.mxu0 %v1659
    %3285 = vmatprep.subr.mxu0 %v1652
    %3286 = vmatpush2.msra.mxu0 %v1651
    %3287 = vmatprep.subr.mxu0 %v1644
    %3288 = vmatpush2.msra.mxu0 %v1643
    %3289 = vmatprep.subr.mxu0 %v1636
    %3290 = vmatpush2.msra.mxu0 %v1635
    %3291 = vmatprep.subr.mxu0 %v1628
    %3292 = vmatpush2.msra.mxu0 %v1627
    %3293 = vmatprep.subr.mxu0 %v1620
    %3294 = vmatpush2.msra.mxu0 %v1619
    %3295 = vmatprep.mubr.f32.mxu0 %v1226
    %3296 = vmatmul.mubr.f32.gmra.mxu0 %v1225
    %v3297 = vpop.f32.mrf.mxu0
    %v3298 = vadd.f32 %v3227, %v3297
    %v3299 = vpop.f32.mrf.mxu0
    %v3300 = vadd.f32 %v3229, %v3299
    %3301 = vdwg.mxu0
    %3302 = vmatprep.subr.mxu0 %v1868
    %3303 = vmatpush1.msra.mxu0 %v1867
    %3304 = vmatprep.subr.mxu0 %v1860
    %3305 = vmatpush1.msra.mxu0 %v1859
    %3306 = vmatprep.subr.mxu0 %v1852
    %3307 = vmatpush1.msra.mxu0 %v1851
    %3308 = vmatprep.subr.mxu0 %v1844
    %3309 = vmatpush1.msra.mxu0 %v1843
    %3310 = vmatprep.subr.mxu0 %v1836
    %3311 = vmatpush1.msra.mxu0 %v1835
    %3312 = vmatprep.subr.mxu0 %v1828
    %3313 = vmatpush1.msra.mxu0 %v1827
    %3314 = vmatprep.subr.mxu0 %v1820
    %3315 = vmatpush1.msra.mxu0 %v1819
    %3316 = vmatprep.subr.mxu0 %v1812
    %3317 = vmatpush1.msra.mxu0 %v1811
    %3318 = vmatprep.subr.mxu0 %v1804
    %3319 = vmatpush1.msra.mxu0 %v1803
    %3320 = vmatprep.subr.mxu0 %v1796
    %3321 = vmatpush1.msra.mxu0 %v1795
    %3322 = vmatprep.subr.mxu0 %v1788
    %3323 = vmatpush1.msra.mxu0 %v1787
    %3324 = vmatprep.subr.mxu0 %v1780
    %3325 = vmatpush1.msra.mxu0 %v1779
    %3326 = vmatprep.subr.mxu0 %v1772
    %3327 = vmatpush1.msra.mxu0 %v1771
    %3328 = vmatprep.subr.mxu0 %v1764
    %3329 = vmatpush1.msra.mxu0 %v1763
    %3330 = vmatprep.subr.mxu0 %v1756
    %3331 = vmatpush1.msra.mxu0 %v1755
    %3332 = vmatprep.subr.mxu0 %v1748
    %3333 = vmatpush1.msra.mxu0 %v1747
    %3334 = vmatprep.subr.mxu0 %v1996
    %3335 = vmatpush2.msra.mxu0 %v1995
    %3336 = vmatprep.subr.mxu0 %v1988
    %3337 = vmatpush2.msra.mxu0 %v1987
    %3338 = vmatprep.subr.mxu0 %v1980
    %3339 = vmatpush2.msra.mxu0 %v1979
    %3340 = vmatprep.subr.mxu0 %v1972
    %3341 = vmatpush2.msra.mxu0 %v1971
    %3342 = vmatprep.subr.mxu0 %v1964
    %3343 = vmatpush2.msra.mxu0 %v1963
    %3344 = vmatprep.subr.mxu0 %v1956
    %3345 = vmatpush2.msra.mxu0 %v1955
    %3346 = vmatprep.subr.mxu0 %v1948
    %3347 = vmatpush2.msra.mxu0 %v1947
    %3348 = vmatprep.subr.mxu0 %v1940
    %3349 = vmatpush2.msra.mxu0 %v1939
    %3350 = vmatprep.subr.mxu0 %v1932
    %3351 = vmatpush2.msra.mxu0 %v1931
    %3352 = vmatprep.subr.mxu0 %v1924
    %3353 = vmatpush2.msra.mxu0 %v1923
    %3354 = vmatprep.subr.mxu0 %v1916
    %3355 = vmatpush2.msra.mxu0 %v1915
    %3356 = vmatprep.subr.mxu0 %v1908
    %3357 = vmatpush2.msra.mxu0 %v1907
    %3358 = vmatprep.subr.mxu0 %v1900
    %3359 = vmatpush2.msra.mxu0 %v1899
    %3360 = vmatprep.subr.mxu0 %v1892
    %3361 = vmatpush2.msra.mxu0 %v1891
    %3362 = vmatprep.subr.mxu0 %v1884
    %3363 = vmatpush2.msra.mxu0 %v1883
    %3364 = vmatprep.subr.mxu0 %v1876
    %3365 = vmatpush2.msra.mxu0 %v1875
    %3366 = vmatprep.mubr.f32.mxu0 %v1228
    %3367 = vmatmul.mubr.f32.gmra.mxu0 %v1227
    %v3368 = vpop.f32.mrf.mxu0
    %v3369 = vadd.f32 %v3298, %v3368
    %v3370 = vpop.f32.mrf.mxu0
    %v3371 = vadd.f32 %v3300, %v3370
    %3372 = vdwg.mxu0
    %3373 = vmatprep.subr.mxu0 %v2124
    %3374 = vmatpush1.msra.mxu0 %v2123
    %3375 = vmatprep.subr.mxu0 %v2116
    %3376 = vmatpush1.msra.mxu0 %v2115
    %3377 = vmatprep.subr.mxu0 %v2108
    %3378 = vmatpush1.msra.mxu0 %v2107
    %3379 = vmatprep.subr.mxu0 %v2100
    %3380 = vmatpush1.msra.mxu0 %v2099
    %3381 = vmatprep.subr.mxu0 %v2092
    %3382 = vmatpush1.msra.mxu0 %v2091
    %3383 = vmatprep.subr.mxu0 %v2084
    %3384 = vmatpush1.msra.mxu0 %v2083
    %3385 = vmatprep.subr.mxu0 %v2076
    %3386 = vmatpush1.msra.mxu0 %v2075
    %3387 = vmatprep.subr.mxu0 %v2068
    %3388 = vmatpush1.msra.mxu0 %v2067
    %3389 = vmatprep.subr.mxu0 %v2060
    %3390 = vmatpush1.msra.mxu0 %v2059
    %3391 = vmatprep.subr.mxu0 %v2052
    %3392 = vmatpush1.msra.mxu0 %v2051
    %3393 = vmatprep.subr.mxu0 %v2044
    %3394 = vmatpush1.msra.mxu0 %v2043
    %3395 = vmatprep.subr.mxu0 %v2036
    %3396 = vmatpush1.msra.mxu0 %v2035
    %3397 = vmatprep.subr.mxu0 %v2028
    %3398 = vmatpush1.msra.mxu0 %v2027
    %3399 = vmatprep.subr.mxu0 %v2020
    %3400 = vmatpush1.msra.mxu0 %v2019
    %3401 = vmatprep.subr.mxu0 %v2012
    %3402 = vmatpush1.msra.mxu0 %v2011
    %3403 = vmatprep.subr.mxu0 %v2004
    %3404 = vmatpush1.msra.mxu0 %v2003
    %3405 = vmatprep.subr.mxu0 %v2252
    %3406 = vmatpush2.msra.mxu0 %v2251
    %3407 = vmatprep.subr.mxu0 %v2244
    %3408 = vmatpush2.msra.mxu0 %v2243
    %3409 = vmatprep.subr.mxu0 %v2236
    %3410 = vmatpush2.msra.mxu0 %v2235
    %3411 = vmatprep.subr.mxu0 %v2228
    %3412 = vmatpush2.msra.mxu0 %v2227
    %3413 = vmatprep.subr.mxu0 %v2220
    %3414 = vmatpush2.msra.mxu0 %v2219
    %3415 = vmatprep.subr.mxu0 %v2212
    %3416 = vmatpush2.msra.mxu0 %v2211
    %3417 = vmatprep.subr.mxu0 %v2204
    %3418 = vmatpush2.msra.mxu0 %v2203
    %3419 = vmatprep.subr.mxu0 %v2196
    %3420 = vmatpush2.msra.mxu0 %v2195
    %3421 = vmatprep.subr.mxu0 %v2188
    %3422 = vmatpush2.msra.mxu0 %v2187
    %3423 = vmatprep.subr.mxu0 %v2180
    %3424 = vmatpush2.msra.mxu0 %v2179
    %3425 = vmatprep.subr.mxu0 %v2172
    %3426 = vmatpush2.msra.mxu0 %v2171
    %3427 = vmatprep.subr.mxu0 %v2164
    %3428 = vmatpush2.msra.mxu0 %v2163
    %3429 = vmatprep.subr.mxu0 %v2156
    %3430 = vmatpush2.msra.mxu0 %v2155
    %3431 = vmatprep.subr.mxu0 %v2148
    %3432 = vmatpush2.msra.mxu0 %v2147
    %3433 = vmatprep.subr.mxu0 %v2140
    %3434 = vmatpush2.msra.mxu0 %v2139
    %3435 = vmatprep.subr.mxu0 %v2132
    %3436 = vmatpush2.msra.mxu0 %v2131
    %3437 = vmatprep.mubr.f32.mxu0 %v1230
    %3438 = vmatmul.mubr.f32.gmra.mxu0 %v1229
    %v3439 = vpop.f32.mrf.mxu0
    %v3440 = vadd.f32 %v3369, %v3439
    %v3441 = vpop.f32.mrf.mxu0
    %v3442 = vadd.f32 %v3371, %v3441
    %3443 = vdwg.mxu0
    %3444 = vmatprep.subr.mxu0 %v1358
    %3445 = vmatpush1.msra.mxu0 %v1357
    %3446 = vmatprep.subr.mxu0 %v1350
    %3447 = vmatpush1.msra.mxu0 %v1349
    %3448 = vmatprep.subr.mxu0 %v1342
    %3449 = vmatpush1.msra.mxu0 %v1341
    %3450 = vmatprep.subr.mxu0 %v1334
    %3451 = vmatpush1.msra.mxu0 %v1333
    %3452 = vmatprep.subr.mxu0 %v1326
    %3453 = vmatpush1.msra.mxu0 %v1325
    %3454 = vmatprep.subr.mxu0 %v1318
    %3455 = vmatpush1.msra.mxu0 %v1317
    %3456 = vmatprep.subr.mxu0 %v1310
    %3457 = vmatpush1.msra.mxu0 %v1309
    %3458 = vmatprep.subr.mxu0 %v1302
    %3459 = vmatpush1.msra.mxu0 %v1301
    %3460 = vmatprep.subr.mxu0 %v1294
    %3461 = vmatpush1.msra.mxu0 %v1293
    %3462 = vmatprep.subr.mxu0 %v1286
    %3463 = vmatpush1.msra.mxu0 %v1285
    %3464 = vmatprep.subr.mxu0 %v1278
    %3465 = vmatpush1.msra.mxu0 %v1277
    %3466 = vmatprep.subr.mxu0 %v1270
    %3467 = vmatpush1.msra.mxu0 %v1269
    %3468 = vmatprep.subr.mxu0 %v1262
    %3469 = vmatpush1.msra.mxu0 %v1261
    %3470 = vmatprep.subr.mxu0 %v1254
    %3471 = vmatpush1.msra.mxu0 %v1253
    %3472 = vmatprep.subr.mxu0 %v1246
    %3473 = vmatpush1.msra.mxu0 %v1245
    %3474 = vmatprep.subr.mxu0 %v1238
    %3475 = vmatpush1.msra.mxu0 %v1237
    %3476 = vmatprep.subr.mxu0 %v1486
    %3477 = vmatpush2.msra.mxu0 %v1485
    %3478 = vmatprep.subr.mxu0 %v1478
    %3479 = vmatpush2.msra.mxu0 %v1477
    %3480 = vmatprep.subr.mxu0 %v1470
    %3481 = vmatpush2.msra.mxu0 %v1469
    %3482 = vmatprep.subr.mxu0 %v1462
    %3483 = vmatpush2.msra.mxu0 %v1461
    %3484 = vmatprep.subr.mxu0 %v1454
    %3485 = vmatpush2.msra.mxu0 %v1453
    %3486 = vmatprep.subr.mxu0 %v1446
    %3487 = vmatpush2.msra.mxu0 %v1445
    %3488 = vmatprep.subr.mxu0 %v1438
    %3489 = vmatpush2.msra.mxu0 %v1437
    %3490 = vmatprep.subr.mxu0 %v1430
    %3491 = vmatpush2.msra.mxu0 %v1429
    %3492 = vmatprep.subr.mxu0 %v1422
    %3493 = vmatpush2.msra.mxu0 %v1421
    %3494 = vmatprep.subr.mxu0 %v1414
    %3495 = vmatpush2.msra.mxu0 %v1413
    %3496 = vmatprep.subr.mxu0 %v1406
    %3497 = vmatpush2.msra.mxu0 %v1405
    %3498 = vmatprep.subr.mxu0 %v1398
    %3499 = vmatpush2.msra.mxu0 %v1397
    %3500 = vmatprep.subr.mxu0 %v1390
    %3501 = vmatpush2.msra.mxu0 %v1389
    %3502 = vmatprep.subr.mxu0 %v1382
    %3503 = vmatpush2.msra.mxu0 %v1381
    %3504 = vmatprep.subr.mxu0 %v1374
    %3505 = vmatpush2.msra.mxu0 %v1373
    %3506 = vmatprep.subr.mxu0 %v1366
    %3507 = vmatpush2.msra.mxu0 %v1365
    %3508 = vmatprep.mubr.f32.mxu0 %v1224
    %3509 = vmatmul.mubr.f32.gmra.mxu0 %v1223
    %v3510 = vpop.f32.mrf.mxu0
    %v3511 = vadd.f32 %v2579, %v3510
    %v3512 = vpop.f32.mrf.mxu0
    %v3513 = vadd.f32 %v2583, %v3512
    %3514 = vdwg.mxu0
    %3515 = vmatprep.subr.mxu0 %v1614
    %3516 = vmatpush1.msra.mxu0 %v1613
    %3517 = vmatprep.subr.mxu0 %v1606
    %3518 = vmatpush1.msra.mxu0 %v1605
    %3519 = vmatprep.subr.mxu0 %v1598
    %3520 = vmatpush1.msra.mxu0 %v1597
    %3521 = vmatprep.subr.mxu0 %v1590
    %3522 = vmatpush1.msra.mxu0 %v1589
    %3523 = vmatprep.subr.mxu0 %v1582
    %3524 = vmatpush1.msra.mxu0 %v1581
    %3525 = vmatprep.subr.mxu0 %v1574
    %3526 = vmatpush1.msra.mxu0 %v1573
    %3527 = vmatprep.subr.mxu0 %v1566
    %3528 = vmatpush1.msra.mxu0 %v1565
    %3529 = vmatprep.subr.mxu0 %v1558
    %3530 = vmatpush1.msra.mxu0 %v1557
    %3531 = vmatprep.subr.mxu0 %v1550
    %3532 = vmatpush1.msra.mxu0 %v1549
    %3533 = vmatprep.subr.mxu0 %v1542
    %3534 = vmatpush1.msra.mxu0 %v1541
    %3535 = vmatprep.subr.mxu0 %v1534
    %3536 = vmatpush1.msra.mxu0 %v1533
    %3537 = vmatprep.subr.mxu0 %v1526
    %3538 = vmatpush1.msra.mxu0 %v1525
    %3539 = vmatprep.subr.mxu0 %v1518
    %3540 = vmatpush1.msra.mxu0 %v1517
    %3541 = vmatprep.subr.mxu0 %v1510
    %3542 = vmatpush1.msra.mxu0 %v1509
    %3543 = vmatprep.subr.mxu0 %v1502
    %3544 = vmatpush1.msra.mxu0 %v1501
    %3545 = vmatprep.subr.mxu0 %v1494
    %3546 = vmatpush1.msra.mxu0 %v1493
    %3547 = vmatprep.subr.mxu0 %v1742
    %3548 = vmatpush2.msra.mxu0 %v1741
    %3549 = vmatprep.subr.mxu0 %v1734
    %3550 = vmatpush2.msra.mxu0 %v1733
    %3551 = vmatprep.subr.mxu0 %v1726
    %3552 = vmatpush2.msra.mxu0 %v1725
    %3553 = vmatprep.subr.mxu0 %v1718
    %3554 = vmatpush2.msra.mxu0 %v1717
    %3555 = vmatprep.subr.mxu0 %v1710
    %3556 = vmatpush2.msra.mxu0 %v1709
    %3557 = vmatprep.subr.mxu0 %v1702
    %3558 = vmatpush2.msra.mxu0 %v1701
    %3559 = vmatprep.subr.mxu0 %v1694
    %3560 = vmatpush2.msra.mxu0 %v1693
    %3561 = vmatprep.subr.mxu0 %v1686
    %3562 = vmatpush2.msra.mxu0 %v1685
    %3563 = vmatprep.subr.mxu0 %v1678
    %3564 = vmatpush2.msra.mxu0 %v1677
    %3565 = vmatprep.subr.mxu0 %v1670
    %3566 = vmatpush2.msra.mxu0 %v1669
    %3567 = vmatprep.subr.mxu0 %v1662
    %3568 = vmatpush2.msra.mxu0 %v1661
    %3569 = vmatprep.subr.mxu0 %v1654
    %3570 = vmatpush2.msra.mxu0 %v1653
    %3571 = vmatprep.subr.mxu0 %v1646
    %3572 = vmatpush2.msra.mxu0 %v1645
    %3573 = vmatprep.subr.mxu0 %v1638
    %3574 = vmatpush2.msra.mxu0 %v1637
    %3575 = vmatprep.subr.mxu0 %v1630
    %3576 = vmatpush2.msra.mxu0 %v1629
    %3577 = vmatprep.subr.mxu0 %v1622
    %3578 = vmatpush2.msra.mxu0 %v1621
    %3579 = vmatprep.mubr.f32.mxu0 %v1226
    %3580 = vmatmul.mubr.f32.gmra.mxu0 %v1225
    %v3581 = vpop.f32.mrf.mxu0
    %v3582 = vadd.f32 %v3511, %v3581
    %v3583 = vpop.f32.mrf.mxu0
    %v3584 = vadd.f32 %v3513, %v3583
    %3585 = vdwg.mxu0
    %3586 = vmatprep.subr.mxu0 %v1870
    %3587 = vmatpush1.msra.mxu0 %v1869
    %3588 = vmatprep.subr.mxu0 %v1862
    %3589 = vmatpush1.msra.mxu0 %v1861
    %3590 = vmatprep.subr.mxu0 %v1854
    %3591 = vmatpush1.msra.mxu0 %v1853
    %3592 = vmatprep.subr.mxu0 %v1846
    %3593 = vmatpush1.msra.mxu0 %v1845
    %3594 = vmatprep.subr.mxu0 %v1838
    %3595 = vmatpush1.msra.mxu0 %v1837
    %3596 = vmatprep.subr.mxu0 %v1830
    %3597 = vmatpush1.msra.mxu0 %v1829
    %3598 = vmatprep.subr.mxu0 %v1822
    %3599 = vmatpush1.msra.mxu0 %v1821
    %3600 = vmatprep.subr.mxu0 %v1814
    %3601 = vmatpush1.msra.mxu0 %v1813
    %3602 = vmatprep.subr.mxu0 %v1806
    %3603 = vmatpush1.msra.mxu0 %v1805
    %3604 = vmatprep.subr.mxu0 %v1798
    %3605 = vmatpush1.msra.mxu0 %v1797
    %3606 = vmatprep.subr.mxu0 %v1790
    %3607 = vmatpush1.msra.mxu0 %v1789
    %3608 = vmatprep.subr.mxu0 %v1782
    %3609 = vmatpush1.msra.mxu0 %v1781
    %3610 = vmatprep.subr.mxu0 %v1774
    %3611 = vmatpush1.msra.mxu0 %v1773
    %3612 = vmatprep.subr.mxu0 %v1766
    %3613 = vmatpush1.msra.mxu0 %v1765
    %3614 = vmatprep.subr.mxu0 %v1758
    %3615 = vmatpush1.msra.mxu0 %v1757
    %3616 = vmatprep.subr.mxu0 %v1750
    %3617 = vmatpush1.msra.mxu0 %v1749
    %3618 = vmatprep.subr.mxu0 %v1998
    %3619 = vmatpush2.msra.mxu0 %v1997
    %3620 = vmatprep.subr.mxu0 %v1990
    %3621 = vmatpush2.msra.mxu0 %v1989
    %3622 = vmatprep.subr.mxu0 %v1982
    %3623 = vmatpush2.msra.mxu0 %v1981
    %3624 = vmatprep.subr.mxu0 %v1974
    %3625 = vmatpush2.msra.mxu0 %v1973
    %3626 = vmatprep.subr.mxu0 %v1966
    %3627 = vmatpush2.msra.mxu0 %v1965
    %3628 = vmatprep.subr.mxu0 %v1958
    %3629 = vmatpush2.msra.mxu0 %v1957
    %3630 = vmatprep.subr.mxu0 %v1950
    %3631 = vmatpush2.msra.mxu0 %v1949
    %3632 = vmatprep.subr.mxu0 %v1942
    %3633 = vmatpush2.msra.mxu0 %v1941
    %3634 = vmatprep.subr.mxu0 %v1934
    %3635 = vmatpush2.msra.mxu0 %v1933
    %3636 = vmatprep.subr.mxu0 %v1926
    %3637 = vmatpush2.msra.mxu0 %v1925
    %3638 = vmatprep.subr.mxu0 %v1918
    %3639 = vmatpush2.msra.mxu0 %v1917
    %3640 = vmatprep.subr.mxu0 %v1910
    %3641 = vmatpush2.msra.mxu0 %v1909
    %3642 = vmatprep.subr.mxu0 %v1902
    %3643 = vmatpush2.msra.mxu0 %v1901
    %3644 = vmatprep.subr.mxu0 %v1894
    %3645 = vmatpush2.msra.mxu0 %v1893
    %3646 = vmatprep.subr.mxu0 %v1886
    %3647 = vmatpush2.msra.mxu0 %v1885
    %3648 = vmatprep.subr.mxu0 %v1878
    %3649 = vmatpush2.msra.mxu0 %v1877
    %3650 = vmatprep.mubr.f32.mxu0 %v1228
    %3651 = vmatmul.mubr.f32.gmra.mxu0 %v1227
    %v3652 = vpop.f32.mrf.mxu0
    %v3653 = vadd.f32 %v3582, %v3652
    %v3654 = vpop.f32.mrf.mxu0
    %v3655 = vadd.f32 %v3584, %v3654
    %3656 = vdwg.mxu0
    %3657 = vmatprep.subr.mxu0 %v2126
    %3658 = vmatpush1.msra.mxu0 %v2125
    %3659 = vmatprep.subr.mxu0 %v2118
    %3660 = vmatpush1.msra.mxu0 %v2117
    %3661 = vmatprep.subr.mxu0 %v2110
    %3662 = vmatpush1.msra.mxu0 %v2109
    %3663 = vmatprep.subr.mxu0 %v2102
    %3664 = vmatpush1.msra.mxu0 %v2101
    %3665 = vmatprep.subr.mxu0 %v2094
    %3666 = vmatpush1.msra.mxu0 %v2093
    %3667 = vmatprep.subr.mxu0 %v2086
    %3668 = vmatpush1.msra.mxu0 %v2085
    %3669 = vmatprep.subr.mxu0 %v2078
    %3670 = vmatpush1.msra.mxu0 %v2077
    %3671 = vmatprep.subr.mxu0 %v2070
    %3672 = vmatpush1.msra.mxu0 %v2069
    %3673 = vmatprep.subr.mxu0 %v2062
    %3674 = vmatpush1.msra.mxu0 %v2061
    %3675 = vmatprep.subr.mxu0 %v2054
    %3676 = vmatpush1.msra.mxu0 %v2053
    %3677 = vmatprep.subr.mxu0 %v2046
    %3678 = vmatpush1.msra.mxu0 %v2045
    %3679 = vmatprep.subr.mxu0 %v2038
    %3680 = vmatpush1.msra.mxu0 %v2037
    %3681 = vmatprep.subr.mxu0 %v2030
    %3682 = vmatpush1.msra.mxu0 %v2029
    %3683 = vmatprep.subr.mxu0 %v2022
    %3684 = vmatpush1.msra.mxu0 %v2021
    %3685 = vmatprep.subr.mxu0 %v2014
    %3686 = vmatpush1.msra.mxu0 %v2013
    %3687 = vmatprep.subr.mxu0 %v2006
    %3688 = vmatpush1.msra.mxu0 %v2005
    %3689 = vmatprep.subr.mxu0 %v2254
    %3690 = vmatpush2.msra.mxu0 %v2253
    %3691 = vmatprep.subr.mxu0 %v2246
    %3692 = vmatpush2.msra.mxu0 %v2245
    %3693 = vmatprep.subr.mxu0 %v2238
    %3694 = vmatpush2.msra.mxu0 %v2237
    %3695 = vmatprep.subr.mxu0 %v2230
    %3696 = vmatpush2.msra.mxu0 %v2229
    %3697 = vmatprep.subr.mxu0 %v2222
    %3698 = vmatpush2.msra.mxu0 %v2221
    %3699 = vmatprep.subr.mxu0 %v2214
    %3700 = vmatpush2.msra.mxu0 %v2213
    %3701 = vmatprep.subr.mxu0 %v2206
    %3702 = vmatpush2.msra.mxu0 %v2205
    %3703 = vmatprep.subr.mxu0 %v2198
    %3704 = vmatpush2.msra.mxu0 %v2197
    %3705 = vmatprep.subr.mxu0 %v2190
    %3706 = vmatpush2.msra.mxu0 %v2189
    %3707 = vmatprep.subr.mxu0 %v2182
    %3708 = vmatpush2.msra.mxu0 %v2181
    %3709 = vmatprep.subr.mxu0 %v2174
    %3710 = vmatpush2.msra.mxu0 %v2173
    %3711 = vmatprep.subr.mxu0 %v2166
    %3712 = vmatpush2.msra.mxu0 %v2165
    %3713 = vmatprep.subr.mxu0 %v2158
    %3714 = vmatpush2.msra.mxu0 %v2157
    %3715 = vmatprep.subr.mxu0 %v2150
    %3716 = vmatpush2.msra.mxu0 %v2149
    %3717 = vmatprep.subr.mxu0 %v2142
    %3718 = vmatpush2.msra.mxu0 %v2141
    %3719 = vmatprep.subr.mxu0 %v2134
    %3720 = vmatpush2.msra.mxu0 %v2133
    %3721 = vmatprep.mubr.f32.mxu0 %v1230
    %3722 = vmatmul.mubr.f32.gmra.mxu0 %v1229
    %v3723 = vpop.f32.mrf.mxu0
    %v3724 = vadd.f32 %v3653, %v3723
    %v3725 = vpop.f32.mrf.mxu0
    %v3726 = vadd.f32 %v3655, %v3725
    %3727 = vdwg.mxu0
    %v3728 = vmul.f32 %v2333, %v2872
    %v3729 = vmul.f32 %v2335, %v2874
    %v3730 = vmul.f32 %v2404, %v3156
    %v3731 = vmul.f32 %v2406, %v3158
    %v3732 = vmul.f32 %v2475, %v3440
    %v3733 = vmul.f32 %v2477, %v3442
    %v3734 = vmul.f32 %v2546, %v3724
    %v3735 = vmul.f32 %v2548, %v3726
    %3736 = vst [vmem:[#allocation19] sm:$0xff] %v3728
    %3737 = vst [vmem:[#allocation19 + $0x8] sm:$0xff] %v3729
    %3738 = vst [vmem:[#allocation19 + $0x10] sm:$0xff] %v3730
    %3739 = vst [vmem:[#allocation19 + $0x18] sm:$0xff] %v3731
    %3740 = vst [vmem:[#allocation19 + $0x20] sm:$0xff] %v3732
    %3741 = vst [vmem:[#allocation19 + $0x28] sm:$0xff] %v3733
    %3742 = vst [vmem:[#allocation19 + $0x30] sm:$0xff] %v3734
    %3743 = vst [vmem:[#allocation19 + $0x38] sm:$0xff] %v3735
    %v3744 = vsel %vm270, %v328, 0.0
    %v3745 = vrot.slane %v3744, 4
    %v3746 = vadd.f32 %v3744, %v3745
    %v3747 = vrot.slane %v3746, 2
    %v3748 = vadd.f32 %v3746, %v3747
    %v3749 = vrot.slane %v3748, 1
    %v3750 = vadd.f32 %v3748, %v3749
    %v3751 = vsel %vm270, %v3750, 0.0
    %3752 = vadd.xlane.f32.xlu0 %v3751
    %v3753 = vpop.xlane.xlu0 %3752
    %v3754 = vrcp.pop %v3753
    %v3755 = vmul.f32 %v3750, %v3754
    %v3756 = vadd.f32 %v3755, 1e-12
    %v3757 = vlog2.pop %v3756
    %v3758 = vmul.f32 %v3757, 0.6931472
    %v3759 = vmul.f32 %v3755, %v3758
    %v3760 = vsel %vm270, %v3759, 0.0
    %3761 = vadd.xlane.f32.xlu0 %v3760
    %v3762 = vpop.xlane.xlu0 %3761
    %v3763 = vsub.f32 0.0, %v3762
    %v3764 = vrcp.pop 8.0
    %v3765 = vmul.f32 %v3753, %v3764
    %v3766 = vsub.f32 %v3750, %v3765
    %v3767 = vmul.f32 %v3766, %v3766
    %v3768 = vsel %vm270, %v3767, 0.0
    %3769 = vadd.xlane.f32.xlu0 %v3768
    %v3770 = vpop.xlane.xlu0 %3769
    %v3771 = vrcp.pop 7.0
    %v3772 = vmul.f32 %v3770, %v3771
    %v3773 = vrsqrt.pop %v3772
    %v3774 = vmul.f32 %v3772, %v3773
    %vm3775 = vcmp.eq.f32.partialorder %v3772, inf
    %v3776 = vsel %vm3775, %v3772, %v3774
    %vm3777 = vcmp.eq.f32.partialorder %v3772, 0.0
    %v3778 = vand.u32 %v3772, 2147483648
    %v3779 = vsel %vm3777, %v3778, %v3776
    %v3780 = vadd.f32 %v3779, %v3763
    %v3781 = vmul.f32 %v3780, 0.5
    %vm3782 = vcmask 0
    %3783 = vst.msk [vmem:[#allocation20] sm:$0x1] %vm3782, %v3781
    // Predicated region
    $region86: #{sparse_codebook_moe_forward.1} parent=1 // pred_check
      _
    $region87: #{sparse_codebook_moe_forward.1} parent=1 // pred_check_branch
      %3785 = sbr.rel (0) target = $region89
    $region88: #{sparse_codebook_moe_forward.1} parent=1 // pred_region
      %s3787 = ssub.s32 1024, 1024
      %3788 = vsyncadd [#allocation4], %s3787
      %s3790 = sshll.u32 [#allocation19], 4
      %s3791 = int_to_ptr.vmem [resolvable:$true] %s3790
      %3793 = dma.vmem_to_hbm [thread:$0]  %s3791, 1024, %s11, [#allocation4]
    $region89: #{sparse_codebook_moe_forward.1} parent=1 // pred_fallthru
      _
    // Predicated region
    $region90: #{sparse_codebook_moe_forward.1} parent=1 // pred_check
      _
    $region91: #{sparse_codebook_moe_forward.1} parent=1 // pred_check_branch
      %3795 = sbr.rel (0) target = $region93
    $region92: #{sparse_codebook_moe_forward.1} parent=1 // pred_region
      %s3797 = ssub.s32 16, 16
      %3798 = vsyncadd [#allocation21], %s3797
      %s3800 = sshll.u32 [#allocation20], 4
      %s3801 = int_to_ptr.vmem [resolvable:$true] %s3800
      %3803 = dma.vmem_to_hbm [thread:$0]  %s3801, 16, %s12, [#allocation21]
    $region93: #{sparse_codebook_moe_forward.1} parent=1 // pred_fallthru
      _
    // Predicated region
    $region94: #{sparse_codebook_moe_forward.1} parent=1 // pred_check
      _
    $region95: #{sparse_codebook_moe_forward.1} parent=1 // pred_check_branch
      %3805 = sbr.rel (0) target = $region97
    $region96: #{sparse_codebook_moe_forward.1} parent=1 // pred_region
      %3806 = dma.done [#allocation4], 1024
    $region97: #{sparse_codebook_moe_forward.1} parent=1 // pred_fallthru
      _
    // Predicated region
    $region98: #{sparse_codebook_moe_forward.1} parent=1 // pred_check
      _
    $region99: #{sparse_codebook_moe_forward.1} parent=1 // pred_check_branch
      %3808 = sbr.rel (0) target = $region101
    $region100: #{sparse_codebook_moe_forward.1} parent=1 // pred_region
      %3809 = dma.done [#allocation21], 16
    $region101: #{sparse_codebook_moe_forward.1} parent=1 // pred_fallthru
      _
    %3810 = vsyncpa [#allocation3], 1
    %3811 = vsyncpa [#allocation6], 1
    %3812 = vsyncpa [#allocation9], 1
    %3813 = vsyncpa [#allocation12], 1
    %3814 = vsyncpa [#allocation15], 1
    %3815 = vsyncpa [#allocation18], 1
    %3816 = vsyncpa [#allocation4], 1
    %3817 = vsyncpa [#allocation21], 1

</llo_original>
